<compile_context>
chip_gen: v5e
topology: v5e:2x2
jax: 0.10.0
libtpu: 0.0.40
codegen_flags: <defaults>
</compile_context>

<pallas_src>
import jax
import jax.numpy as jnp
from jax import lax
from jax.experimental import pallas as pl
from jax.experimental.pallas import tpu as pltpu

NEG_SLOPE = 0.2
TILE_B = 128     # batch lanes per grid step (lane-dense)
UNROLL = 8       # timesteps per aligned [8, TILE_B] load/store block


def _leaky(v):
    return jnp.where(v > 0, v, NEG_SLOPE * v)


def _mm(w, v):
    # MXU matmul: w stored in bf16, rhs cast to bf16, accumulate in f32.
    return jnp.dot(w, v.astype(w.dtype), preferred_element_type=jnp.float32)


def vae_lstm_kernel(x_ref, eps_ref,
                    w_ih_e_ref, w_hh_e_ref, b_e_ref,
                    w1_ref, b1_ref, w2_ref, b2_ref,
                    wh_ref, bh_ref,
                    wd1_ref, bd1_ref, wd2_ref, bd2_ref,
                    w_ih_d_ref, w_hh_d_ref, b_d_ref,
                    xhat_ref, stats_ref, dec_buf_ref):
    H = w_hh_e_ref.shape[1]          # hidden_dim
    S = x_ref.shape[0]               # seq_len
    TB = x_ref.shape[1]              # batch tile (lanes)
    n_blk = S // UNROLL

    # ---------------- encoder LSTM (input_size=1, hidden=H) ----------------
    # Weights hoisted out of the time loop.  The i/f/o gate rows of
    # w_ih_e / w_hh_e / b_e were pre-scaled by 0.5 in prepare_params so that
    # sigmoid(a) == 0.5*tanh(pre) + 0.5 with pre already = 0.5*a.
    w_ih_e = w_ih_e_ref[...]         # [4H, 1]  f32 (pre-scaled)
    w_hh_e = w_hh_e_ref[...]         # [4H, H]  bf16 (pre-scaled)
    b_e = b_e_ref[...]               # [4H, 1]  f32 (= b_ih + b_hh, pre-scaled)

    def enc_step(h, c, x_t):
        # x_t: [1, TB].  h-independent part first (overlaps previous step).
        xpart = w_ih_e * x_t + b_e                                  # [4H, TB]
        pre = _mm(w_hh_e, h) + xpart                                # [4H, TB]
        tg = jnp.tanh(pre)                                          # ONE EUP pass
        i = tg[0 * H:1 * H] * 0.5 + 0.5
        f = tg[1 * H:2 * H] * 0.5 + 0.5
        g = tg[2 * H:3 * H]
        o = tg[3 * H:4 * H] * 0.5 + 0.5
        c = f * c + i * g
        h = o * jnp.tanh(c)
        return h, c

    h0 = jnp.zeros((H, TB), jnp.float32)
    c0 = jnp.zeros((H, TB), jnp.float32)

    def enc_block(blk, carry):
        h, c = carry
        base = pl.multiple_of(blk * UNROLL, UNROLL)
        x_tile = x_ref[pl.ds(base, UNROLL), :]      # one aligned [8, TB] load
        for r in range(UNROLL):                     # static 8-step unroll
            h, c = enc_step(h, c, x_tile[r:r + 1, :])
        return (h, c)

    h_enc, c_enc = lax.fori_loop(0, n_blk, enc_block, (h0, c0))
    for t in range(n_blk * UNROLL, S):              # static remainder (if any)
        h_enc, c_enc = enc_step(h_enc, c_enc, x_ref[t:t + 1, :])

    # ---------------- encoder MLP + fused mean / log_var heads -------------
    h1 = _leaky(_mm(w1_ref[...], h_enc) + b1_ref[...])              # [H, TB]
    h2 = _leaky(_mm(w2_ref[...], h1) + b2_ref[...])                 # [H, TB]
    heads = _mm(wh_ref[...], h2) + bh_ref[...]                      # [2, TB]
    stats_ref[...] = heads                                          # lane-dense store
    mean = heads[0:1, :]
    log_var = heads[1:2, :]

    # ---------------- reparameterization (matches reference exactly) -------
    z = mean + log_var * eps_ref[...]                               # [1, TB]

    # ---------------- decoder MLP ------------------------------------------
    d1 = _leaky(wd1_ref[...] * z + bd1_ref[...])                    # [H,1]*[1,TB] -> [H,TB]
    d2 = _leaky(_mm(wd2_ref[...], d1) + bd2_ref[...])               # [H, TB]

    # ---------------- decoder LSTM (input=H, hidden=1) ----------------------
    # LSTM input is d2 repeated over time, so the input projection is constant
    # in t; compute once.  Gate rows of w_ih_d / b_d / w_hh_d are pre-scaled.
    xp = _mm(w_ih_d_ref[...], d2) + b_d_ref[...]                    # [4, TB]
    whh = w_hh_d_ref[...]                                           # [4, 1]

    def dec_step(h, c):
        pre = xp + whh * h                                          # [4, TB]
        tg = jnp.tanh(pre)                                          # ONE EUP pass
        i = tg[0:1] * 0.5 + 0.5
        f = tg[1:2] * 0.5 + 0.5
        g = tg[2:3]
        o = tg[3:4] * 0.5 + 0.5
        c = f * c + i * g
        h = o * jnp.tanh(c)
        return h, c

    hd0 = jnp.zeros((1, TB), jnp.float32)
    cd0 = jnp.zeros((1, TB), jnp.float32)

    def dec_block(blk, carry):
        h, c = carry
        for r in range(UNROLL):                     # static 8-step unroll
            h, c = dec_step(h, c)
            dec_buf_ref[r:r + 1, :] = h             # static-row VMEM scratch write
        base = pl.multiple_of(blk * UNROLL, UNROLL)
        xhat_ref[pl.ds(base, UNROLL), :] = dec_buf_ref[...]   # aligned [8,128] store
        return (h, c)

    hd, cd = lax.fori_loop(0, n_blk, dec_block, (hd0, cd0))
    for t in range(n_blk * UNROLL, S):              # static remainder (if any)
        hd, cd = dec_step(hd, cd)
        xhat_ref[t:t + 1, :] = hd


# ----------------------------------------------------------------------------
# Parameters
# ----------------------------------------------------------------------------
def make_params(key, hidden_dim):
    """PyTorch-default-initialized parameters, f32, native (out, in) layouts."""
    H = hidden_dim
    ks = jax.random.split(key, 20)
    it = iter(ks)

    def unif(shape, bound):
        return jax.random.uniform(next(it), shape, jnp.float32, -bound, bound)

    bH = 1.0 / float(H) ** 0.5
    p = {}
    # encoder LSTM (input_size=1, hidden_size=H); init bound 1/sqrt(H)
    p['enc_w_ih'] = unif((4 * H, 1), bH)
    p['enc_w_hh'] = unif((4 * H, H), bH)
    p['enc_b_ih'] = unif((4 * H,), bH)
    p['enc_b_hh'] = unif((4 * H,), bH)
    # encoder_linear: Linear(H,H)+LeakyReLU, Linear(H,H)+LeakyReLU
    p['W1'] = unif((H, H), bH); p['b1'] = unif((H,), bH)
    p['W2'] = unif((H, H), bH); p['b2'] = unif((H,), bH)
    # mean / log_var heads: Linear(H,1) each
    p['Wm'] = unif((1, H), bH); p['bm'] = unif((1,), bH)
    p['Wv'] = unif((1, H), bH); p['bv'] = unif((1,), bH)
    # decoder_linear: Linear(1,H) (fan_in=1 -> bound 1), Linear(H,H)
    p['Wd1'] = unif((H, 1), 1.0); p['bd1'] = unif((H,), 1.0)
    p['Wd2'] = unif((H, H), bH); p['bd2'] = unif((H,), bH)
    # decoder LSTM (input_size=H, hidden_size=1); init bound 1
    p['dec_w_ih'] = unif((4, H), 1.0)
    p['dec_w_hh'] = unif((4, 1), 1.0)
    p['dec_b_ih'] = unif((4,), 1.0)
    p['dec_b_hh'] = unif((4,), 1.0)
    return p


def _gate_prescale(hidden):
    # 0.5 on i/f/o gate rows (tanh-form sigmoid), 1.0 on the g gate rows.
    return jnp.concatenate([
        jnp.full((hidden, 1), 0.5, jnp.float32),
        jnp.full((hidden, 1), 0.5, jnp.float32),
        jnp.ones((hidden, 1), jnp.float32),
        jnp.full((hidden, 1), 0.5, jnp.float32)], axis=0)


def prepare_params(p, hidden_dim):
    """Kernel-ready params: fold LSTM biases, fuse mean/log_var heads, fold the
    0.5 sigmoid pre-scale into i/f/o gate rows, cast MXU weights to bf16
    (pre-scale by 0.5 is exact in bf16)."""
    H = hidden_dim
    bf = jnp.bfloat16
    pre_e = _gate_prescale(H)      # [4H, 1]
    pre_d = _gate_prescale(1)      # [4, 1]

    w_ih_e = p['enc_w_ih'] * pre_e                            # [4H, 1] f32
    w_hh_e = (p['enc_w_hh'] * pre_e).astype(bf)               # [4H, H] bf16
    b_e = (p['enc_b_ih'] + p['enc_b_hh'])[:, None] * pre_e    # [4H, 1] f32

    W1 = p['W1'].astype(bf); b1 = p['b1'][:, None]
    W2 = p['W2'].astype(bf); b2 = p['b2'][:, None]
    Wh = jnp.concatenate([p['Wm'], p['Wv']], axis=0).astype(bf)   # [2, H]
    bh = jnp.concatenate([p['bm'], p['bv']], axis=0)[:, None]     # [2, 1]

    Wd1 = p['Wd1']                                            # [H, 1] f32 (broadcast mul)
    bd1 = p['bd1'][:, None]
    Wd2 = p['Wd2'].astype(bf); bd2 = p['bd2'][:, None]

    w_ih_d = (p['dec_w_ih'] * pre_d).astype(bf)               # [4, H] bf16
    w_hh_d = p['dec_w_hh'] * pre_d                            # [4, 1] f32
    b_d = (p['dec_b_ih'] + p['dec_b_hh'])[:, None] * pre_d    # [4, 1] f32

    return [w_ih_e, w_hh_e, b_e, W1, b1, W2, b2, Wh, bh,
            Wd1, bd1, Wd2, bd2, w_ih_d, w_hh_d, b_d]


# ----------------------------------------------------------------------------
# Wrapper
# ----------------------------------------------------------------------------
def vae_lstm_forward(x, eps, kparams, *, tile_b=TILE_B):
    """x: [B, seq_len] f32, eps: [B, 1] f32.
    Returns (x_hat [B,S], mean [B,1], log_var [B,1])."""
    B, S = x.shape
    # Pad batch to a lane-dense multiple of tile_b; padded lanes compute
    # bias-driven junk which is sliced off below.
    Bp = ((B + tile_b - 1) // tile_b) * tile_b

    xT = jnp.zeros((S, Bp), jnp.float32).at[:, :B].set(jnp.transpose(x))
    epsT = jnp.zeros((1, Bp), jnp.float32).at[:, :B].set(jnp.reshape(eps, (B,))[None, :])

    grid = (Bp // tile_b,)

    def batch_spec(rows):
        return pl.BlockSpec((rows, tile_b), lambda i: (0, i))

    def const_spec(shape):
        # full-array block, same block index every grid step -> stays resident
        return pl.BlockSpec(shape, lambda i: (0, 0))

    in_specs = [batch_spec(S), batch_spec(1)] + [const_spec(p.shape) for p in kparams]
    out_specs = (batch_spec(S), batch_spec(2))
    out_shape = (jax.ShapeDtypeStruct((S, Bp), jnp.float32),   # x_hat (transposed)
                 jax.ShapeDtypeStruct((2, Bp), jnp.float32))   # [mean; log_var]

    xhatT, stats = pl.pallas_call(
        vae_lstm_kernel,
        grid=grid,
        in_specs=in_specs,
        out_specs=out_specs,
        out_shape=out_shape,
        scratch_shapes=[pltpu.VMEM((UNROLL, tile_b), jnp.float32)],  # decoder 8-step buffer
        compiler_params=pltpu.CompilerParams(
            dimension_semantics=("parallel",)),
    )(xT, epsT, *kparams)

    x_hat = jnp.transpose(xhatT[:, :B])         # [B, S]
    mean = jnp.transpose(stats[0:1, :B])        # [B, 1]
    log_var = jnp.transpose(stats[1:2, :B])     # [B, 1]
    return x_hat, mean, log_var


# ----------------------------------------------------------------------------
# Plain-JAX reference (same bf16 weight quantization) for a sanity check
# ----------------------------------------------------------------------------
def reference_forward(x, eps, p, hidden_dim):
    H = hidden_dim
    bf = jnp.bfloat16

    def mm(w, v):
        return jnp.dot(w.astype(bf), v.astype(bf), preferred_element_type=jnp.float32)

    leaky = lambda v: jnp.where(v > 0, v, NEG_SLOPE * v)
    B, S = x.shape

    b_e = (p['enc_b_ih'] + p['enc_b_hh'])[:, None]
    h = jnp.zeros((H, B), jnp.float32)
    c = jnp.zeros((H, B), jnp.float32)
    for t in range(S):
        x_t = x[:, t][None, :]
        gates = mm(p['enc_w_hh'], h) + p['enc_w_ih'] * x_t + b_e
        i = jax.nn.sigmoid(gates[0:H]); f = jax.nn.sigmoid(gates[H:2 * H])
        g = jnp.tanh(gates[2 * H:3 * H]); o = jax.nn.sigmoid(gates[3 * H:4 * H])
        c = f * c + i * g
        h = o * jnp.tanh(c)

    h1 = leaky(mm(p['W1'], h) + p['b1'][:, None])
    h2 = leaky(mm(p['W2'], h1) + p['b2'][:, None])
    mean = mm(p['Wm'], h2) + p['bm'][:, None]
    log_var = mm(p['Wv'], h2) + p['bv'][:, None]
    z = mean + log_var * jnp.reshape(eps, (1, B))

    d1 = leaky(p['Wd1'] * z + p['bd1'][:, None])
    d2 = leaky(mm(p['Wd2'], d1) + p['bd2'][:, None])

    b_d = (p['dec_b_ih'] + p['dec_b_hh'])[:, None]
    xp = mm(p['dec_w_ih'], d2) + b_d
    h = jnp.zeros((1, B), jnp.float32)
    c = jnp.zeros((1, B), jnp.float32)
    outs = []
    for t in range(S):
        gates = xp + p['dec_w_hh'] * h
        i = jax.nn.sigmoid(gates[0:1]); f = jax.nn.sigmoid(gates[1:2])
        g = jnp.tanh(gates[2:3]); o = jax.nn.sigmoid(gates[3:4])
        c = f * c + i * g
        h = o * jnp.tanh(c)
        outs.append(h)
    x_hat = jnp.transpose(jnp.concatenate(outs, axis=0))
    return x_hat, jnp.transpose(mean), jnp.transpose(log_var)


if __name__ == "__main__":
    # Small shapes consistent with the module (seq_len / hidden_dim are
    # constructor args; hidden_dim a multiple of 8 for clean gate slices).
    SEQ_LEN = 48
    HIDDEN = 32
    B = 4

    key = jax.random.PRNGKey(0)
    k_par, k_x, k_eps = jax.random.split(key, 3)

    raw_params = make_params(k_par, HIDDEN)
    params = prepare_params(raw_params, HIDDEN)

    x = jax.random.normal(k_x, (B, SEQ_LEN), jnp.float32)
    eps = jax.random.normal(k_eps, (B, 1), jnp.float32)   # explicit epsilon (deterministic)

    x_hat, mean, log_var = vae_lstm_forward(x, eps, params)
    jax.block_until_ready((x_hat, mean, log_var))

    assert x_hat.shape == (B, SEQ_LEN)
    assert mean.shape == (B, 1)
    assert log_var.shape == (B, 1)
    assert bool(jnp.all(jnp.isfinite(x_hat)))
    assert bool(jnp.all(jnp.isfinite(mean)))
    assert bool(jnp.all(jnp.isfinite(log_var)))

    # Numerical sanity vs. plain-JAX reference using the same bf16 weights.
    xr, mr, lr = reference_forward(x, eps, raw_params, HIDDEN)
    assert float(jnp.max(jnp.abs(x_hat - xr))) < 3e-2
    assert float(jnp.max(jnp.abs(mean - mr))) < 3e-2
    assert float(jnp.max(jnp.abs(log_var - lr))) < 3e-2

    print("KERNEL_OK")
</pallas_src>

<mosaic_0001>
module attributes {stable_mosaic.version = 11 : i64} {
  func.func @vae_lstm_kernel(%arg0: i32, %arg1: memref<48x128xf32, #tpu.memory_space<vmem>>, %arg2: memref<1x128xf32, #tpu.memory_space<vmem>>, %arg3: memref<128x1xf32, #tpu.memory_space<vmem>>, %arg4: memref<128x32xbf16, #tpu.memory_space<vmem>>, %arg5: memref<128x1xf32, #tpu.memory_space<vmem>>, %arg6: memref<32x32xbf16, #tpu.memory_space<vmem>>, %arg7: memref<32x1xf32, #tpu.memory_space<vmem>>, %arg8: memref<32x32xbf16, #tpu.memory_space<vmem>>, %arg9: memref<32x1xf32, #tpu.memory_space<vmem>>, %arg10: memref<2x32xbf16, #tpu.memory_space<vmem>>, %arg11: memref<2x1xf32, #tpu.memory_space<vmem>>, %arg12: memref<32x1xf32, #tpu.memory_space<vmem>>, %arg13: memref<32x1xf32, #tpu.memory_space<vmem>>, %arg14: memref<32x32xbf16, #tpu.memory_space<vmem>>, %arg15: memref<32x1xf32, #tpu.memory_space<vmem>>, %arg16: memref<4x32xbf16, #tpu.memory_space<vmem>>, %arg17: memref<4x1xf32, #tpu.memory_space<vmem>>, %arg18: memref<4x1xf32, #tpu.memory_space<vmem>>, %arg19: memref<48x128xf32, #tpu.memory_space<vmem>>, %arg20: memref<2x128xf32, #tpu.memory_space<vmem>>, %arg21: memref<8x128xf32, #tpu.memory_space<vmem>>) attributes {dimension_semantics = [#tpu.dimension_semantics<parallel>], iteration_bounds = array<i64: 1>, scalar_prefetch = 0 : i64, scratch_operands = 1 : i64, tpu.core_type = #tpu.core_type<tc>, window_params = [{transform_indices = @transform_0, window_bounds = array<i64: 48, 128>}, {transform_indices = @transform_1, window_bounds = array<i64: 1, 128>}, {pipeline_mode = #tpu.pipeline_mode<synchronous>, transform_indices = @transform_2, window_bounds = array<i64: 128, 1>}, {pipeline_mode = #tpu.pipeline_mode<synchronous>, transform_indices = @transform_3, window_bounds = array<i64: 128, 32>}, {pipeline_mode = #tpu.pipeline_mode<synchronous>, transform_indices = @transform_4, window_bounds = array<i64: 128, 1>}, {pipeline_mode = #tpu.pipeline_mode<synchronous>, transform_indices = @transform_5, window_bounds = array<i64: 32, 32>}, {pipeline_mode = #tpu.pipeline_mode<synchronous>, transform_indices = @transform_6, window_bounds = array<i64: 32, 1>}, {pipeline_mode = #tpu.pipeline_mode<synchronous>, transform_indices = @transform_7, window_bounds = array<i64: 32, 32>}, {pipeline_mode = #tpu.pipeline_mode<synchronous>, transform_indices = @transform_8, window_bounds = array<i64: 32, 1>}, {pipeline_mode = #tpu.pipeline_mode<synchronous>, transform_indices = @transform_9, window_bounds = array<i64: 2, 32>}, {pipeline_mode = #tpu.pipeline_mode<synchronous>, transform_indices = @transform_10, window_bounds = array<i64: 2, 1>}, {pipeline_mode = #tpu.pipeline_mode<synchronous>, transform_indices = @transform_11, window_bounds = array<i64: 32, 1>}, {pipeline_mode = #tpu.pipeline_mode<synchronous>, transform_indices = @transform_12, window_bounds = array<i64: 32, 1>}, {pipeline_mode = #tpu.pipeline_mode<synchronous>, transform_indices = @transform_13, window_bounds = array<i64: 32, 32>}, {pipeline_mode = #tpu.pipeline_mode<synchronous>, transform_indices = @transform_14, window_bounds = array<i64: 32, 1>}, {pipeline_mode = #tpu.pipeline_mode<synchronous>, transform_indices = @transform_15, window_bounds = array<i64: 4, 32>}, {pipeline_mode = #tpu.pipeline_mode<synchronous>, transform_indices = @transform_16, window_bounds = array<i64: 4, 1>}, {pipeline_mode = #tpu.pipeline_mode<synchronous>, transform_indices = @transform_17, window_bounds = array<i64: 4, 1>}, {transform_indices = @transform_18, window_bounds = array<i64: 48, 128>}, {transform_indices = @transform_19, window_bounds = array<i64: 2, 128>}]} {
    %c0 = arith.constant 0 : index
    %c0_0 = arith.constant 0 : index
    %0 = vector.load %arg3[%c0, %c0_0] : memref<128x1xf32, #tpu.memory_space<vmem>>, vector<128x1xf32>
    %c0_1 = arith.constant 0 : index
    %c0_2 = arith.constant 0 : index
    %1 = vector.load %arg4[%c0_1, %c0_2] : memref<128x32xbf16, #tpu.memory_space<vmem>>, vector<128x32xbf16>
    %c0_3 = arith.constant 0 : index
    %c0_4 = arith.constant 0 : index
    %2 = vector.load %arg5[%c0_3, %c0_4] : memref<128x1xf32, #tpu.memory_space<vmem>>, vector<128x1xf32>
    %cst = arith.constant 0.000000e+00 : f32
    %3 = vector.broadcast %cst : f32 to vector<32x128xf32>
    %cst_5 = arith.constant 0.000000e+00 : f32
    %4 = vector.broadcast %cst_5 : f32 to vector<32x128xf32>
    %c0_i32 = arith.constant 0 : i32
    %c6_i32 = arith.constant 6 : i32
    %5 = arith.addi %c0_i32, %c6_i32 : i32
    %c1_i32 = arith.constant 1 : i32
    %6:2 = scf.for %arg22 = %c0_i32 to %5 step %c1_i32 iter_args(%arg23 = %3, %arg24 = %4) -> (vector<32x128xf32>, vector<32x128xf32>)  : i32 {
      %c8_i32 = arith.constant 8 : i32
      %75 = arith.muli %arg22, %c8_i32 : i32
      %76 = tpu.assume_multiple %75, 8 : i32
      %77 = arith.index_cast %76 : i32 to index
      %c0_56 = arith.constant 0 : index
      %78 = vector.load %arg1[%77, %c0_56] : memref<48x128xf32, #tpu.memory_space<vmem>>, vector<8x128xf32>
      %79 = vector.extract_strided_slice %78 {offsets = [0, 0], sizes = [1, 128], strides = [1, 1]} : vector<8x128xf32> to vector<1x128xf32>
      %80 = vector.broadcast %0 : vector<128x1xf32> to vector<128x128xf32>
      %81 = vector.broadcast %79 : vector<1x128xf32> to vector<128x128xf32>
      %82 = arith.mulf %80, %81 : vector<128x128xf32>
      %83 = vector.broadcast %2 : vector<128x1xf32> to vector<128x128xf32>
      %84 = arith.addf %82, %83 : vector<128x128xf32>
      %85 = arith.truncf %arg23 : vector<32x128xf32> to vector<32x128xbf16>
      %cst_57 = arith.constant dense<0.000000e+00> : vector<128x128xf32>
      %86 = tpu.matmul %1, %85, %cst_57 {dimension_numbers = #tpu.dot_dimension_numbers<[1], [0], [0], [1], [0, 0, 1, 1], [], []>} : vector<128x32xbf16>, vector<32x128xbf16>, vector<128x128xf32> -> vector<128x128xf32>
      %87 = arith.addf %86, %84 : vector<128x128xf32>
      %88 = math.tanh %87 : vector<128x128xf32>
      %89 = vector.extract_strided_slice %88 {offsets = [0, 0], sizes = [32, 128], strides = [1, 1]} : vector<128x128xf32> to vector<32x128xf32>
      %cst_58 = arith.constant 5.000000e-01 : f32
      %90 = vector.broadcast %cst_58 : f32 to vector<32x128xf32>
      %91 = arith.mulf %89, %90 : vector<32x128xf32>
      %cst_59 = arith.constant 5.000000e-01 : f32
      %92 = vector.broadcast %cst_59 : f32 to vector<32x128xf32>
      %93 = arith.addf %91, %92 : vector<32x128xf32>
      %94 = vector.extract_strided_slice %88 {offsets = [32, 0], sizes = [32, 128], strides = [1, 1]} : vector<128x128xf32> to vector<32x128xf32>
      %cst_60 = arith.constant 5.000000e-01 : f32
      %95 = vector.broadcast %cst_60 : f32 to vector<32x128xf32>
      %96 = arith.mulf %94, %95 : vector<32x128xf32>
      %cst_61 = arith.constant 5.000000e-01 : f32
      %97 = vector.broadcast %cst_61 : f32 to vector<32x128xf32>
      %98 = arith.addf %96, %97 : vector<32x128xf32>
      %99 = vector.extract_strided_slice %88 {offsets = [64, 0], sizes = [32, 128], strides = [1, 1]} : vector<128x128xf32> to vector<32x128xf32>
      %100 = vector.extract_strided_slice %88 {offsets = [96, 0], sizes = [32, 128], strides = [1, 1]} : vector<128x128xf32> to vector<32x128xf32>
      %cst_62 = arith.constant 5.000000e-01 : f32
      %101 = vector.broadcast %cst_62 : f32 to vector<32x128xf32>
      %102 = arith.mulf %100, %101 : vector<32x128xf32>
      %cst_63 = arith.constant 5.000000e-01 : f32
      %103 = vector.broadcast %cst_63 : f32 to vector<32x128xf32>
      %104 = arith.addf %102, %103 : vector<32x128xf32>
      %105 = arith.mulf %98, %arg24 : vector<32x128xf32>
      %106 = arith.mulf %93, %99 : vector<32x128xf32>
      %107 = arith.addf %105, %106 : vector<32x128xf32>
      %108 = math.tanh %107 : vector<32x128xf32>
      %109 = arith.mulf %104, %108 : vector<32x128xf32>
      %110 = vector.extract_strided_slice %78 {offsets = [1, 0], sizes = [1, 128], strides = [1, 1]} : vector<8x128xf32> to vector<1x128xf32>
      %111 = vector.broadcast %0 : vector<128x1xf32> to vector<128x128xf32>
      %112 = vector.broadcast %110 : vector<1x128xf32> to vector<128x128xf32>
      %113 = arith.mulf %111, %112 : vector<128x128xf32>
      %114 = vector.broadcast %2 : vector<128x1xf32> to vector<128x128xf32>
      %115 = arith.addf %113, %114 : vector<128x128xf32>
      %116 = arith.truncf %109 : vector<32x128xf32> to vector<32x128xbf16>
      %cst_64 = arith.constant dense<0.000000e+00> : vector<128x128xf32>
      %117 = tpu.matmul %1, %116, %cst_64 {dimension_numbers = #tpu.dot_dimension_numbers<[1], [0], [0], [1], [0, 0, 1, 1], [], []>} : vector<128x32xbf16>, vector<32x128xbf16>, vector<128x128xf32> -> vector<128x128xf32>
      %118 = arith.addf %117, %115 : vector<128x128xf32>
      %119 = math.tanh %118 : vector<128x128xf32>
      %120 = vector.extract_strided_slice %119 {offsets = [0, 0], sizes = [32, 128], strides = [1, 1]} : vector<128x128xf32> to vector<32x128xf32>
      %cst_65 = arith.constant 5.000000e-01 : f32
      %121 = vector.broadcast %cst_65 : f32 to vector<32x128xf32>
      %122 = arith.mulf %120, %121 : vector<32x128xf32>
      %cst_66 = arith.constant 5.000000e-01 : f32
      %123 = vector.broadcast %cst_66 : f32 to vector<32x128xf32>
      %124 = arith.addf %122, %123 : vector<32x128xf32>
      %125 = vector.extract_strided_slice %119 {offsets = [32, 0], sizes = [32, 128], strides = [1, 1]} : vector<128x128xf32> to vector<32x128xf32>
      %cst_67 = arith.constant 5.000000e-01 : f32
      %126 = vector.broadcast %cst_67 : f32 to vector<32x128xf32>
      %127 = arith.mulf %125, %126 : vector<32x128xf32>
      %cst_68 = arith.constant 5.000000e-01 : f32
      %128 = vector.broadcast %cst_68 : f32 to vector<32x128xf32>
      %129 = arith.addf %127, %128 : vector<32x128xf32>
      %130 = vector.extract_strided_slice %119 {offsets = [64, 0], sizes = [32, 128], strides = [1, 1]} : vector<128x128xf32> to vector<32x128xf32>
      %131 = vector.extract_strided_slice %119 {offsets = [96, 0], sizes = [32, 128], strides = [1, 1]} : vector<128x128xf32> to vector<32x128xf32>
      %cst_69 = arith.constant 5.000000e-01 : f32
      %132 = vector.broadcast %cst_69 : f32 to vector<32x128xf32>
      %133 = arith.mulf %131, %132 : vector<32x128xf32>
      %cst_70 = arith.constant 5.000000e-01 : f32
      %134 = vector.broadcast %cst_70 : f32 to vector<32x128xf32>
      %135 = arith.addf %133, %134 : vector<32x128xf32>
      %136 = arith.mulf %129, %107 : vector<32x128xf32>
      %137 = arith.mulf %124, %130 : vector<32x128xf32>
      %138 = arith.addf %136, %137 : vector<32x128xf32>
      %139 = math.tanh %138 : vector<32x128xf32>
      %140 = arith.mulf %135, %139 : vector<32x128xf32>
      %141 = vector.extract_strided_slice %78 {offsets = [2, 0], sizes = [1, 128], strides = [1, 1]} : vector<8x128xf32> to vector<1x128xf32>
      %142 = vector.broadcast %0 : vector<128x1xf32> to vector<128x128xf32>
      %143 = vector.broadcast %141 : vector<1x128xf32> to vector<128x128xf32>
      %144 = arith.mulf %142, %143 : vector<128x128xf32>
      %145 = vector.broadcast %2 : vector<128x1xf32> to vector<128x128xf32>
      %146 = arith.addf %144, %145 : vector<128x128xf32>
      %147 = arith.truncf %140 : vector<32x128xf32> to vector<32x128xbf16>
      %cst_71 = arith.constant dense<0.000000e+00> : vector<128x128xf32>
      %148 = tpu.matmul %1, %147, %cst_71 {dimension_numbers = #tpu.dot_dimension_numbers<[1], [0], [0], [1], [0, 0, 1, 1], [], []>} : vector<128x32xbf16>, vector<32x128xbf16>, vector<128x128xf32> -> vector<128x128xf32>
      %149 = arith.addf %148, %146 : vector<128x128xf32>
      %150 = math.tanh %149 : vector<128x128xf32>
      %151 = vector.extract_strided_slice %150 {offsets = [0, 0], sizes = [32, 128], strides = [1, 1]} : vector<128x128xf32> to vector<32x128xf32>
      %cst_72 = arith.constant 5.000000e-01 : f32
      %152 = vector.broadcast %cst_72 : f32 to vector<32x128xf32>
      %153 = arith.mulf %151, %152 : vector<32x128xf32>
      %cst_73 = arith.constant 5.000000e-01 : f32
      %154 = vector.broadcast %cst_73 : f32 to vector<32x128xf32>
      %155 = arith.addf %153, %154 : vector<32x128xf32>
      %156 = vector.extract_strided_slice %150 {offsets = [32, 0], sizes = [32, 128], strides = [1, 1]} : vector<128x128xf32> to vector<32x128xf32>
      %cst_74 = arith.constant 5.000000e-01 : f32
      %157 = vector.broadcast %cst_74 : f32 to vector<32x128xf32>
      %158 = arith.mulf %156, %157 : vector<32x128xf32>
      %cst_75 = arith.constant 5.000000e-01 : f32
      %159 = vector.broadcast %cst_75 : f32 to vector<32x128xf32>
      %160 = arith.addf %158, %159 : vector<32x128xf32>
      %161 = vector.extract_strided_slice %150 {offsets = [64, 0], sizes = [32, 128], strides = [1, 1]} : vector<128x128xf32> to vector<32x128xf32>
      %162 = vector.extract_strided_slice %150 {offsets = [96, 0], sizes = [32, 128], strides = [1, 1]} : vector<128x128xf32> to vector<32x128xf32>
      %cst_76 = arith.constant 5.000000e-01 : f32
      %163 = vector.broadcast %cst_76 : f32 to vector<32x128xf32>
      %164 = arith.mulf %162, %163 : vector<32x128xf32>
      %cst_77 = arith.constant 5.000000e-01 : f32
      %165 = vector.broadcast %cst_77 : f32 to vector<32x128xf32>
      %166 = arith.addf %164, %165 : vector<32x128xf32>
      %167 = arith.mulf %160, %138 : vector<32x128xf32>
      %168 = arith.mulf %155, %161 : vector<32x128xf32>
      %169 = arith.addf %167, %168 : vector<32x128xf32>
      %170 = math.tanh %169 : vector<32x128xf32>
      %171 = arith.mulf %166, %170 : vector<32x128xf32>
      %172 = vector.extract_strided_slice %78 {offsets = [3, 0], sizes = [1, 128], strides = [1, 1]} : vector<8x128xf32> to vector<1x128xf32>
      %173 = vector.broadcast %0 : vector<128x1xf32> to vector<128x128xf32>
      %174 = vector.broadcast %172 : vector<1x128xf32> to vector<128x128xf32>
      %175 = arith.mulf %173, %174 : vector<128x128xf32>
      %176 = vector.broadcast %2 : vector<128x1xf32> to vector<128x128xf32>
      %177 = arith.addf %175, %176 : vector<128x128xf32>
      %178 = arith.truncf %171 : vector<32x128xf32> to vector<32x128xbf16>
      %cst_78 = arith.constant dense<0.000000e+00> : vector<128x128xf32>
      %179 = tpu.matmul %1, %178, %cst_78 {dimension_numbers = #tpu.dot_dimension_numbers<[1], [0], [0], [1], [0, 0, 1, 1], [], []>} : vector<128x32xbf16>, vector<32x128xbf16>, vector<128x128xf32> -> vector<128x128xf32>
      %180 = arith.addf %179, %177 : vector<128x128xf32>
      %181 = math.tanh %180 : vector<128x128xf32>
      %182 = vector.extract_strided_slice %181 {offsets = [0, 0], sizes = [32, 128], strides = [1, 1]} : vector<128x128xf32> to vector<32x128xf32>
      %cst_79 = arith.constant 5.000000e-01 : f32
      %183 = vector.broadcast %cst_79 : f32 to vector<32x128xf32>
      %184 = arith.mulf %182, %183 : vector<32x128xf32>
      %cst_80 = arith.constant 5.000000e-01 : f32
      %185 = vector.broadcast %cst_80 : f32 to vector<32x128xf32>
      %186 = arith.addf %184, %185 : vector<32x128xf32>
      %187 = vector.extract_strided_slice %181 {offsets = [32, 0], sizes = [32, 128], strides = [1, 1]} : vector<128x128xf32> to vector<32x128xf32>
      %cst_81 = arith.constant 5.000000e-01 : f32
      %188 = vector.broadcast %cst_81 : f32 to vector<32x128xf32>
      %189 = arith.mulf %187, %188 : vector<32x128xf32>
      %cst_82 = arith.constant 5.000000e-01 : f32
      %190 = vector.broadcast %cst_82 : f32 to vector<32x128xf32>
      %191 = arith.addf %189, %190 : vector<32x128xf32>
      %192 = vector.extract_strided_slice %181 {offsets = [64, 0], sizes = [32, 128], strides = [1, 1]} : vector<128x128xf32> to vector<32x128xf32>
      %193 = vector.extract_strided_slice %181 {offsets = [96, 0], sizes = [32, 128], strides = [1, 1]} : vector<128x128xf32> to vector<32x128xf32>
      %cst_83 = arith.constant 5.000000e-01 : f32
      %194 = vector.broadcast %cst_83 : f32 to vector<32x128xf32>
      %195 = arith.mulf %193, %194 : vector<32x128xf32>
      %cst_84 = arith.constant 5.000000e-01 : f32
      %196 = vector.broadcast %cst_84 : f32 to vector<32x128xf32>
      %197 = arith.addf %195, %196 : vector<32x128xf32>
      %198 = arith.mulf %191, %169 : vector<32x128xf32>
      %199 = arith.mulf %186, %192 : vector<32x128xf32>
      %200 = arith.addf %198, %199 : vector<32x128xf32>
      %201 = math.tanh %200 : vector<32x128xf32>
      %202 = arith.mulf %197, %201 : vector<32x128xf32>
      %203 = vector.extract_strided_slice %78 {offsets = [4, 0], sizes = [1, 128], strides = [1, 1]} : vector<8x128xf32> to vector<1x128xf32>
      %204 = vector.broadcast %0 : vector<128x1xf32> to vector<128x128xf32>
      %205 = vector.broadcast %203 : vector<1x128xf32> to vector<128x128xf32>
      %206 = arith.mulf %204, %205 : vector<128x128xf32>
      %207 = vector.broadcast %2 : vector<128x1xf32> to vector<128x128xf32>
      %208 = arith.addf %206, %207 : vector<128x128xf32>
      %209 = arith.truncf %202 : vector<32x128xf32> to vector<32x128xbf16>
      %cst_85 = arith.constant dense<0.000000e+00> : vector<128x128xf32>
      %210 = tpu.matmul %1, %209, %cst_85 {dimension_numbers = #tpu.dot_dimension_numbers<[1], [0], [0], [1], [0, 0, 1, 1], [], []>} : vector<128x32xbf16>, vector<32x128xbf16>, vector<128x128xf32> -> vector<128x128xf32>
      %211 = arith.addf %210, %208 : vector<128x128xf32>
      %212 = math.tanh %211 : vector<128x128xf32>
      %213 = vector.extract_strided_slice %212 {offsets = [0, 0], sizes = [32, 128], strides = [1, 1]} : vector<128x128xf32> to vector<32x128xf32>
      %cst_86 = arith.constant 5.000000e-01 : f32
      %214 = vector.broadcast %cst_86 : f32 to vector<32x128xf32>
      %215 = arith.mulf %213, %214 : vector<32x128xf32>
      %cst_87 = arith.constant 5.000000e-01 : f32
      %216 = vector.broadcast %cst_87 : f32 to vector<32x128xf32>
      %217 = arith.addf %215, %216 : vector<32x128xf32>
      %218 = vector.extract_strided_slice %212 {offsets = [32, 0], sizes = [32, 128], strides = [1, 1]} : vector<128x128xf32> to vector<32x128xf32>
      %cst_88 = arith.constant 5.000000e-01 : f32
      %219 = vector.broadcast %cst_88 : f32 to vector<32x128xf32>
      %220 = arith.mulf %218, %219 : vector<32x128xf32>
      %cst_89 = arith.constant 5.000000e-01 : f32
      %221 = vector.broadcast %cst_89 : f32 to vector<32x128xf32>
      %222 = arith.addf %220, %221 : vector<32x128xf32>
      %223 = vector.extract_strided_slice %212 {offsets = [64, 0], sizes = [32, 128], strides = [1, 1]} : vector<128x128xf32> to vector<32x128xf32>
      %224 = vector.extract_strided_slice %212 {offsets = [96, 0], sizes = [32, 128], strides = [1, 1]} : vector<128x128xf32> to vector<32x128xf32>
      %cst_90 = arith.constant 5.000000e-01 : f32
      %225 = vector.broadcast %cst_90 : f32 to vector<32x128xf32>
      %226 = arith.mulf %224, %225 : vector<32x128xf32>
      %cst_91 = arith.constant 5.000000e-01 : f32
      %227 = vector.broadcast %cst_91 : f32 to vector<32x128xf32>
      %228 = arith.addf %226, %227 : vector<32x128xf32>
      %229 = arith.mulf %222, %200 : vector<32x128xf32>
      %230 = arith.mulf %217, %223 : vector<32x128xf32>
      %231 = arith.addf %229, %230 : vector<32x128xf32>
      %232 = math.tanh %231 : vector<32x128xf32>
      %233 = arith.mulf %228, %232 : vector<32x128xf32>
      %234 = vector.extract_strided_slice %78 {offsets = [5, 0], sizes = [1, 128], strides = [1, 1]} : vector<8x128xf32> to vector<1x128xf32>
      %235 = vector.broadcast %0 : vector<128x1xf32> to vector<128x128xf32>
      %236 = vector.broadcast %234 : vector<1x128xf32> to vector<128x128xf32>
      %237 = arith.mulf %235, %236 : vector<128x128xf32>
      %238 = vector.broadcast %2 : vector<128x1xf32> to vector<128x128xf32>
      %239 = arith.addf %237, %238 : vector<128x128xf32>
      %240 = arith.truncf %233 : vector<32x128xf32> to vector<32x128xbf16>
      %cst_92 = arith.constant dense<0.000000e+00> : vector<128x128xf32>
      %241 = tpu.matmul %1, %240, %cst_92 {dimension_numbers = #tpu.dot_dimension_numbers<[1], [0], [0], [1], [0, 0, 1, 1], [], []>} : vector<128x32xbf16>, vector<32x128xbf16>, vector<128x128xf32> -> vector<128x128xf32>
      %242 = arith.addf %241, %239 : vector<128x128xf32>
      %243 = math.tanh %242 : vector<128x128xf32>
      %244 = vector.extract_strided_slice %243 {offsets = [0, 0], sizes = [32, 128], strides = [1, 1]} : vector<128x128xf32> to vector<32x128xf32>
      %cst_93 = arith.constant 5.000000e-01 : f32
      %245 = vector.broadcast %cst_93 : f32 to vector<32x128xf32>
      %246 = arith.mulf %244, %245 : vector<32x128xf32>
      %cst_94 = arith.constant 5.000000e-01 : f32
      %247 = vector.broadcast %cst_94 : f32 to vector<32x128xf32>
      %248 = arith.addf %246, %247 : vector<32x128xf32>
      %249 = vector.extract_strided_slice %243 {offsets = [32, 0], sizes = [32, 128], strides = [1, 1]} : vector<128x128xf32> to vector<32x128xf32>
      %cst_95 = arith.constant 5.000000e-01 : f32
      %250 = vector.broadcast %cst_95 : f32 to vector<32x128xf32>
      %251 = arith.mulf %249, %250 : vector<32x128xf32>
      %cst_96 = arith.constant 5.000000e-01 : f32
      %252 = vector.broadcast %cst_96 : f32 to vector<32x128xf32>
      %253 = arith.addf %251, %252 : vector<32x128xf32>
      %254 = vector.extract_strided_slice %243 {offsets = [64, 0], sizes = [32, 128], strides = [1, 1]} : vector<128x128xf32> to vector<32x128xf32>
      %255 = vector.extract_strided_slice %243 {offsets = [96, 0], sizes = [32, 128], strides = [1, 1]} : vector<128x128xf32> to vector<32x128xf32>
      %cst_97 = arith.constant 5.000000e-01 : f32
      %256 = vector.broadcast %cst_97 : f32 to vector<32x128xf32>
      %257 = arith.mulf %255, %256 : vector<32x128xf32>
      %cst_98 = arith.constant 5.000000e-01 : f32
      %258 = vector.broadcast %cst_98 : f32 to vector<32x128xf32>
      %259 = arith.addf %257, %258 : vector<32x128xf32>
      %260 = arith.mulf %253, %231 : vector<32x128xf32>
      %261 = arith.mulf %248, %254 : vector<32x128xf32>
      %262 = arith.addf %260, %261 : vector<32x128xf32>
      %263 = math.tanh %262 : vector<32x128xf32>
      %264 = arith.mulf %259, %263 : vector<32x128xf32>
      %265 = vector.extract_strided_slice %78 {offsets = [6, 0], sizes = [1, 128], strides = [1, 1]} : vector<8x128xf32> to vector<1x128xf32>
      %266 = vector.broadcast %0 : vector<128x1xf32> to vector<128x128xf32>
      %267 = vector.broadcast %265 : vector<1x128xf32> to vector<128x128xf32>
      %268 = arith.mulf %266, %267 : vector<128x128xf32>
      %269 = vector.broadcast %2 : vector<128x1xf32> to vector<128x128xf32>
      %270 = arith.addf %268, %269 : vector<128x128xf32>
      %271 = arith.truncf %264 : vector<32x128xf32> to vector<32x128xbf16>
      %cst_99 = arith.constant dense<0.000000e+00> : vector<128x128xf32>
      %272 = tpu.matmul %1, %271, %cst_99 {dimension_numbers = #tpu.dot_dimension_numbers<[1], [0], [0], [1], [0, 0, 1, 1], [], []>} : vector<128x32xbf16>, vector<32x128xbf16>, vector<128x128xf32> -> vector<128x128xf32>
      %273 = arith.addf %272, %270 : vector<128x128xf32>
      %274 = math.tanh %273 : vector<128x128xf32>
      %275 = vector.extract_strided_slice %274 {offsets = [0, 0], sizes = [32, 128], strides = [1, 1]} : vector<128x128xf32> to vector<32x128xf32>
      %cst_100 = arith.constant 5.000000e-01 : f32
      %276 = vector.broadcast %cst_100 : f32 to vector<32x128xf32>
      %277 = arith.mulf %275, %276 : vector<32x128xf32>
      %cst_101 = arith.constant 5.000000e-01 : f32
      %278 = vector.broadcast %cst_101 : f32 to vector<32x128xf32>
      %279 = arith.addf %277, %278 : vector<32x128xf32>
      %280 = vector.extract_strided_slice %274 {offsets = [32, 0], sizes = [32, 128], strides = [1, 1]} : vector<128x128xf32> to vector<32x128xf32>
      %cst_102 = arith.constant 5.000000e-01 : f32
      %281 = vector.broadcast %cst_102 : f32 to vector<32x128xf32>
      %282 = arith.mulf %280, %281 : vector<32x128xf32>
      %cst_103 = arith.constant 5.000000e-01 : f32
      %283 = vector.broadcast %cst_103 : f32 to vector<32x128xf32>
      %284 = arith.addf %282, %283 : vector<32x128xf32>
      %285 = vector.extract_strided_slice %274 {offsets = [64, 0], sizes = [32, 128], strides = [1, 1]} : vector<128x128xf32> to vector<32x128xf32>
      %286 = vector.extract_strided_slice %274 {offsets = [96, 0], sizes = [32, 128], strides = [1, 1]} : vector<128x128xf32> to vector<32x128xf32>
      %cst_104 = arith.constant 5.000000e-01 : f32
      %287 = vector.broadcast %cst_104 : f32 to vector<32x128xf32>
      %288 = arith.mulf %286, %287 : vector<32x128xf32>
      %cst_105 = arith.constant 5.000000e-01 : f32
      %289 = vector.broadcast %cst_105 : f32 to vector<32x128xf32>
      %290 = arith.addf %288, %289 : vector<32x128xf32>
      %291 = arith.mulf %284, %262 : vector<32x128xf32>
      %292 = arith.mulf %279, %285 : vector<32x128xf32>
      %293 = arith.addf %291, %292 : vector<32x128xf32>
      %294 = math.tanh %293 : vector<32x128xf32>
      %295 = arith.mulf %290, %294 : vector<32x128xf32>
      %296 = vector.extract_strided_slice %78 {offsets = [7, 0], sizes = [1, 128], strides = [1, 1]} : vector<8x128xf32> to vector<1x128xf32>
      %297 = vector.broadcast %0 : vector<128x1xf32> to vector<128x128xf32>
      %298 = vector.broadcast %296 : vector<1x128xf32> to vector<128x128xf32>
      %299 = arith.mulf %297, %298 : vector<128x128xf32>
      %300 = vector.broadcast %2 : vector<128x1xf32> to vector<128x128xf32>
      %301 = arith.addf %299, %300 : vector<128x128xf32>
      %302 = arith.truncf %295 : vector<32x128xf32> to vector<32x128xbf16>
      %cst_106 = arith.constant dense<0.000000e+00> : vector<128x128xf32>
      %303 = tpu.matmul %1, %302, %cst_106 {dimension_numbers = #tpu.dot_dimension_numbers<[1], [0], [0], [1], [0, 0, 1, 1], [], []>} : vector<128x32xbf16>, vector<32x128xbf16>, vector<128x128xf32> -> vector<128x128xf32>
      %304 = arith.addf %303, %301 : vector<128x128xf32>
      %305 = math.tanh %304 : vector<128x128xf32>
      %306 = vector.extract_strided_slice %305 {offsets = [0, 0], sizes = [32, 128], strides = [1, 1]} : vector<128x128xf32> to vector<32x128xf32>
      %cst_107 = arith.constant 5.000000e-01 : f32
      %307 = vector.broadcast %cst_107 : f32 to vector<32x128xf32>
      %308 = arith.mulf %306, %307 : vector<32x128xf32>
      %cst_108 = arith.constant 5.000000e-01 : f32
      %309 = vector.broadcast %cst_108 : f32 to vector<32x128xf32>
      %310 = arith.addf %308, %309 : vector<32x128xf32>
      %311 = vector.extract_strided_slice %305 {offsets = [32, 0], sizes = [32, 128], strides = [1, 1]} : vector<128x128xf32> to vector<32x128xf32>
      %cst_109 = arith.constant 5.000000e-01 : f32
      %312 = vector.broadcast %cst_109 : f32 to vector<32x128xf32>
      %313 = arith.mulf %311, %312 : vector<32x128xf32>
      %cst_110 = arith.constant 5.000000e-01 : f32
      %314 = vector.broadcast %cst_110 : f32 to vector<32x128xf32>
      %315 = arith.addf %313, %314 : vector<32x128xf32>
      %316 = vector.extract_strided_slice %305 {offsets = [64, 0], sizes = [32, 128], strides = [1, 1]} : vector<128x128xf32> to vector<32x128xf32>
      %317 = vector.extract_strided_slice %305 {offsets = [96, 0], sizes = [32, 128], strides = [1, 1]} : vector<128x128xf32> to vector<32x128xf32>
      %cst_111 = arith.constant 5.000000e-01 : f32
      %318 = vector.broadcast %cst_111 : f32 to vector<32x128xf32>
      %319 = arith.mulf %317, %318 : vector<32x128xf32>
      %cst_112 = arith.constant 5.000000e-01 : f32
      %320 = vector.broadcast %cst_112 : f32 to vector<32x128xf32>
      %321 = arith.addf %319, %320 : vector<32x128xf32>
      %322 = arith.mulf %315, %293 : vector<32x128xf32>
      %323 = arith.mulf %310, %316 : vector<32x128xf32>
      %324 = arith.addf %322, %323 : vector<32x128xf32>
      %325 = math.tanh %324 : vector<32x128xf32>
      %326 = arith.mulf %321, %325 : vector<32x128xf32>
      scf.yield %326, %324 : vector<32x128xf32>, vector<32x128xf32>
    }
    %c6_i32_6 = arith.constant 6 : i32
    %c0_7 = arith.constant 0 : index
    %c0_8 = arith.constant 0 : index
    %7 = vector.load %arg6[%c0_7, %c0_8] : memref<32x32xbf16, #tpu.memory_space<vmem>>, vector<32x32xbf16>
    %8 = arith.truncf %6#0 : vector<32x128xf32> to vector<32x128xbf16>
    %cst_9 = arith.constant dense<0.000000e+00> : vector<32x128xf32>
    %9 = tpu.matmul %7, %8, %cst_9 {dimension_numbers = #tpu.dot_dimension_numbers<[1], [0], [0], [1], [0, 0, 1, 1], [], []>} : vector<32x32xbf16>, vector<32x128xbf16>, vector<32x128xf32> -> vector<32x128xf32>
    %c0_10 = arith.constant 0 : index
    %c0_11 = arith.constant 0 : index
    %10 = vector.load %arg7[%c0_10, %c0_11] : memref<32x1xf32, #tpu.memory_space<vmem>>, vector<32x1xf32>
    %11 = vector.broadcast %10 : vector<32x1xf32> to vector<32x128xf32>
    %12 = arith.addf %9, %11 : vector<32x128xf32>
    %cst_12 = arith.constant 0.000000e+00 : f32
    %13 = vector.broadcast %cst_12 : f32 to vector<32x128xf32>
    %14 = arith.cmpf ogt, %12, %13 : vector<32x128xf32>
    %cst_13 = arith.constant 2.000000e-01 : f32
    %15 = vector.broadcast %cst_13 : f32 to vector<32x128xf32>
    %16 = arith.mulf %15, %12 : vector<32x128xf32>
    %17 = arith.select %14, %12, %16 : vector<32x128xi1>, vector<32x128xf32>
    %c0_14 = arith.constant 0 : index
    %c0_15 = arith.constant 0 : index
    %18 = vector.load %arg8[%c0_14, %c0_15] : memref<32x32xbf16, #tpu.memory_space<vmem>>, vector<32x32xbf16>
    %19 = arith.truncf %17 : vector<32x128xf32> to vector<32x128xbf16>
    %cst_16 = arith.constant dense<0.000000e+00> : vector<32x128xf32>
    %20 = tpu.matmul %18, %19, %cst_16 {dimension_numbers = #tpu.dot_dimension_numbers<[1], [0], [0], [1], [0, 0, 1, 1], [], []>} : vector<32x32xbf16>, vector<32x128xbf16>, vector<32x128xf32> -> vector<32x128xf32>
    %c0_17 = arith.constant 0 : index
    %c0_18 = arith.constant 0 : index
    %21 = vector.load %arg9[%c0_17, %c0_18] : memref<32x1xf32, #tpu.memory_space<vmem>>, vector<32x1xf32>
    %22 = vector.broadcast %21 : vector<32x1xf32> to vector<32x128xf32>
    %23 = arith.addf %20, %22 : vector<32x128xf32>
    %cst_19 = arith.constant 0.000000e+00 : f32
    %24 = vector.broadcast %cst_19 : f32 to vector<32x128xf32>
    %25 = arith.cmpf ogt, %23, %24 : vector<32x128xf32>
    %cst_20 = arith.constant 2.000000e-01 : f32
    %26 = vector.broadcast %cst_20 : f32 to vector<32x128xf32>
    %27 = arith.mulf %26, %23 : vector<32x128xf32>
    %28 = arith.select %25, %23, %27 : vector<32x128xi1>, vector<32x128xf32>
    %c0_21 = arith.constant 0 : index
    %c0_22 = arith.constant 0 : index
    %29 = vector.load %arg10[%c0_21, %c0_22] : memref<2x32xbf16, #tpu.memory_space<vmem>>, vector<2x32xbf16>
    %30 = arith.truncf %28 : vector<32x128xf32> to vector<32x128xbf16>
    %cst_23 = arith.constant dense<0.000000e+00> : vector<2x128xf32>
    %31 = tpu.matmul %29, %30, %cst_23 {dimension_numbers = #tpu.dot_dimension_numbers<[1], [0], [0], [1], [0, 0, 1, 1], [], []>} : vector<2x32xbf16>, vector<32x128xbf16>, vector<2x128xf32> -> vector<2x128xf32>
    %c0_24 = arith.constant 0 : index
    %c0_25 = arith.constant 0 : index
    %32 = vector.load %arg11[%c0_24, %c0_25] : memref<2x1xf32, #tpu.memory_space<vmem>>, vector<2x1xf32>
    %33 = vector.broadcast %32 : vector<2x1xf32> to vector<2x128xf32>
    %34 = arith.addf %31, %33 : vector<2x128xf32>
    %c0_26 = arith.constant 0 : index
    %c0_27 = arith.constant 0 : index
    %35 = vector.load %arg20[%c0_26, %c0_27] : memref<2x128xf32, #tpu.memory_space<vmem>>, vector<2x128xf32>
    tpu.vector_store %arg20[%c0_26, %c0_27], %34 {strides = array<i32>} : memref<2x128xf32, #tpu.memory_space<vmem>>, vector<2x128xf32>,
    %36 = vector.extract_strided_slice %34 {offsets = [0, 0], sizes = [1, 128], strides = [1, 1]} : vector<2x128xf32> to vector<1x128xf32>
    %37 = vector.extract_strided_slice %34 {offsets = [1, 0], sizes = [1, 128], strides = [1, 1]} : vector<2x128xf32> to vector<1x128xf32>
    %c0_28 = arith.constant 0 : index
    %c0_29 = arith.constant 0 : index
    %38 = vector.load %arg2[%c0_28, %c0_29] : memref<1x128xf32, #tpu.memory_space<vmem>>, vector<1x128xf32>
    %39 = arith.mulf %37, %38 : vector<1x128xf32>
    %40 = arith.addf %36, %39 : vector<1x128xf32>
    %c0_30 = arith.constant 0 : index
    %c0_31 = arith.constant 0 : index
    %41 = vector.load %arg12[%c0_30, %c0_31] : memref<32x1xf32, #tpu.memory_space<vmem>>, vector<32x1xf32>
    %42 = vector.broadcast %41 : vector<32x1xf32> to vector<32x128xf32>
    %43 = vector.broadcast %40 : vector<1x128xf32> to vector<32x128xf32>
    %44 = arith.mulf %42, %43 : vector<32x128xf32>
    %c0_32 = arith.constant 0 : index
    %c0_33 = arith.constant 0 : index
    %45 = vector.load %arg13[%c0_32, %c0_33] : memref<32x1xf32, #tpu.memory_space<vmem>>, vector<32x1xf32>
    %46 = vector.broadcast %45 : vector<32x1xf32> to vector<32x128xf32>
    %47 = arith.addf %44, %46 : vector<32x128xf32>
    %cst_34 = arith.constant 0.000000e+00 : f32
    %48 = vector.broadcast %cst_34 : f32 to vector<32x128xf32>
    %49 = arith.cmpf ogt, %47, %48 : vector<32x128xf32>
    %cst_35 = arith.constant 2.000000e-01 : f32
    %50 = vector.broadcast %cst_35 : f32 to vector<32x128xf32>
    %51 = arith.mulf %50, %47 : vector<32x128xf32>
    %52 = arith.select %49, %47, %51 : vector<32x128xi1>, vector<32x128xf32>
    %c0_36 = arith.constant 0 : index
    %c0_37 = arith.constant 0 : index
    %53 = vector.load %arg14[%c0_36, %c0_37] : memref<32x32xbf16, #tpu.memory_space<vmem>>, vector<32x32xbf16>
    %54 = arith.truncf %52 : vector<32x128xf32> to vector<32x128xbf16>
    %cst_38 = arith.constant dense<0.000000e+00> : vector<32x128xf32>
    %55 = tpu.matmul %53, %54, %cst_38 {dimension_numbers = #tpu.dot_dimension_numbers<[1], [0], [0], [1], [0, 0, 1, 1], [], []>} : vector<32x32xbf16>, vector<32x128xbf16>, vector<32x128xf32> -> vector<32x128xf32>
    %c0_39 = arith.constant 0 : index
    %c0_40 = arith.constant 0 : index
    %56 = vector.load %arg15[%c0_39, %c0_40] : memref<32x1xf32, #tpu.memory_space<vmem>>, vector<32x1xf32>
    %57 = vector.broadcast %56 : vector<32x1xf32> to vector<32x128xf32>
    %58 = arith.addf %55, %57 : vector<32x128xf32>
    %cst_41 = arith.constant 0.000000e+00 : f32
    %59 = vector.broadcast %cst_41 : f32 to vector<32x128xf32>
    %60 = arith.cmpf ogt, %58, %59 : vector<32x128xf32>
    %cst_42 = arith.constant 2.000000e-01 : f32
    %61 = vector.broadcast %cst_42 : f32 to vector<32x128xf32>
    %62 = arith.mulf %61, %58 : vector<32x128xf32>
    %63 = arith.select %60, %58, %62 : vector<32x128xi1>, vector<32x128xf32>
    %c0_43 = arith.constant 0 : index
    %c0_44 = arith.constant 0 : index
    %64 = vector.load %arg16[%c0_43, %c0_44] : memref<4x32xbf16, #tpu.memory_space<vmem>>, vector<4x32xbf16>
    %65 = arith.truncf %63 : vector<32x128xf32> to vector<32x128xbf16>
    %cst_45 = arith.constant dense<0.000000e+00> : vector<4x128xf32>
    %66 = tpu.matmul %64, %65, %cst_45 {dimension_numbers = #tpu.dot_dimension_numbers<[1], [0], [0], [1], [0, 0, 1, 1], [], []>} : vector<4x32xbf16>, vector<32x128xbf16>, vector<4x128xf32> -> vector<4x128xf32>
    %c0_46 = arith.constant 0 : index
    %c0_47 = arith.constant 0 : index
    %67 = vector.load %arg18[%c0_46, %c0_47] : memref<4x1xf32, #tpu.memory_space<vmem>>, vector<4x1xf32>
    %68 = vector.broadcast %67 : vector<4x1xf32> to vector<4x128xf32>
    %69 = arith.addf %66, %68 : vector<4x128xf32>
    %c0_48 = arith.constant 0 : index
    %c0_49 = arith.constant 0 : index
    %70 = vector.load %arg17[%c0_48, %c0_49] : memref<4x1xf32, #tpu.memory_space<vmem>>, vector<4x1xf32>
    %cst_50 = arith.constant 0.000000e+00 : f32
    %71 = vector.broadcast %cst_50 : f32 to vector<1x128xf32>
    %cst_51 = arith.constant 0.000000e+00 : f32
    %72 = vector.broadcast %cst_51 : f32 to vector<1x128xf32>
    %c0_i32_52 = arith.constant 0 : i32
    %c6_i32_53 = arith.constant 6 : i32
    %73 = arith.addi %c0_i32_52, %c6_i32_53 : i32
    %c1_i32_54 = arith.constant 1 : i32
    %74:2 = scf.for %arg22 = %c0_i32_52 to %73 step %c1_i32_54 iter_args(%arg23 = %71, %arg24 = %72) -> (vector<1x128xf32>, vector<1x128xf32>)  : i32 {
      %75 = vector.broadcast %70 : vector<4x1xf32> to vector<4x128xf32>
      %76 = vector.broadcast %arg23 : vector<1x128xf32> to vector<4x128xf32>
      %77 = arith.mulf %75, %76 : vector<4x128xf32>
      %78 = arith.addf %69, %77 : vector<4x128xf32>
      %79 = math.tanh %78 : vector<4x128xf32>
      %80 = vector.extract_strided_slice %79 {offsets = [0, 0], sizes = [1, 128], strides = [1, 1]} : vector<4x128xf32> to vector<1x128xf32>
      %cst_56 = arith.constant 5.000000e-01 : f32
      %81 = vector.broadcast %cst_56 : f32 to vector<1x128xf32>
      %82 = arith.mulf %80, %81 : vector<1x128xf32>
      %cst_57 = arith.constant 5.000000e-01 : f32
      %83 = vector.broadcast %cst_57 : f32 to vector<1x128xf32>
      %84 = arith.addf %82, %83 : vector<1x128xf32>
      %85 = vector.extract_strided_slice %79 {offsets = [1, 0], sizes = [1, 128], strides = [1, 1]} : vector<4x128xf32> to vector<1x128xf32>
      %cst_58 = arith.constant 5.000000e-01 : f32
      %86 = vector.broadcast %cst_58 : f32 to vector<1x128xf32>
      %87 = arith.mulf %85, %86 : vector<1x128xf32>
      %cst_59 = arith.constant 5.000000e-01 : f32
      %88 = vector.broadcast %cst_59 : f32 to vector<1x128xf32>
      %89 = arith.addf %87, %88 : vector<1x128xf32>
      %90 = vector.extract_strided_slice %79 {offsets = [2, 0], sizes = [1, 128], strides = [1, 1]} : vector<4x128xf32> to vector<1x128xf32>
      %91 = vector.extract_strided_slice %79 {offsets = [3, 0], sizes = [1, 128], strides = [1, 1]} : vector<4x128xf32> to vector<1x128xf32>
      %cst_60 = arith.constant 5.000000e-01 : f32
      %92 = vector.broadcast %cst_60 : f32 to vector<1x128xf32>
      %93 = arith.mulf %91, %92 : vector<1x128xf32>
      %cst_61 = arith.constant 5.000000e-01 : f32
      %94 = vector.broadcast %cst_61 : f32 to vector<1x128xf32>
      %95 = arith.addf %93, %94 : vector<1x128xf32>
      %96 = arith.mulf %89, %arg24 : vector<1x128xf32>
      %97 = arith.mulf %84, %90 : vector<1x128xf32>
      %98 = arith.addf %96, %97 : vector<1x128xf32>
      %99 = math.tanh %98 : vector<1x128xf32>
      %100 = arith.mulf %95, %99 : vector<1x128xf32>
      %c0_62 = arith.constant 0 : index
      %c0_63 = arith.constant 0 : index
      %101 = vector.load %arg21[%c0_62, %c0_63] : memref<8x128xf32, #tpu.memory_space<vmem>>, vector<1x128xf32>
      tpu.vector_store %arg21[%c0_62, %c0_63], %100 {strides = array<i32>} : memref<8x128xf32, #tpu.memory_space<vmem>>, vector<1x128xf32>,
      %102 = vector.broadcast %70 : vector<4x1xf32> to vector<4x128xf32>
      %103 = vector.broadcast %100 : vector<1x128xf32> to vector<4x128xf32>
      %104 = arith.mulf %102, %103 : vector<4x128xf32>
      %105 = arith.addf %69, %104 : vector<4x128xf32>
      %106 = math.tanh %105 : vector<4x128xf32>
      %107 = vector.extract_strided_slice %106 {offsets = [0, 0], sizes = [1, 128], strides = [1, 1]} : vector<4x128xf32> to vector<1x128xf32>
      %cst_64 = arith.constant 5.000000e-01 : f32
      %108 = vector.broadcast %cst_64 : f32 to vector<1x128xf32>
      %109 = arith.mulf %107, %108 : vector<1x128xf32>
      %cst_65 = arith.constant 5.000000e-01 : f32
      %110 = vector.broadcast %cst_65 : f32 to vector<1x128xf32>
      %111 = arith.addf %109, %110 : vector<1x128xf32>
      %112 = vector.extract_strided_slice %106 {offsets = [1, 0], sizes = [1, 128], strides = [1, 1]} : vector<4x128xf32> to vector<1x128xf32>
      %cst_66 = arith.constant 5.000000e-01 : f32
      %113 = vector.broadcast %cst_66 : f32 to vector<1x128xf32>
      %114 = arith.mulf %112, %113 : vector<1x128xf32>
      %cst_67 = arith.constant 5.000000e-01 : f32
      %115 = vector.broadcast %cst_67 : f32 to vector<1x128xf32>
      %116 = arith.addf %114, %115 : vector<1x128xf32>
      %117 = vector.extract_strided_slice %106 {offsets = [2, 0], sizes = [1, 128], strides = [1, 1]} : vector<4x128xf32> to vector<1x128xf32>
      %118 = vector.extract_strided_slice %106 {offsets = [3, 0], sizes = [1, 128], strides = [1, 1]} : vector<4x128xf32> to vector<1x128xf32>
      %cst_68 = arith.constant 5.000000e-01 : f32
      %119 = vector.broadcast %cst_68 : f32 to vector<1x128xf32>
      %120 = arith.mulf %118, %119 : vector<1x128xf32>
      %cst_69 = arith.constant 5.000000e-01 : f32
      %121 = vector.broadcast %cst_69 : f32 to vector<1x128xf32>
      %122 = arith.addf %120, %121 : vector<1x128xf32>
      %123 = arith.mulf %116, %98 : vector<1x128xf32>
      %124 = arith.mulf %111, %117 : vector<1x128xf32>
      %125 = arith.addf %123, %124 : vector<1x128xf32>
      %126 = math.tanh %125 : vector<1x128xf32>
      %127 = arith.mulf %122, %126 : vector<1x128xf32>
      %c1 = arith.constant 1 : index
      %c0_70 = arith.constant 0 : index
      %128 = vector.load %arg21[%c1, %c0_70] : memref<8x128xf32, #tpu.memory_space<vmem>>, vector<1x128xf32>
      tpu.vector_store %arg21[%c1, %c0_70], %127 {strides = array<i32>} : memref<8x128xf32, #tpu.memory_space<vmem>>, vector<1x128xf32>,
      %129 = vector.broadcast %70 : vector<4x1xf32> to vector<4x128xf32>
      %130 = vector.broadcast %127 : vector<1x128xf32> to vector<4x128xf32>
      %131 = arith.mulf %129, %130 : vector<4x128xf32>
      %132 = arith.addf %69, %131 : vector<4x128xf32>
      %133 = math.tanh %132 : vector<4x128xf32>
      %134 = vector.extract_strided_slice %133 {offsets = [0, 0], sizes = [1, 128], strides = [1, 1]} : vector<4x128xf32> to vector<1x128xf32>
      %cst_71 = arith.constant 5.000000e-01 : f32
      %135 = vector.broadcast %cst_71 : f32 to vector<1x128xf32>
      %136 = arith.mulf %134, %135 : vector<1x128xf32>
      %cst_72 = arith.constant 5.000000e-01 : f32
      %137 = vector.broadcast %cst_72 : f32 to vector<1x128xf32>
      %138 = arith.addf %136, %137 : vector<1x128xf32>
      %139 = vector.extract_strided_slice %133 {offsets = [1, 0], sizes = [1, 128], strides = [1, 1]} : vector<4x128xf32> to vector<1x128xf32>
      %cst_73 = arith.constant 5.000000e-01 : f32
      %140 = vector.broadcast %cst_73 : f32 to vector<1x128xf32>
      %141 = arith.mulf %139, %140 : vector<1x128xf32>
      %cst_74 = arith.constant 5.000000e-01 : f32
      %142 = vector.broadcast %cst_74 : f32 to vector<1x128xf32>
      %143 = arith.addf %141, %142 : vector<1x128xf32>
      %144 = vector.extract_strided_slice %133 {offsets = [2, 0], sizes = [1, 128], strides = [1, 1]} : vector<4x128xf32> to vector<1x128xf32>
      %145 = vector.extract_strided_slice %133 {offsets = [3, 0], sizes = [1, 128], strides = [1, 1]} : vector<4x128xf32> to vector<1x128xf32>
      %cst_75 = arith.constant 5.000000e-01 : f32
      %146 = vector.broadcast %cst_75 : f32 to vector<1x128xf32>
      %147 = arith.mulf %145, %146 : vector<1x128xf32>
      %cst_76 = arith.constant 5.000000e-01 : f32
      %148 = vector.broadcast %cst_76 : f32 to vector<1x128xf32>
      %149 = arith.addf %147, %148 : vector<1x128xf32>
      %150 = arith.mulf %143, %125 : vector<1x128xf32>
      %151 = arith.mulf %138, %144 : vector<1x128xf32>
      %152 = arith.addf %150, %151 : vector<1x128xf32>
      %153 = math.tanh %152 : vector<1x128xf32>
      %154 = arith.mulf %149, %153 : vector<1x128xf32>
      %c2 = arith.constant 2 : index
      %c0_77 = arith.constant 0 : index
      %155 = vector.load %arg21[%c2, %c0_77] : memref<8x128xf32, #tpu.memory_space<vmem>>, vector<1x128xf32>
      tpu.vector_store %arg21[%c2, %c0_77], %154 {strides = array<i32>} : memref<8x128xf32, #tpu.memory_space<vmem>>, vector<1x128xf32>,
      %156 = vector.broadcast %70 : vector<4x1xf32> to vector<4x128xf32>
      %157 = vector.broadcast %154 : vector<1x128xf32> to vector<4x128xf32>
      %158 = arith.mulf %156, %157 : vector<4x128xf32>
      %159 = arith.addf %69, %158 : vector<4x128xf32>
      %160 = math.tanh %159 : vector<4x128xf32>
      %161 = vector.extract_strided_slice %160 {offsets = [0, 0], sizes = [1, 128], strides = [1, 1]} : vector<4x128xf32> to vector<1x128xf32>
      %cst_78 = arith.constant 5.000000e-01 : f32
      %162 = vector.broadcast %cst_78 : f32 to vector<1x128xf32>
      %163 = arith.mulf %161, %162 : vector<1x128xf32>
      %cst_79 = arith.constant 5.000000e-01 : f32
      %164 = vector.broadcast %cst_79 : f32 to vector<1x128xf32>
      %165 = arith.addf %163, %164 : vector<1x128xf32>
      %166 = vector.extract_strided_slice %160 {offsets = [1, 0], sizes = [1, 128], strides = [1, 1]} : vector<4x128xf32> to vector<1x128xf32>
      %cst_80 = arith.constant 5.000000e-01 : f32
      %167 = vector.broadcast %cst_80 : f32 to vector<1x128xf32>
      %168 = arith.mulf %166, %167 : vector<1x128xf32>
      %cst_81 = arith.constant 5.000000e-01 : f32
      %169 = vector.broadcast %cst_81 : f32 to vector<1x128xf32>
      %170 = arith.addf %168, %169 : vector<1x128xf32>
      %171 = vector.extract_strided_slice %160 {offsets = [2, 0], sizes = [1, 128], strides = [1, 1]} : vector<4x128xf32> to vector<1x128xf32>
      %172 = vector.extract_strided_slice %160 {offsets = [3, 0], sizes = [1, 128], strides = [1, 1]} : vector<4x128xf32> to vector<1x128xf32>
      %cst_82 = arith.constant 5.000000e-01 : f32
      %173 = vector.broadcast %cst_82 : f32 to vector<1x128xf32>
      %174 = arith.mulf %172, %173 : vector<1x128xf32>
      %cst_83 = arith.constant 5.000000e-01 : f32
      %175 = vector.broadcast %cst_83 : f32 to vector<1x128xf32>
      %176 = arith.addf %174, %175 : vector<1x128xf32>
      %177 = arith.mulf %170, %152 : vector<1x128xf32>
      %178 = arith.mulf %165, %171 : vector<1x128xf32>
      %179 = arith.addf %177, %178 : vector<1x128xf32>
      %180 = math.tanh %179 : vector<1x128xf32>
      %181 = arith.mulf %176, %180 : vector<1x128xf32>
      %c3 = arith.constant 3 : index
      %c0_84 = arith.constant 0 : index
      %182 = vector.load %arg21[%c3, %c0_84] : memref<8x128xf32, #tpu.memory_space<vmem>>, vector<1x128xf32>
      tpu.vector_store %arg21[%c3, %c0_84], %181 {strides = array<i32>} : memref<8x128xf32, #tpu.memory_space<vmem>>, vector<1x128xf32>,
      %183 = vector.broadcast %70 : vector<4x1xf32> to vector<4x128xf32>
      %184 = vector.broadcast %181 : vector<1x128xf32> to vector<4x128xf32>
      %185 = arith.mulf %183, %184 : vector<4x128xf32>
      %186 = arith.addf %69, %185 : vector<4x128xf32>
      %187 = math.tanh %186 : vector<4x128xf32>
      %188 = vector.extract_strided_slice %187 {offsets = [0, 0], sizes = [1, 128], strides = [1, 1]} : vector<4x128xf32> to vector<1x128xf32>
      %cst_85 = arith.constant 5.000000e-01 : f32
      %189 = vector.broadcast %cst_85 : f32 to vector<1x128xf32>
      %190 = arith.mulf %188, %189 : vector<1x128xf32>
      %cst_86 = arith.constant 5.000000e-01 : f32
      %191 = vector.broadcast %cst_86 : f32 to vector<1x128xf32>
      %192 = arith.addf %190, %191 : vector<1x128xf32>
      %193 = vector.extract_strided_slice %187 {offsets = [1, 0], sizes = [1, 128], strides = [1, 1]} : vector<4x128xf32> to vector<1x128xf32>
      %cst_87 = arith.constant 5.000000e-01 : f32
      %194 = vector.broadcast %cst_87 : f32 to vector<1x128xf32>
      %195 = arith.mulf %193, %194 : vector<1x128xf32>
      %cst_88 = arith.constant 5.000000e-01 : f32
      %196 = vector.broadcast %cst_88 : f32 to vector<1x128xf32>
      %197 = arith.addf %195, %196 : vector<1x128xf32>
      %198 = vector.extract_strided_slice %187 {offsets = [2, 0], sizes = [1, 128], strides = [1, 1]} : vector<4x128xf32> to vector<1x128xf32>
      %199 = vector.extract_strided_slice %187 {offsets = [3, 0], sizes = [1, 128], strides = [1, 1]} : vector<4x128xf32> to vector<1x128xf32>
      %cst_89 = arith.constant 5.000000e-01 : f32
      %200 = vector.broadcast %cst_89 : f32 to vector<1x128xf32>
      %201 = arith.mulf %199, %200 : vector<1x128xf32>
      %cst_90 = arith.constant 5.000000e-01 : f32
      %202 = vector.broadcast %cst_90 : f32 to vector<1x128xf32>
      %203 = arith.addf %201, %202 : vector<1x128xf32>
      %204 = arith.mulf %197, %179 : vector<1x128xf32>
      %205 = arith.mulf %192, %198 : vector<1x128xf32>
      %206 = arith.addf %204, %205 : vector<1x128xf32>
      %207 = math.tanh %206 : vector<1x128xf32>
      %208 = arith.mulf %203, %207 : vector<1x128xf32>
      %c4 = arith.constant 4 : index
      %c0_91 = arith.constant 0 : index
      %209 = vector.load %arg21[%c4, %c0_91] : memref<8x128xf32, #tpu.memory_space<vmem>>, vector<1x128xf32>
      tpu.vector_store %arg21[%c4, %c0_91], %208 {strides = array<i32>} : memref<8x128xf32, #tpu.memory_space<vmem>>, vector<1x128xf32>,
      %210 = vector.broadcast %70 : vector<4x1xf32> to vector<4x128xf32>
      %211 = vector.broadcast %208 : vector<1x128xf32> to vector<4x128xf32>
      %212 = arith.mulf %210, %211 : vector<4x128xf32>
      %213 = arith.addf %69, %212 : vector<4x128xf32>
      %214 = math.tanh %213 : vector<4x128xf32>
      %215 = vector.extract_strided_slice %214 {offsets = [0, 0], sizes = [1, 128], strides = [1, 1]} : vector<4x128xf32> to vector<1x128xf32>
      %cst_92 = arith.constant 5.000000e-01 : f32
      %216 = vector.broadcast %cst_92 : f32 to vector<1x128xf32>
      %217 = arith.mulf %215, %216 : vector<1x128xf32>
      %cst_93 = arith.constant 5.000000e-01 : f32
      %218 = vector.broadcast %cst_93 : f32 to vector<1x128xf32>
      %219 = arith.addf %217, %218 : vector<1x128xf32>
      %220 = vector.extract_strided_slice %214 {offsets = [1, 0], sizes = [1, 128], strides = [1, 1]} : vector<4x128xf32> to vector<1x128xf32>
      %cst_94 = arith.constant 5.000000e-01 : f32
      %221 = vector.broadcast %cst_94 : f32 to vector<1x128xf32>
      %222 = arith.mulf %220, %221 : vector<1x128xf32>
      %cst_95 = arith.constant 5.000000e-01 : f32
      %223 = vector.broadcast %cst_95 : f32 to vector<1x128xf32>
      %224 = arith.addf %222, %223 : vector<1x128xf32>
      %225 = vector.extract_strided_slice %214 {offsets = [2, 0], sizes = [1, 128], strides = [1, 1]} : vector<4x128xf32> to vector<1x128xf32>
      %226 = vector.extract_strided_slice %214 {offsets = [3, 0], sizes = [1, 128], strides = [1, 1]} : vector<4x128xf32> to vector<1x128xf32>
      %cst_96 = arith.constant 5.000000e-01 : f32
      %227 = vector.broadcast %cst_96 : f32 to vector<1x128xf32>
      %228 = arith.mulf %226, %227 : vector<1x128xf32>
      %cst_97 = arith.constant 5.000000e-01 : f32
      %229 = vector.broadcast %cst_97 : f32 to vector<1x128xf32>
      %230 = arith.addf %228, %229 : vector<1x128xf32>
      %231 = arith.mulf %224, %206 : vector<1x128xf32>
      %232 = arith.mulf %219, %225 : vector<1x128xf32>
      %233 = arith.addf %231, %232 : vector<1x128xf32>
      %234 = math.tanh %233 : vector<1x128xf32>
      %235 = arith.mulf %230, %234 : vector<1x128xf32>
      %c5 = arith.constant 5 : index
      %c0_98 = arith.constant 0 : index
      %236 = vector.load %arg21[%c5, %c0_98] : memref<8x128xf32, #tpu.memory_space<vmem>>, vector<1x128xf32>
      tpu.vector_store %arg21[%c5, %c0_98], %235 {strides = array<i32>} : memref<8x128xf32, #tpu.memory_space<vmem>>, vector<1x128xf32>,
      %237 = vector.broadcast %70 : vector<4x1xf32> to vector<4x128xf32>
      %238 = vector.broadcast %235 : vector<1x128xf32> to vector<4x128xf32>
      %239 = arith.mulf %237, %238 : vector<4x128xf32>
      %240 = arith.addf %69, %239 : vector<4x128xf32>
      %241 = math.tanh %240 : vector<4x128xf32>
      %242 = vector.extract_strided_slice %241 {offsets = [0, 0], sizes = [1, 128], strides = [1, 1]} : vector<4x128xf32> to vector<1x128xf32>
      %cst_99 = arith.constant 5.000000e-01 : f32
      %243 = vector.broadcast %cst_99 : f32 to vector<1x128xf32>
      %244 = arith.mulf %242, %243 : vector<1x128xf32>
      %cst_100 = arith.constant 5.000000e-01 : f32
      %245 = vector.broadcast %cst_100 : f32 to vector<1x128xf32>
      %246 = arith.addf %244, %245 : vector<1x128xf32>
      %247 = vector.extract_strided_slice %241 {offsets = [1, 0], sizes = [1, 128], strides = [1, 1]} : vector<4x128xf32> to vector<1x128xf32>
      %cst_101 = arith.constant 5.000000e-01 : f32
      %248 = vector.broadcast %cst_101 : f32 to vector<1x128xf32>
      %249 = arith.mulf %247, %248 : vector<1x128xf32>
      %cst_102 = arith.constant 5.000000e-01 : f32
      %250 = vector.broadcast %cst_102 : f32 to vector<1x128xf32>
      %251 = arith.addf %249, %250 : vector<1x128xf32>
      %252 = vector.extract_strided_slice %241 {offsets = [2, 0], sizes = [1, 128], strides = [1, 1]} : vector<4x128xf32> to vector<1x128xf32>
      %253 = vector.extract_strided_slice %241 {offsets = [3, 0], sizes = [1, 128], strides = [1, 1]} : vector<4x128xf32> to vector<1x128xf32>
      %cst_103 = arith.constant 5.000000e-01 : f32
      %254 = vector.broadcast %cst_103 : f32 to vector<1x128xf32>
      %255 = arith.mulf %253, %254 : vector<1x128xf32>
      %cst_104 = arith.constant 5.000000e-01 : f32
      %256 = vector.broadcast %cst_104 : f32 to vector<1x128xf32>
      %257 = arith.addf %255, %256 : vector<1x128xf32>
      %258 = arith.mulf %251, %233 : vector<1x128xf32>
      %259 = arith.mulf %246, %252 : vector<1x128xf32>
      %260 = arith.addf %258, %259 : vector<1x128xf32>
      %261 = math.tanh %260 : vector<1x128xf32>
      %262 = arith.mulf %257, %261 : vector<1x128xf32>
      %c6 = arith.constant 6 : index
      %c0_105 = arith.constant 0 : index
      %263 = vector.load %arg21[%c6, %c0_105] : memref<8x128xf32, #tpu.memory_space<vmem>>, vector<1x128xf32>
      tpu.vector_store %arg21[%c6, %c0_105], %262 {strides = array<i32>} : memref<8x128xf32, #tpu.memory_space<vmem>>, vector<1x128xf32>,
      %264 = vector.broadcast %70 : vector<4x1xf32> to vector<4x128xf32>
      %265 = vector.broadcast %262 : vector<1x128xf32> to vector<4x128xf32>
      %266 = arith.mulf %264, %265 : vector<4x128xf32>
      %267 = arith.addf %69, %266 : vector<4x128xf32>
      %268 = math.tanh %267 : vector<4x128xf32>
      %269 = vector.extract_strided_slice %268 {offsets = [0, 0], sizes = [1, 128], strides = [1, 1]} : vector<4x128xf32> to vector<1x128xf32>
      %cst_106 = arith.constant 5.000000e-01 : f32
      %270 = vector.broadcast %cst_106 : f32 to vector<1x128xf32>
      %271 = arith.mulf %269, %270 : vector<1x128xf32>
      %cst_107 = arith.constant 5.000000e-01 : f32
      %272 = vector.broadcast %cst_107 : f32 to vector<1x128xf32>
      %273 = arith.addf %271, %272 : vector<1x128xf32>
      %274 = vector.extract_strided_slice %268 {offsets = [1, 0], sizes = [1, 128], strides = [1, 1]} : vector<4x128xf32> to vector<1x128xf32>
      %cst_108 = arith.constant 5.000000e-01 : f32
      %275 = vector.broadcast %cst_108 : f32 to vector<1x128xf32>
      %276 = arith.mulf %274, %275 : vector<1x128xf32>
      %cst_109 = arith.constant 5.000000e-01 : f32
      %277 = vector.broadcast %cst_109 : f32 to vector<1x128xf32>
      %278 = arith.addf %276, %277 : vector<1x128xf32>
      %279 = vector.extract_strided_slice %268 {offsets = [2, 0], sizes = [1, 128], strides = [1, 1]} : vector<4x128xf32> to vector<1x128xf32>
      %280 = vector.extract_strided_slice %268 {offsets = [3, 0], sizes = [1, 128], strides = [1, 1]} : vector<4x128xf32> to vector<1x128xf32>
      %cst_110 = arith.constant 5.000000e-01 : f32
      %281 = vector.broadcast %cst_110 : f32 to vector<1x128xf32>
      %282 = arith.mulf %280, %281 : vector<1x128xf32>
      %cst_111 = arith.constant 5.000000e-01 : f32
      %283 = vector.broadcast %cst_111 : f32 to vector<1x128xf32>
      %284 = arith.addf %282, %283 : vector<1x128xf32>
      %285 = arith.mulf %278, %260 : vector<1x128xf32>
      %286 = arith.mulf %273, %279 : vector<1x128xf32>
      %287 = arith.addf %285, %286 : vector<1x128xf32>
      %288 = math.tanh %287 : vector<1x128xf32>
      %289 = arith.mulf %284, %288 : vector<1x128xf32>
      %c7 = arith.constant 7 : index
      %c0_112 = arith.constant 0 : index
      %290 = vector.load %arg21[%c7, %c0_112] : memref<8x128xf32, #tpu.memory_space<vmem>>, vector<1x128xf32>
      tpu.vector_store %arg21[%c7, %c0_112], %289 {strides = array<i32>} : memref<8x128xf32, #tpu.memory_space<vmem>>, vector<1x128xf32>,
      %c8_i32 = arith.constant 8 : i32
      %291 = arith.muli %arg22, %c8_i32 : i32
      %292 = tpu.assume_multiple %291, 8 : i32
      %c0_113 = arith.constant 0 : index
      %c0_114 = arith.constant 0 : index
      %293 = vector.load %arg21[%c0_113, %c0_114] : memref<8x128xf32, #tpu.memory_space<vmem>>, vector<8x128xf32>
      %294 = arith.index_cast %292 : i32 to index
      %c0_115 = arith.constant 0 : index
      %295 = vector.load %arg19[%294, %c0_115] : memref<48x128xf32, #tpu.memory_space<vmem>>, vector<8x128xf32>
      tpu.vector_store %arg19[%294, %c0_115], %293 {strides = array<i32>} : memref<48x128xf32, #tpu.memory_space<vmem>>, vector<8x128xf32>,
      scf.yield %289, %287 : vector<1x128xf32>, vector<1x128xf32>
    }
    %c6_i32_55 = arith.constant 6 : i32
    return
  }
  func.func @transform_0(%arg0: i32) -> (i32, i32) {
    %c0_i32 = arith.constant 0 : i32
    %c0_i32_0 = arith.constant 0 : i32
    return %c0_i32, %arg0 : i32, i32
  }
  func.func @transform_1(%arg0: i32) -> (i32, i32) {
    %c0_i32 = arith.constant 0 : i32
    %c0_i32_0 = arith.constant 0 : i32
    return %c0_i32, %arg0 : i32, i32
  }
  func.func @transform_2(%arg0: i32) -> (i32, i32) {
    %c0_i32 = arith.constant 0 : i32
    %c0_i32_0 = arith.constant 0 : i32
    %c0_i32_1 = arith.constant 0 : i32
    return %c0_i32, %c0_i32_0 : i32, i32
  }
  func.func @transform_3(%arg0: i32) -> (i32, i32) {
    %c0_i32 = arith.constant 0 : i32
    %c0_i32_0 = arith.constant 0 : i32
    %c0_i32_1 = arith.constant 0 : i32
    return %c0_i32, %c0_i32_0 : i32, i32
  }
  func.func @transform_4(%arg0: i32) -> (i32, i32) {
    %c0_i32 = arith.constant 0 : i32
    %c0_i32_0 = arith.constant 0 : i32
    %c0_i32_1 = arith.constant 0 : i32
    return %c0_i32, %c0_i32_0 : i32, i32
  }
  func.func @transform_5(%arg0: i32) -> (i32, i32) {
    %c0_i32 = arith.constant 0 : i32
    %c0_i32_0 = arith.constant 0 : i32
    %c0_i32_1 = arith.constant 0 : i32
    return %c0_i32, %c0_i32_0 : i32, i32
  }
  func.func @transform_6(%arg0: i32) -> (i32, i32) {
    %c0_i32 = arith.constant 0 : i32
    %c0_i32_0 = arith.constant 0 : i32
    %c0_i32_1 = arith.constant 0 : i32
    return %c0_i32, %c0_i32_0 : i32, i32
  }
  func.func @transform_7(%arg0: i32) -> (i32, i32) {
    %c0_i32 = arith.constant 0 : i32
    %c0_i32_0 = arith.constant 0 : i32
    %c0_i32_1 = arith.constant 0 : i32
    return %c0_i32, %c0_i32_0 : i32, i32
  }
  func.func @transform_8(%arg0: i32) -> (i32, i32) {
    %c0_i32 = arith.constant 0 : i32
    %c0_i32_0 = arith.constant 0 : i32
    %c0_i32_1 = arith.constant 0 : i32
    return %c0_i32, %c0_i32_0 : i32, i32
  }
  func.func @transform_9(%arg0: i32) -> (i32, i32) {
    %c0_i32 = arith.constant 0 : i32
    %c0_i32_0 = arith.constant 0 : i32
    %c0_i32_1 = arith.constant 0 : i32
    return %c0_i32, %c0_i32_0 : i32, i32
  }
  func.func @transform_10(%arg0: i32) -> (i32, i32) {
    %c0_i32 = arith.constant 0 : i32
    %c0_i32_0 = arith.constant 0 : i32
    %c0_i32_1 = arith.constant 0 : i32
    return %c0_i32, %c0_i32_0 : i32, i32
  }
  func.func @transform_11(%arg0: i32) -> (i32, i32) {
    %c0_i32 = arith.constant 0 : i32
    %c0_i32_0 = arith.constant 0 : i32
    %c0_i32_1 = arith.constant 0 : i32
    return %c0_i32, %c0_i32_0 : i32, i32
  }
  func.func @transform_12(%arg0: i32) -> (i32, i32) {
    %c0_i32 = arith.constant 0 : i32
    %c0_i32_0 = arith.constant 0 : i32
    %c0_i32_1 = arith.constant 0 : i32
    return %c0_i32, %c0_i32_0 : i32, i32
  }
  func.func @transform_13(%arg0: i32) -> (i32, i32) {
    %c0_i32 = arith.constant 0 : i32
    %c0_i32_0 = arith.constant 0 : i32
    %c0_i32_1 = arith.constant 0 : i32
    return %c0_i32, %c0_i32_0 : i32, i32
  }
  func.func @transform_14(%arg0: i32) -> (i32, i32) {
    %c0_i32 = arith.constant 0 : i32
    %c0_i32_0 = arith.constant 0 : i32
    %c0_i32_1 = arith.constant 0 : i32
    return %c0_i32, %c0_i32_0 : i32, i32
  }
  func.func @transform_15(%arg0: i32) -> (i32, i32) {
    %c0_i32 = arith.constant 0 : i32
    %c0_i32_0 = arith.constant 0 : i32
    %c0_i32_1 = arith.constant 0 : i32
    return %c0_i32, %c0_i32_0 : i32, i32
  }
  func.func @transform_16(%arg0: i32) -> (i32, i32) {
    %c0_i32 = arith.constant 0 : i32
    %c0_i32_0 = arith.constant 0 : i32
    %c0_i32_1 = arith.constant 0 : i32
    return %c0_i32, %c0_i32_0 : i32, i32
  }
  func.func @transform_17(%arg0: i32) -> (i32, i32) {
    %c0_i32 = arith.constant 0 : i32
    %c0_i32_0 = arith.constant 0 : i32
    %c0_i32_1 = arith.constant 0 : i32
    return %c0_i32, %c0_i32_0 : i32, i32
  }
  func.func @transform_18(%arg0: i32) -> (i32, i32) {
    %c0_i32 = arith.constant 0 : i32
    %c0_i32_0 = arith.constant 0 : i32
    return %c0_i32, %arg0 : i32, i32
  }
  func.func @transform_19(%arg0: i32) -> (i32, i32) {
    %c0_i32 = arith.constant 0 : i32
    %c0_i32_0 = arith.constant 0 : i32
    return %c0_i32, %arg0 : i32, i32
  }
}

</mosaic_0001>

<llo_original>
// kernel: tpu_custom_call.1
$region0: #{tpu_custom_call.1}
  #allocation0 [shape = 'u32[]', space=smem, size = 0x4, offset = 0x4, fixed_abs, tag = 'smem constant byte address 0x4 - core index']
  #allocation1 [shape = 'u32[72,128]{1,0:T(1,128)}', space=vmem, size = 0x9000, scoped, tag = 'internal scratch']
  #allocation2 [shape = 'f32[8,128]{1,0:T(8,128)}', space=vmem, size = 0x1000, scoped, tag = 'scratch operand']
  %s0 = inlined_call_operand.vmem [shape: f32[48,128], index: 0, kind: input, shape index: {}]
  %s1 = inlined_call_operand.vmem [shape: f32[1,128], index: 1, kind: input, shape index: {}]
  %s2 = inlined_call_operand.vmem [shape: f32[128,1], index: 2, kind: input, shape index: {}]
  %s3 = inlined_call_operand.vmem [shape: bf16[128,32], index: 3, kind: input, shape index: {}]
  %s4 = inlined_call_operand.vmem [shape: f32[128,1], index: 4, kind: input, shape index: {}]
  %s5 = inlined_call_operand.vmem [shape: bf16[32,32], index: 5, kind: input, shape index: {}]
  %s6 = inlined_call_operand.vmem [shape: f32[32,1], index: 6, kind: input, shape index: {}]
  %s7 = inlined_call_operand.vmem [shape: bf16[32,32], index: 7, kind: input, shape index: {}]
  %s8 = inlined_call_operand.vmem [shape: f32[32,1], index: 8, kind: input, shape index: {}]
  %s9 = inlined_call_operand.vmem [shape: bf16[2,32], index: 9, kind: input, shape index: {}]
  %s10 = inlined_call_operand.vmem [shape: f32[2,1], index: 10, kind: input, shape index: {}]
  %s11 = inlined_call_operand.vmem [shape: f32[32,1], index: 11, kind: input, shape index: {}]
  %s12 = inlined_call_operand.vmem [shape: f32[32,1], index: 12, kind: input, shape index: {}]
  %s13 = inlined_call_operand.vmem [shape: bf16[32,32], index: 13, kind: input, shape index: {}]
  %s14 = inlined_call_operand.vmem [shape: f32[32,1], index: 14, kind: input, shape index: {}]
  %s15 = inlined_call_operand.vmem [shape: bf16[4,32], index: 15, kind: input, shape index: {}]
  %s16 = inlined_call_operand.vmem [shape: f32[4,1], index: 16, kind: input, shape index: {}]
  %s17 = inlined_call_operand.vmem [shape: f32[4,1], index: 17, kind: input, shape index: {}]
  %s18 = inlined_call_operand.hbm [shape: f32[48,128], index: 18, kind: output, shape index: {0}]
  %s19 = inlined_call_operand.hbm [shape: f32[2,128], index: 19, kind: output, shape index: {1}]
  %20 = xla_tuple %s18, %s19
  %s21 = sld [smem:[#allocation0]]
  $region104: #{tpu_custom_call.1} parent=0
    _
  %s23 = ssub.s32 1, %s21
  %s24 = scalar_select 0, %s23, %s21
  $region1: #{tpu_custom_call.1} parent=0
    #allocation3 [shape = 'u8[24576]{0}', space=vmem, size = 0x6000, scoped, tag = 'output window, operand 0, single buffered']
    #allocation4 [shape = 's32[1]{0}', space=sflag, size = 0x4, scoped, tag = 'scoped memory for tpu_custom_call.1']
    #allocation5 [shape = 'u8[1024]{0}', space=vmem, size = 0x400, scoped, tag = 'output window, operand 1, single buffered']
    #allocation6 [shape = 's32[1]{0}', space=sflag, size = 0x4, scoped, tag = 'scoped memory for tpu_custom_call.1']
    %25 = vsyncpa [#allocation4], 0
    %26 = vsyncpa [#allocation6], 0
    // Predicated region
    $region2: #{tpu_custom_call.1} parent=1 // pred_check
      _
    $region3: #{tpu_custom_call.1} parent=1 // pred_check_branch
      %28 = sbr.rel (0) target = $region5
    $region4: #{tpu_custom_call.1} parent=1 // pred_region
      _
    $region5: #{tpu_custom_call.1} parent=1 // pred_fallthru
      _
    // Predicated region
    $region6: #{tpu_custom_call.1} parent=1 // pred_check
      _
    $region7: #{tpu_custom_call.1} parent=1 // pred_check_branch
      %30 = sbr.rel (0) target = $region9
    $region8: #{tpu_custom_call.1} parent=1 // pred_region
      _
    $region9: #{tpu_custom_call.1} parent=1 // pred_fallthru
      _
    // Predicated region
    $region10: #{tpu_custom_call.1} parent=1 // pred_check
      _
    $region11: #{tpu_custom_call.1} parent=1 // pred_check_branch
      %32 = sbr.rel (0) target = $region13
    $region12: #{tpu_custom_call.1} parent=1 // pred_region
      _
    $region13: #{tpu_custom_call.1} parent=1 // pred_fallthru
      _
    // Predicated region
    $region14: #{tpu_custom_call.1} parent=1 // pred_check
      _
    $region15: #{tpu_custom_call.1} parent=1 // pred_check_branch
      %34 = sbr.rel (0) target = $region17
    $region16: #{tpu_custom_call.1} parent=1 // pred_region
      _
    $region17: #{tpu_custom_call.1} parent=1 // pred_fallthru
      _
    // Predicated region
    $region18: #{tpu_custom_call.1} parent=1 // pred_check
      _
    $region19: #{tpu_custom_call.1} parent=1 // pred_check_branch
      %36 = sbr.rel (0) target = $region21
    $region20: #{tpu_custom_call.1} parent=1 // pred_region
      _
    $region21: #{tpu_custom_call.1} parent=1 // pred_fallthru
      _
    // Predicated region
    $region22: #{tpu_custom_call.1} parent=1 // pred_check
      _
    $region23: #{tpu_custom_call.1} parent=1 // pred_check_branch
      %38 = sbr.rel (0) target = $region25
    $region24: #{tpu_custom_call.1} parent=1 // pred_region
      _
    $region25: #{tpu_custom_call.1} parent=1 // pred_fallthru
      _
    // Predicated region
    $region26: #{tpu_custom_call.1} parent=1 // pred_check
      _
    $region27: #{tpu_custom_call.1} parent=1 // pred_check_branch
      %40 = sbr.rel (0) target = $region29
    $region28: #{tpu_custom_call.1} parent=1 // pred_region
      _
    $region29: #{tpu_custom_call.1} parent=1 // pred_fallthru
      _
    // Predicated region
    $region30: #{tpu_custom_call.1} parent=1 // pred_check
      _
    $region31: #{tpu_custom_call.1} parent=1 // pred_check_branch
      %42 = sbr.rel (0) target = $region33
    $region32: #{tpu_custom_call.1} parent=1 // pred_region
      _
    $region33: #{tpu_custom_call.1} parent=1 // pred_fallthru
      _
    // Predicated region
    $region34: #{tpu_custom_call.1} parent=1 // pred_check
      _
    $region35: #{tpu_custom_call.1} parent=1 // pred_check_branch
      %44 = sbr.rel (0) target = $region37
    $region36: #{tpu_custom_call.1} parent=1 // pred_region
      _
    $region37: #{tpu_custom_call.1} parent=1 // pred_fallthru
      _
    // Predicated region
    $region38: #{tpu_custom_call.1} parent=1 // pred_check
      _
    $region39: #{tpu_custom_call.1} parent=1 // pred_check_branch
      %46 = sbr.rel (0) target = $region41
    $region40: #{tpu_custom_call.1} parent=1 // pred_region
      _
    $region41: #{tpu_custom_call.1} parent=1 // pred_fallthru
      _
    // Predicated region
    $region42: #{tpu_custom_call.1} parent=1 // pred_check
      _
    $region43: #{tpu_custom_call.1} parent=1 // pred_check_branch
      %48 = sbr.rel (0) target = $region45
    $region44: #{tpu_custom_call.1} parent=1 // pred_region
      _
    $region45: #{tpu_custom_call.1} parent=1 // pred_fallthru
      _
    // Predicated region
    $region46: #{tpu_custom_call.1} parent=1 // pred_check
      _
    $region47: #{tpu_custom_call.1} parent=1 // pred_check_branch
      %50 = sbr.rel (0) target = $region49
    $region48: #{tpu_custom_call.1} parent=1 // pred_region
      _
    $region49: #{tpu_custom_call.1} parent=1 // pred_fallthru
      _
    // Predicated region
    $region50: #{tpu_custom_call.1} parent=1 // pred_check
      _
    $region51: #{tpu_custom_call.1} parent=1 // pred_check_branch
      %52 = sbr.rel (0) target = $region53
    $region52: #{tpu_custom_call.1} parent=1 // pred_region
      _
    $region53: #{tpu_custom_call.1} parent=1 // pred_fallthru
      _
    // Predicated region
    $region54: #{tpu_custom_call.1} parent=1 // pred_check
      _
    $region55: #{tpu_custom_call.1} parent=1 // pred_check_branch
      %54 = sbr.rel (0) target = $region57
    $region56: #{tpu_custom_call.1} parent=1 // pred_region
      _
    $region57: #{tpu_custom_call.1} parent=1 // pred_fallthru
      _
    // Predicated region
    $region58: #{tpu_custom_call.1} parent=1 // pred_check
      _
    $region59: #{tpu_custom_call.1} parent=1 // pred_check_branch
      %56 = sbr.rel (0) target = $region61
    $region60: #{tpu_custom_call.1} parent=1 // pred_region
      _
    $region61: #{tpu_custom_call.1} parent=1 // pred_fallthru
      _
    // Predicated region
    $region62: #{tpu_custom_call.1} parent=1 // pred_check
      _
    $region63: #{tpu_custom_call.1} parent=1 // pred_check_branch
      %58 = sbr.rel (0) target = $region65
    $region64: #{tpu_custom_call.1} parent=1 // pred_region
      _
    $region65: #{tpu_custom_call.1} parent=1 // pred_fallthru
      _
    // Predicated region
    $region66: #{tpu_custom_call.1} parent=1 // pred_check
      _
    $region67: #{tpu_custom_call.1} parent=1 // pred_check_branch
      %60 = sbr.rel (0) target = $region69
    $region68: #{tpu_custom_call.1} parent=1 // pred_region
      _
    $region69: #{tpu_custom_call.1} parent=1 // pred_fallthru
      _
    // Predicated region
    $region70: #{tpu_custom_call.1} parent=1 // pred_check
      _
    $region71: #{tpu_custom_call.1} parent=1 // pred_check_branch
      %62 = sbr.rel (0) target = $region73
    $region72: #{tpu_custom_call.1} parent=1 // pred_region
      _
    $region73: #{tpu_custom_call.1} parent=1 // pred_fallthru
      _
    %v64 = vld [vmem:[%s2] sm:$0xff]
    %v65 = vld [vmem:[%s2 + $0x8] sm:$0xff]
    %v66 = vld [vmem:[%s2 + $0x10] sm:$0xff]
    %v67 = vld [vmem:[%s2 + $0x18] sm:$0xff]
    %v68 = vld [vmem:[%s2 + $0x20] sm:$0xff]
    %v69 = vld [vmem:[%s2 + $0x28] sm:$0xff]
    %v70 = vld [vmem:[%s2 + $0x30] sm:$0xff]
    %v71 = vld [vmem:[%s2 + $0x38] sm:$0xff]
    %v72 = vld [vmem:[%s2 + $0x40] sm:$0xff]
    %v73 = vld [vmem:[%s2 + $0x48] sm:$0xff]
    %v74 = vld [vmem:[%s2 + $0x50] sm:$0xff]
    %v75 = vld [vmem:[%s2 + $0x58] sm:$0xff]
    %v76 = vld [vmem:[%s2 + $0x60] sm:$0xff]
    %v77 = vld [vmem:[%s2 + $0x68] sm:$0xff]
    %v78 = vld [vmem:[%s2 + $0x70] sm:$0xff]
    %v79 = vld [vmem:[%s2 + $0x78] sm:$0xff]
    %v80 = vld [vmem:[%s3] sm:$0xf]
    %v81 = vld [vmem:[%s3 + $0x4] sm:$0xf]
    %v82 = vld [vmem:[%s3 + $0x8] sm:$0xf]
    %v83 = vld [vmem:[%s3 + $0xc] sm:$0xf]
    %v84 = vld [vmem:[%s3 + $0x10] sm:$0xf]
    %v85 = vld [vmem:[%s3 + $0x14] sm:$0xf]
    %v86 = vld [vmem:[%s3 + $0x18] sm:$0xf]
    %v87 = vld [vmem:[%s3 + $0x1c] sm:$0xf]
    %v88 = vld [vmem:[%s3 + $0x20] sm:$0xf]
    %v89 = vld [vmem:[%s3 + $0x24] sm:$0xf]
    %v90 = vld [vmem:[%s3 + $0x28] sm:$0xf]
    %v91 = vld [vmem:[%s3 + $0x2c] sm:$0xf]
    %v92 = vld [vmem:[%s3 + $0x30] sm:$0xf]
    %v93 = vld [vmem:[%s3 + $0x34] sm:$0xf]
    %v94 = vld [vmem:[%s3 + $0x38] sm:$0xf]
    %v95 = vld [vmem:[%s3 + $0x3c] sm:$0xf]
    %v96 = vld [vmem:[%s4] sm:$0xff]
    %v97 = vld [vmem:[%s4 + $0x8] sm:$0xff]
    %v98 = vld [vmem:[%s4 + $0x10] sm:$0xff]
    %v99 = vld [vmem:[%s4 + $0x18] sm:$0xff]
    %v100 = vld [vmem:[%s4 + $0x20] sm:$0xff]
    %v101 = vld [vmem:[%s4 + $0x28] sm:$0xff]
    %v102 = vld [vmem:[%s4 + $0x30] sm:$0xff]
    %v103 = vld [vmem:[%s4 + $0x38] sm:$0xff]
    %v104 = vld [vmem:[%s4 + $0x40] sm:$0xff]
    %v105 = vld [vmem:[%s4 + $0x48] sm:$0xff]
    %v106 = vld [vmem:[%s4 + $0x50] sm:$0xff]
    %v107 = vld [vmem:[%s4 + $0x58] sm:$0xff]
    %v108 = vld [vmem:[%s4 + $0x60] sm:$0xff]
    %v109 = vld [vmem:[%s4 + $0x68] sm:$0xff]
    %v110 = vld [vmem:[%s4 + $0x70] sm:$0xff]
    %v111 = vld [vmem:[%s4 + $0x78] sm:$0xff]
    loop: start=0, step=1, limit=6
    $region74: #{tpu_custom_call.1} parent=1 // loop_pre_header
      _
    $region75: #{tpu_custom_call.1} parent=1 // loop_header
      %s113 = sphi 0, %s117
      %p114 = scmp.ge.s32.totalorder %s113, 6
      %v118 = vphi 0.0, %v1502
      %v119 = vphi 0.0, %v1503
      %v120 = vphi 0.0, %v1504
      %v121 = vphi 0.0, %v1505
      %v122 = vphi 0.0, %v1494
      %v123 = vphi 0.0, %v1495
      %v124 = vphi 0.0, %v1496
      %v125 = vphi 0.0, %v1497
    $region76: #{tpu_custom_call.1} parent=1 // loop_header_branch
      %116 = sbr.rel (%p114) target = $region80
    $region77: #{tpu_custom_call.1} parent=1 // loop_body
      %s126 = smul.u32 %s113, 8
      %s127 = scalar_lea.vmem %s0, %s126
      %v128 = vld [vmem:[%s127] sm:$0xff]
      %130 = vset.pattern.permute.xlu0 0
      %131 = vperm.xlu0 %130, %v64
      %v132 = vpop.permute.xlu0 %131
      %135 = vset.pattern.permute.xlu0 0
      %136 = vperm.xlu0 %135, %v65
      %v137 = vpop.permute.xlu0 %136
      %140 = vset.pattern.permute.xlu0 0
      %141 = vperm.xlu0 %140, %v66
      %v142 = vpop.permute.xlu0 %141
      %145 = vset.pattern.permute.xlu0 0
      %146 = vperm.xlu0 %145, %v67
      %v147 = vpop.permute.xlu0 %146
      %150 = vset.pattern.permute.xlu0 0
      %151 = vperm.xlu0 %150, %v68
      %v152 = vpop.permute.xlu0 %151
      %155 = vset.pattern.permute.xlu0 0
      %156 = vperm.xlu0 %155, %v69
      %v157 = vpop.permute.xlu0 %156
      %160 = vset.pattern.permute.xlu0 0
      %161 = vperm.xlu0 %160, %v70
      %v162 = vpop.permute.xlu0 %161
      %165 = vset.pattern.permute.xlu0 0
      %166 = vperm.xlu0 %165, %v71
      %v167 = vpop.permute.xlu0 %166
      %170 = vset.pattern.permute.xlu0 0
      %171 = vperm.xlu0 %170, %v72
      %v172 = vpop.permute.xlu0 %171
      %175 = vset.pattern.permute.xlu0 0
      %176 = vperm.xlu0 %175, %v73
      %v177 = vpop.permute.xlu0 %176
      %180 = vset.pattern.permute.xlu0 0
      %181 = vperm.xlu0 %180, %v74
      %v182 = vpop.permute.xlu0 %181
      %185 = vset.pattern.permute.xlu0 0
      %186 = vperm.xlu0 %185, %v75
      %v187 = vpop.permute.xlu0 %186
      %190 = vset.pattern.permute.xlu0 0
      %191 = vperm.xlu0 %190, %v76
      %v192 = vpop.permute.xlu0 %191
      %195 = vset.pattern.permute.xlu0 0
      %196 = vperm.xlu0 %195, %v77
      %v197 = vpop.permute.xlu0 %196
      %200 = vset.pattern.permute.xlu0 0
      %201 = vperm.xlu0 %200, %v78
      %v202 = vpop.permute.xlu0 %201
      %205 = vset.pattern.permute.xlu0 0
      %206 = vperm.xlu0 %205, %v79
      %v207 = vpop.permute.xlu0 %206
      %v209 = vperm.slane %v128, 0
      %v210 = vmul.f32 %v132, %v209
      %v211 = vmul.f32 %v137, %v209
      %v212 = vmul.f32 %v142, %v209
      %v213 = vmul.f32 %v147, %v209
      %v214 = vmul.f32 %v152, %v209
      %v215 = vmul.f32 %v157, %v209
      %v216 = vmul.f32 %v162, %v209
      %v217 = vmul.f32 %v167, %v209
      %v218 = vmul.f32 %v172, %v209
      %v219 = vmul.f32 %v177, %v209
      %v220 = vmul.f32 %v182, %v209
      %v221 = vmul.f32 %v187, %v209
      %v222 = vmul.f32 %v192, %v209
      %v223 = vmul.f32 %v197, %v209
      %v224 = vmul.f32 %v202, %v209
      %v225 = vmul.f32 %v207, %v209
      %227 = vset.pattern.permute.xlu0 0
      %228 = vperm.xlu0 %227, %v96
      %v229 = vpop.permute.xlu0 %228
      %232 = vset.pattern.permute.xlu0 0
      %233 = vperm.xlu0 %232, %v97
      %v234 = vpop.permute.xlu0 %233
      %237 = vset.pattern.permute.xlu0 0
      %238 = vperm.xlu0 %237, %v98
      %v239 = vpop.permute.xlu0 %238
      %242 = vset.pattern.permute.xlu0 0
      %243 = vperm.xlu0 %242, %v99
      %v244 = vpop.permute.xlu0 %243
      %247 = vset.pattern.permute.xlu0 0
      %248 = vperm.xlu0 %247, %v100
      %v249 = vpop.permute.xlu0 %248
      %252 = vset.pattern.permute.xlu0 0
      %253 = vperm.xlu0 %252, %v101
      %v254 = vpop.permute.xlu0 %253
      %257 = vset.pattern.permute.xlu0 0
      %258 = vperm.xlu0 %257, %v102
      %v259 = vpop.permute.xlu0 %258
      %262 = vset.pattern.permute.xlu0 0
      %263 = vperm.xlu0 %262, %v103
      %v264 = vpop.permute.xlu0 %263
      %267 = vset.pattern.permute.xlu0 0
      %268 = vperm.xlu0 %267, %v104
      %v269 = vpop.permute.xlu0 %268
      %272 = vset.pattern.permute.xlu0 0
      %273 = vperm.xlu0 %272, %v105
      %v274 = vpop.permute.xlu0 %273
      %277 = vset.pattern.permute.xlu0 0
      %278 = vperm.xlu0 %277, %v106
      %v279 = vpop.permute.xlu0 %278
      %282 = vset.pattern.permute.xlu0 0
      %283 = vperm.xlu0 %282, %v107
      %v284 = vpop.permute.xlu0 %283
      %287 = vset.pattern.permute.xlu0 0
      %288 = vperm.xlu0 %287, %v108
      %v289 = vpop.permute.xlu0 %288
      %292 = vset.pattern.permute.xlu0 0
      %293 = vperm.xlu0 %292, %v109
      %v294 = vpop.permute.xlu0 %293
      %297 = vset.pattern.permute.xlu0 0
      %298 = vperm.xlu0 %297, %v110
      %v299 = vpop.permute.xlu0 %298
      %302 = vset.pattern.permute.xlu0 0
      %303 = vperm.xlu0 %302, %v111
      %v304 = vpop.permute.xlu0 %303
      %v306 = vadd.f32 %v210, %v229
      %v307 = vadd.f32 %v211, %v234
      %v308 = vadd.f32 %v212, %v239
      %v309 = vadd.f32 %v213, %v244
      %v310 = vadd.f32 %v214, %v249
      %v311 = vadd.f32 %v215, %v254
      %v312 = vadd.f32 %v216, %v259
      %v313 = vadd.f32 %v217, %v264
      %v314 = vadd.f32 %v218, %v269
      %v315 = vadd.f32 %v219, %v274
      %v316 = vadd.f32 %v220, %v279
      %v317 = vadd.f32 %v221, %v284
      %v318 = vadd.f32 %v222, %v289
      %v319 = vadd.f32 %v223, %v294
      %v320 = vadd.f32 %v224, %v299
      %v321 = vadd.f32 %v225, %v304
      %v322 = vpack.c.bf16 %v119, %v118
      %v323 = vpack.c.bf16 %v121, %v120
      %v340 = vunpack.c.l.b16 %v80
      %v341 = vunpack.c.l.b16 %v81
      %v342 = vunpack.c.l.b16 %v82
      %v343 = vunpack.c.l.b16 %v83
      %v344 = vunpack.c.l.b16 %v84
      %v345 = vunpack.c.l.b16 %v85
      %v346 = vunpack.c.l.b16 %v86
      %v347 = vunpack.c.l.b16 %v87
      %v348 = vunpack.c.l.b16 %v88
      %v349 = vunpack.c.l.b16 %v89
      %v350 = vunpack.c.l.b16 %v90
      %v351 = vunpack.c.l.b16 %v91
      %v352 = vunpack.c.l.b16 %v92
      %v353 = vunpack.c.l.b16 %v93
      %v354 = vunpack.c.l.b16 %v94
      %v355 = vunpack.c.l.b16 %v95
      %v356 = vpack.c.b16 %v341, %v340
      %v357 = vpack.c.b16 %v343, %v342
      %v358 = vpack.c.b16 %v345, %v344
      %v359 = vpack.c.b16 %v347, %v346
      %v360 = vpack.c.b16 %v349, %v348
      %v361 = vpack.c.b16 %v351, %v350
      %v362 = vpack.c.b16 %v353, %v352
      %v363 = vpack.c.b16 %v355, %v354
      %vm364 = vcmask 261120
      %v366 = vsel %vm364, %v356, 0
      %v369 = vsel %vm364, %v357, 0
      %v372 = vsel %vm364, %v358, 0
      %v375 = vsel %vm364, %v359, 0
      %v378 = vsel %vm364, %v360, 0
      %v381 = vsel %vm364, %v361, 0
      %v384 = vsel %vm364, %v362, 0
      %v387 = vsel %vm364, %v363, 0
      %389 = vmatpush.bf16.msra.mxu0 0
      %390 = vmatpush.bf16.msra.mxu0 0
      %391 = vmatpush.bf16.msra.mxu0 0
      %392 = vmatpush.bf16.msra.mxu0 0
      %393 = vmatpush.bf16.msra.mxu0 0
      %394 = vmatpush.bf16.msra.mxu0 0
      %395 = vmatpush.bf16.msra.mxu0 %v323
      %396 = vmatpush.bf16.msra.mxu0 %v322
      %397 = vmatmul.bf16.gmra.mxu0 %v366
      %v398 = vpop.f32.mrf.mxu0
      %v399 = vadd.f32 %v306, %v398
      %v400 = vpop.f32.mrf.mxu0
      %v401 = vadd.f32 %v307, %v400
      %402 = vmatmul.bf16.gmra.mxu0 %v369
      %v403 = vpop.f32.mrf.mxu0
      %v404 = vadd.f32 %v308, %v403
      %v405 = vpop.f32.mrf.mxu0
      %v406 = vadd.f32 %v309, %v405
      %407 = vmatmul.bf16.gmra.mxu0 %v372
      %v408 = vpop.f32.mrf.mxu0
      %v409 = vadd.f32 %v310, %v408
      %v410 = vpop.f32.mrf.mxu0
      %v411 = vadd.f32 %v311, %v410
      %412 = vmatmul.bf16.gmra.mxu0 %v375
      %v413 = vpop.f32.mrf.mxu0
      %v414 = vadd.f32 %v312, %v413
      %v415 = vpop.f32.mrf.mxu0
      %v416 = vadd.f32 %v313, %v415
      %417 = vmatmul.bf16.gmra.mxu0 %v378
      %v418 = vpop.f32.mrf.mxu0
      %v419 = vadd.f32 %v314, %v418
      %v420 = vpop.f32.mrf.mxu0
      %v421 = vadd.f32 %v315, %v420
      %422 = vmatmul.bf16.gmra.mxu0 %v381
      %v423 = vpop.f32.mrf.mxu0
      %v424 = vadd.f32 %v316, %v423
      %v425 = vpop.f32.mrf.mxu0
      %v426 = vadd.f32 %v317, %v425
      %427 = vmatmul.bf16.gmra.mxu0 %v384
      %v428 = vpop.f32.mrf.mxu0
      %v429 = vadd.f32 %v318, %v428
      %v430 = vpop.f32.mrf.mxu0
      %v431 = vadd.f32 %v319, %v430
      %432 = vmatmul.bf16.gmra.mxu0 %v387
      %v433 = vpop.f32.mrf.mxu0
      %v434 = vadd.f32 %v320, %v433
      %v435 = vpop.f32.mrf.mxu0
      %v436 = vadd.f32 %v321, %v435
      %437 = vdwg.mxu0
      %v438 = vtanh.pop %v399
      %v439 = vtanh.pop %v401
      %v440 = vtanh.pop %v404
      %v441 = vtanh.pop %v406
      %v442 = vtanh.pop %v409
      %v443 = vtanh.pop %v411
      %v444 = vtanh.pop %v414
      %v445 = vtanh.pop %v416
      %v446 = vtanh.pop %v419
      %v447 = vtanh.pop %v421
      %v448 = vtanh.pop %v424
      %v449 = vtanh.pop %v426
      %v450 = vtanh.pop %v429
      %v451 = vtanh.pop %v431
      %v452 = vtanh.pop %v434
      %v453 = vtanh.pop %v436
      %v454 = vmul.f32 %v438, 0.5
      %v455 = vmul.f32 %v439, 0.5
      %v456 = vmul.f32 %v440, 0.5
      %v457 = vmul.f32 %v441, 0.5
      %v458 = vadd.f32 %v454, 0.5
      %v459 = vadd.f32 %v455, 0.5
      %v460 = vadd.f32 %v456, 0.5
      %v461 = vadd.f32 %v457, 0.5
      %v462 = vmul.f32 %v442, 0.5
      %v463 = vmul.f32 %v443, 0.5
      %v464 = vmul.f32 %v444, 0.5
      %v465 = vmul.f32 %v445, 0.5
      %v466 = vadd.f32 %v462, 0.5
      %v467 = vadd.f32 %v463, 0.5
      %v468 = vadd.f32 %v464, 0.5
      %v469 = vadd.f32 %v465, 0.5
      %v470 = vmul.f32 %v450, 0.5
      %v471 = vmul.f32 %v451, 0.5
      %v472 = vmul.f32 %v452, 0.5
      %v473 = vmul.f32 %v453, 0.5
      %v474 = vadd.f32 %v470, 0.5
      %v475 = vadd.f32 %v471, 0.5
      %v476 = vadd.f32 %v472, 0.5
      %v477 = vadd.f32 %v473, 0.5
      %v478 = vmul.f32 %v466, %v122
      %v479 = vmul.f32 %v467, %v123
      %v480 = vmul.f32 %v468, %v124
      %v481 = vmul.f32 %v469, %v125
      %v482 = vmul.f32 %v458, %v446
      %v483 = vmul.f32 %v459, %v447
      %v484 = vmul.f32 %v460, %v448
      %v485 = vmul.f32 %v461, %v449
      %v486 = vadd.f32 %v478, %v482
      %v487 = vadd.f32 %v479, %v483
      %v488 = vadd.f32 %v480, %v484
      %v489 = vadd.f32 %v481, %v485
      %v490 = vtanh.pop %v486
      %v491 = vtanh.pop %v487
      %v492 = vtanh.pop %v488
      %v493 = vtanh.pop %v489
      %v494 = vmul.f32 %v474, %v490
      %v495 = vmul.f32 %v475, %v491
      %v496 = vmul.f32 %v476, %v492
      %v497 = vmul.f32 %v477, %v493
      %v498 = vperm.slane %v128, 1
      %v499 = vmul.f32 %v132, %v498
      %v500 = vmul.f32 %v137, %v498
      %v501 = vmul.f32 %v142, %v498
      %v502 = vmul.f32 %v147, %v498
      %v503 = vmul.f32 %v152, %v498
      %v504 = vmul.f32 %v157, %v498
      %v505 = vmul.f32 %v162, %v498
      %v506 = vmul.f32 %v167, %v498
      %v507 = vmul.f32 %v172, %v498
      %v508 = vmul.f32 %v177, %v498
      %v509 = vmul.f32 %v182, %v498
      %v510 = vmul.f32 %v187, %v498
      %v511 = vmul.f32 %v192, %v498
      %v512 = vmul.f32 %v197, %v498
      %v513 = vmul.f32 %v202, %v498
      %v514 = vmul.f32 %v207, %v498
      %v515 = vadd.f32 %v499, %v229
      %v516 = vadd.f32 %v500, %v234
      %v517 = vadd.f32 %v501, %v239
      %v518 = vadd.f32 %v502, %v244
      %v519 = vadd.f32 %v503, %v249
      %v520 = vadd.f32 %v504, %v254
      %v521 = vadd.f32 %v505, %v259
      %v522 = vadd.f32 %v506, %v264
      %v523 = vadd.f32 %v507, %v269
      %v524 = vadd.f32 %v508, %v274
      %v525 = vadd.f32 %v509, %v279
      %v526 = vadd.f32 %v510, %v284
      %v527 = vadd.f32 %v511, %v289
      %v528 = vadd.f32 %v512, %v294
      %v529 = vadd.f32 %v513, %v299
      %v530 = vadd.f32 %v514, %v304
      %v531 = vpack.c.bf16 %v495, %v494
      %v532 = vpack.c.bf16 %v497, %v496
      %533 = vmatpush.bf16.msra.mxu0 0
      %534 = vmatpush.bf16.msra.mxu0 0
      %535 = vmatpush.bf16.msra.mxu0 0
      %536 = vmatpush.bf16.msra.mxu0 0
      %537 = vmatpush.bf16.msra.mxu0 0
      %538 = vmatpush.bf16.msra.mxu0 0
      %539 = vmatpush.bf16.msra.mxu0 %v532
      %540 = vmatpush.bf16.msra.mxu0 %v531
      %541 = vmatmul.bf16.gmra.mxu0 %v366
      %v542 = vpop.f32.mrf.mxu0
      %v543 = vadd.f32 %v515, %v542
      %v544 = vpop.f32.mrf.mxu0
      %v545 = vadd.f32 %v516, %v544
      %546 = vmatmul.bf16.gmra.mxu0 %v369
      %v547 = vpop.f32.mrf.mxu0
      %v548 = vadd.f32 %v517, %v547
      %v549 = vpop.f32.mrf.mxu0
      %v550 = vadd.f32 %v518, %v549
      %551 = vmatmul.bf16.gmra.mxu0 %v372
      %v552 = vpop.f32.mrf.mxu0
      %v553 = vadd.f32 %v519, %v552
      %v554 = vpop.f32.mrf.mxu0
      %v555 = vadd.f32 %v520, %v554
      %556 = vmatmul.bf16.gmra.mxu0 %v375
      %v557 = vpop.f32.mrf.mxu0
      %v558 = vadd.f32 %v521, %v557
      %v559 = vpop.f32.mrf.mxu0
      %v560 = vadd.f32 %v522, %v559
      %561 = vmatmul.bf16.gmra.mxu0 %v378
      %v562 = vpop.f32.mrf.mxu0
      %v563 = vadd.f32 %v523, %v562
      %v564 = vpop.f32.mrf.mxu0
      %v565 = vadd.f32 %v524, %v564
      %566 = vmatmul.bf16.gmra.mxu0 %v381
      %v567 = vpop.f32.mrf.mxu0
      %v568 = vadd.f32 %v525, %v567
      %v569 = vpop.f32.mrf.mxu0
      %v570 = vadd.f32 %v526, %v569
      %571 = vmatmul.bf16.gmra.mxu0 %v384
      %v572 = vpop.f32.mrf.mxu0
      %v573 = vadd.f32 %v527, %v572
      %v574 = vpop.f32.mrf.mxu0
      %v575 = vadd.f32 %v528, %v574
      %576 = vmatmul.bf16.gmra.mxu0 %v387
      %v577 = vpop.f32.mrf.mxu0
      %v578 = vadd.f32 %v529, %v577
      %v579 = vpop.f32.mrf.mxu0
      %v580 = vadd.f32 %v530, %v579
      %581 = vdwg.mxu0
      %v582 = vtanh.pop %v543
      %v583 = vtanh.pop %v545
      %v584 = vtanh.pop %v548
      %v585 = vtanh.pop %v550
      %v586 = vtanh.pop %v553
      %v587 = vtanh.pop %v555
      %v588 = vtanh.pop %v558
      %v589 = vtanh.pop %v560
      %v590 = vtanh.pop %v563
      %v591 = vtanh.pop %v565
      %v592 = vtanh.pop %v568
      %v593 = vtanh.pop %v570
      %v594 = vtanh.pop %v573
      %v595 = vtanh.pop %v575
      %v596 = vtanh.pop %v578
      %v597 = vtanh.pop %v580
      %v598 = vmul.f32 %v582, 0.5
      %v599 = vmul.f32 %v583, 0.5
      %v600 = vmul.f32 %v584, 0.5
      %v601 = vmul.f32 %v585, 0.5
      %v602 = vadd.f32 %v598, 0.5
      %v603 = vadd.f32 %v599, 0.5
      %v604 = vadd.f32 %v600, 0.5
      %v605 = vadd.f32 %v601, 0.5
      %v606 = vmul.f32 %v586, 0.5
      %v607 = vmul.f32 %v587, 0.5
      %v608 = vmul.f32 %v588, 0.5
      %v609 = vmul.f32 %v589, 0.5
      %v610 = vadd.f32 %v606, 0.5
      %v611 = vadd.f32 %v607, 0.5
      %v612 = vadd.f32 %v608, 0.5
      %v613 = vadd.f32 %v609, 0.5
      %v614 = vmul.f32 %v594, 0.5
      %v615 = vmul.f32 %v595, 0.5
      %v616 = vmul.f32 %v596, 0.5
      %v617 = vmul.f32 %v597, 0.5
      %v618 = vadd.f32 %v614, 0.5
      %v619 = vadd.f32 %v615, 0.5
      %v620 = vadd.f32 %v616, 0.5
      %v621 = vadd.f32 %v617, 0.5
      %v622 = vmul.f32 %v610, %v486
      %v623 = vmul.f32 %v611, %v487
      %v624 = vmul.f32 %v612, %v488
      %v625 = vmul.f32 %v613, %v489
      %v626 = vmul.f32 %v602, %v590
      %v627 = vmul.f32 %v603, %v591
      %v628 = vmul.f32 %v604, %v592
      %v629 = vmul.f32 %v605, %v593
      %v630 = vadd.f32 %v622, %v626
      %v631 = vadd.f32 %v623, %v627
      %v632 = vadd.f32 %v624, %v628
      %v633 = vadd.f32 %v625, %v629
      %v634 = vtanh.pop %v630
      %v635 = vtanh.pop %v631
      %v636 = vtanh.pop %v632
      %v637 = vtanh.pop %v633
      %v638 = vmul.f32 %v618, %v634
      %v639 = vmul.f32 %v619, %v635
      %v640 = vmul.f32 %v620, %v636
      %v641 = vmul.f32 %v621, %v637
      %v642 = vperm.slane %v128, 2
      %v643 = vmul.f32 %v132, %v642
      %v644 = vmul.f32 %v137, %v642
      %v645 = vmul.f32 %v142, %v642
      %v646 = vmul.f32 %v147, %v642
      %v647 = vmul.f32 %v152, %v642
      %v648 = vmul.f32 %v157, %v642
      %v649 = vmul.f32 %v162, %v642
      %v650 = vmul.f32 %v167, %v642
      %v651 = vmul.f32 %v172, %v642
      %v652 = vmul.f32 %v177, %v642
      %v653 = vmul.f32 %v182, %v642
      %v654 = vmul.f32 %v187, %v642
      %v655 = vmul.f32 %v192, %v642
      %v656 = vmul.f32 %v197, %v642
      %v657 = vmul.f32 %v202, %v642
      %v658 = vmul.f32 %v207, %v642
      %v659 = vadd.f32 %v643, %v229
      %v660 = vadd.f32 %v644, %v234
      %v661 = vadd.f32 %v645, %v239
      %v662 = vadd.f32 %v646, %v244
      %v663 = vadd.f32 %v647, %v249
      %v664 = vadd.f32 %v648, %v254
      %v665 = vadd.f32 %v649, %v259
      %v666 = vadd.f32 %v650, %v264
      %v667 = vadd.f32 %v651, %v269
      %v668 = vadd.f32 %v652, %v274
      %v669 = vadd.f32 %v653, %v279
      %v670 = vadd.f32 %v654, %v284
      %v671 = vadd.f32 %v655, %v289
      %v672 = vadd.f32 %v656, %v294
      %v673 = vadd.f32 %v657, %v299
      %v674 = vadd.f32 %v658, %v304
      %v675 = vpack.c.bf16 %v639, %v638
      %v676 = vpack.c.bf16 %v641, %v640
      %677 = vmatpush.bf16.msra.mxu0 0
      %678 = vmatpush.bf16.msra.mxu0 0
      %679 = vmatpush.bf16.msra.mxu0 0
      %680 = vmatpush.bf16.msra.mxu0 0
      %681 = vmatpush.bf16.msra.mxu0 0
      %682 = vmatpush.bf16.msra.mxu0 0
      %683 = vmatpush.bf16.msra.mxu0 %v676
      %684 = vmatpush.bf16.msra.mxu0 %v675
      %685 = vmatmul.bf16.gmra.mxu0 %v366
      %v686 = vpop.f32.mrf.mxu0
      %v687 = vadd.f32 %v659, %v686
      %v688 = vpop.f32.mrf.mxu0
      %v689 = vadd.f32 %v660, %v688
      %690 = vmatmul.bf16.gmra.mxu0 %v369
      %v691 = vpop.f32.mrf.mxu0
      %v692 = vadd.f32 %v661, %v691
      %v693 = vpop.f32.mrf.mxu0
      %v694 = vadd.f32 %v662, %v693
      %695 = vmatmul.bf16.gmra.mxu0 %v372
      %v696 = vpop.f32.mrf.mxu0
      %v697 = vadd.f32 %v663, %v696
      %v698 = vpop.f32.mrf.mxu0
      %v699 = vadd.f32 %v664, %v698
      %700 = vmatmul.bf16.gmra.mxu0 %v375
      %v701 = vpop.f32.mrf.mxu0
      %v702 = vadd.f32 %v665, %v701
      %v703 = vpop.f32.mrf.mxu0
      %v704 = vadd.f32 %v666, %v703
      %705 = vmatmul.bf16.gmra.mxu0 %v378
      %v706 = vpop.f32.mrf.mxu0
      %v707 = vadd.f32 %v667, %v706
      %v708 = vpop.f32.mrf.mxu0
      %v709 = vadd.f32 %v668, %v708
      %710 = vmatmul.bf16.gmra.mxu0 %v381
      %v711 = vpop.f32.mrf.mxu0
      %v712 = vadd.f32 %v669, %v711
      %v713 = vpop.f32.mrf.mxu0
      %v714 = vadd.f32 %v670, %v713
      %715 = vmatmul.bf16.gmra.mxu0 %v384
      %v716 = vpop.f32.mrf.mxu0
      %v717 = vadd.f32 %v671, %v716
      %v718 = vpop.f32.mrf.mxu0
      %v719 = vadd.f32 %v672, %v718
      %720 = vmatmul.bf16.gmra.mxu0 %v387
      %v721 = vpop.f32.mrf.mxu0
      %v722 = vadd.f32 %v673, %v721
      %v723 = vpop.f32.mrf.mxu0
      %v724 = vadd.f32 %v674, %v723
      %725 = vdwg.mxu0
      %v726 = vtanh.pop %v687
      %v727 = vtanh.pop %v689
      %v728 = vtanh.pop %v692
      %v729 = vtanh.pop %v694
      %v730 = vtanh.pop %v697
      %v731 = vtanh.pop %v699
      %v732 = vtanh.pop %v702
      %v733 = vtanh.pop %v704
      %v734 = vtanh.pop %v707
      %v735 = vtanh.pop %v709
      %v736 = vtanh.pop %v712
      %v737 = vtanh.pop %v714
      %v738 = vtanh.pop %v717
      %v739 = vtanh.pop %v719
      %v740 = vtanh.pop %v722
      %v741 = vtanh.pop %v724
      %v742 = vmul.f32 %v726, 0.5
      %v743 = vmul.f32 %v727, 0.5
      %v744 = vmul.f32 %v728, 0.5
      %v745 = vmul.f32 %v729, 0.5
      %v746 = vadd.f32 %v742, 0.5
      %v747 = vadd.f32 %v743, 0.5
      %v748 = vadd.f32 %v744, 0.5
      %v749 = vadd.f32 %v745, 0.5
      %v750 = vmul.f32 %v730, 0.5
      %v751 = vmul.f32 %v731, 0.5
      %v752 = vmul.f32 %v732, 0.5
      %v753 = vmul.f32 %v733, 0.5
      %v754 = vadd.f32 %v750, 0.5
      %v755 = vadd.f32 %v751, 0.5
      %v756 = vadd.f32 %v752, 0.5
      %v757 = vadd.f32 %v753, 0.5
      %v758 = vmul.f32 %v738, 0.5
      %v759 = vmul.f32 %v739, 0.5
      %v760 = vmul.f32 %v740, 0.5
      %v761 = vmul.f32 %v741, 0.5
      %v762 = vadd.f32 %v758, 0.5
      %v763 = vadd.f32 %v759, 0.5
      %v764 = vadd.f32 %v760, 0.5
      %v765 = vadd.f32 %v761, 0.5
      %v766 = vmul.f32 %v754, %v630
      %v767 = vmul.f32 %v755, %v631
      %v768 = vmul.f32 %v756, %v632
      %v769 = vmul.f32 %v757, %v633
      %v770 = vmul.f32 %v746, %v734
      %v771 = vmul.f32 %v747, %v735
      %v772 = vmul.f32 %v748, %v736
      %v773 = vmul.f32 %v749, %v737
      %v774 = vadd.f32 %v766, %v770
      %v775 = vadd.f32 %v767, %v771
      %v776 = vadd.f32 %v768, %v772
      %v777 = vadd.f32 %v769, %v773
      %v778 = vtanh.pop %v774
      %v779 = vtanh.pop %v775
      %v780 = vtanh.pop %v776
      %v781 = vtanh.pop %v777
      %v782 = vmul.f32 %v762, %v778
      %v783 = vmul.f32 %v763, %v779
      %v784 = vmul.f32 %v764, %v780
      %v785 = vmul.f32 %v765, %v781
      %v786 = vperm.slane %v128, 3
      %v787 = vmul.f32 %v132, %v786
      %v788 = vmul.f32 %v137, %v786
      %v789 = vmul.f32 %v142, %v786
      %v790 = vmul.f32 %v147, %v786
      %v791 = vmul.f32 %v152, %v786
      %v792 = vmul.f32 %v157, %v786
      %v793 = vmul.f32 %v162, %v786
      %v794 = vmul.f32 %v167, %v786
      %v795 = vmul.f32 %v172, %v786
      %v796 = vmul.f32 %v177, %v786
      %v797 = vmul.f32 %v182, %v786
      %v798 = vmul.f32 %v187, %v786
      %v799 = vmul.f32 %v192, %v786
      %v800 = vmul.f32 %v197, %v786
      %v801 = vmul.f32 %v202, %v786
      %v802 = vmul.f32 %v207, %v786
      %v803 = vadd.f32 %v787, %v229
      %v804 = vadd.f32 %v788, %v234
      %v805 = vadd.f32 %v789, %v239
      %v806 = vadd.f32 %v790, %v244
      %v807 = vadd.f32 %v791, %v249
      %v808 = vadd.f32 %v792, %v254
      %v809 = vadd.f32 %v793, %v259
      %v810 = vadd.f32 %v794, %v264
      %v811 = vadd.f32 %v795, %v269
      %v812 = vadd.f32 %v796, %v274
      %v813 = vadd.f32 %v797, %v279
      %v814 = vadd.f32 %v798, %v284
      %v815 = vadd.f32 %v799, %v289
      %v816 = vadd.f32 %v800, %v294
      %v817 = vadd.f32 %v801, %v299
      %v818 = vadd.f32 %v802, %v304
      %v819 = vpack.c.bf16 %v783, %v782
      %v820 = vpack.c.bf16 %v785, %v784
      %821 = vmatpush.bf16.msra.mxu0 0
      %822 = vmatpush.bf16.msra.mxu0 0
      %823 = vmatpush.bf16.msra.mxu0 0
      %824 = vmatpush.bf16.msra.mxu0 0
      %825 = vmatpush.bf16.msra.mxu0 0
      %826 = vmatpush.bf16.msra.mxu0 0
      %827 = vmatpush.bf16.msra.mxu0 %v820
      %828 = vmatpush.bf16.msra.mxu0 %v819
      %829 = vmatmul.bf16.gmra.mxu0 %v366
      %v830 = vpop.f32.mrf.mxu0
      %v831 = vadd.f32 %v803, %v830
      %v832 = vpop.f32.mrf.mxu0
      %v833 = vadd.f32 %v804, %v832
      %834 = vmatmul.bf16.gmra.mxu0 %v369
      %v835 = vpop.f32.mrf.mxu0
      %v836 = vadd.f32 %v805, %v835
      %v837 = vpop.f32.mrf.mxu0
      %v838 = vadd.f32 %v806, %v837
      %839 = vmatmul.bf16.gmra.mxu0 %v372
      %v840 = vpop.f32.mrf.mxu0
      %v841 = vadd.f32 %v807, %v840
      %v842 = vpop.f32.mrf.mxu0
      %v843 = vadd.f32 %v808, %v842
      %844 = vmatmul.bf16.gmra.mxu0 %v375
      %v845 = vpop.f32.mrf.mxu0
      %v846 = vadd.f32 %v809, %v845
      %v847 = vpop.f32.mrf.mxu0
      %v848 = vadd.f32 %v810, %v847
      %849 = vmatmul.bf16.gmra.mxu0 %v378
      %v850 = vpop.f32.mrf.mxu0
      %v851 = vadd.f32 %v811, %v850
      %v852 = vpop.f32.mrf.mxu0
      %v853 = vadd.f32 %v812, %v852
      %854 = vmatmul.bf16.gmra.mxu0 %v381
      %v855 = vpop.f32.mrf.mxu0
      %v856 = vadd.f32 %v813, %v855
      %v857 = vpop.f32.mrf.mxu0
      %v858 = vadd.f32 %v814, %v857
      %859 = vmatmul.bf16.gmra.mxu0 %v384
      %v860 = vpop.f32.mrf.mxu0
      %v861 = vadd.f32 %v815, %v860
      %v862 = vpop.f32.mrf.mxu0
      %v863 = vadd.f32 %v816, %v862
      %864 = vmatmul.bf16.gmra.mxu0 %v387
      %v865 = vpop.f32.mrf.mxu0
      %v866 = vadd.f32 %v817, %v865
      %v867 = vpop.f32.mrf.mxu0
      %v868 = vadd.f32 %v818, %v867
      %869 = vdwg.mxu0
      %v870 = vtanh.pop %v831
      %v871 = vtanh.pop %v833
      %v872 = vtanh.pop %v836
      %v873 = vtanh.pop %v838
      %v874 = vtanh.pop %v841
      %v875 = vtanh.pop %v843
      %v876 = vtanh.pop %v846
      %v877 = vtanh.pop %v848
      %v878 = vtanh.pop %v851
      %v879 = vtanh.pop %v853
      %v880 = vtanh.pop %v856
      %v881 = vtanh.pop %v858
      %v882 = vtanh.pop %v861
      %v883 = vtanh.pop %v863
      %v884 = vtanh.pop %v866
      %v885 = vtanh.pop %v868
      %v886 = vmul.f32 %v870, 0.5
      %v887 = vmul.f32 %v871, 0.5
      %v888 = vmul.f32 %v872, 0.5
      %v889 = vmul.f32 %v873, 0.5
      %v890 = vadd.f32 %v886, 0.5
      %v891 = vadd.f32 %v887, 0.5
      %v892 = vadd.f32 %v888, 0.5
      %v893 = vadd.f32 %v889, 0.5
      %v894 = vmul.f32 %v874, 0.5
      %v895 = vmul.f32 %v875, 0.5
      %v896 = vmul.f32 %v876, 0.5
      %v897 = vmul.f32 %v877, 0.5
      %v898 = vadd.f32 %v894, 0.5
      %v899 = vadd.f32 %v895, 0.5
      %v900 = vadd.f32 %v896, 0.5
      %v901 = vadd.f32 %v897, 0.5
      %v902 = vmul.f32 %v882, 0.5
      %v903 = vmul.f32 %v883, 0.5
      %v904 = vmul.f32 %v884, 0.5
      %v905 = vmul.f32 %v885, 0.5
      %v906 = vadd.f32 %v902, 0.5
      %v907 = vadd.f32 %v903, 0.5
      %v908 = vadd.f32 %v904, 0.5
      %v909 = vadd.f32 %v905, 0.5
      %v910 = vmul.f32 %v898, %v774
      %v911 = vmul.f32 %v899, %v775
      %v912 = vmul.f32 %v900, %v776
      %v913 = vmul.f32 %v901, %v777
      %v914 = vmul.f32 %v890, %v878
      %v915 = vmul.f32 %v891, %v879
      %v916 = vmul.f32 %v892, %v880
      %v917 = vmul.f32 %v893, %v881
      %v918 = vadd.f32 %v910, %v914
      %v919 = vadd.f32 %v911, %v915
      %v920 = vadd.f32 %v912, %v916
      %v921 = vadd.f32 %v913, %v917
      %v922 = vtanh.pop %v918
      %v923 = vtanh.pop %v919
      %v924 = vtanh.pop %v920
      %v925 = vtanh.pop %v921
      %v926 = vmul.f32 %v906, %v922
      %v927 = vmul.f32 %v907, %v923
      %v928 = vmul.f32 %v908, %v924
      %v929 = vmul.f32 %v909, %v925
      %v930 = vperm.slane %v128, 4
      %v931 = vmul.f32 %v132, %v930
      %v932 = vmul.f32 %v137, %v930
      %v933 = vmul.f32 %v142, %v930
      %v934 = vmul.f32 %v147, %v930
      %v935 = vmul.f32 %v152, %v930
      %v936 = vmul.f32 %v157, %v930
      %v937 = vmul.f32 %v162, %v930
      %v938 = vmul.f32 %v167, %v930
      %v939 = vmul.f32 %v172, %v930
      %v940 = vmul.f32 %v177, %v930
      %v941 = vmul.f32 %v182, %v930
      %v942 = vmul.f32 %v187, %v930
      %v943 = vmul.f32 %v192, %v930
      %v944 = vmul.f32 %v197, %v930
      %v945 = vmul.f32 %v202, %v930
      %v946 = vmul.f32 %v207, %v930
      %v947 = vadd.f32 %v931, %v229
      %v948 = vadd.f32 %v932, %v234
      %v949 = vadd.f32 %v933, %v239
      %v950 = vadd.f32 %v934, %v244
      %v951 = vadd.f32 %v935, %v249
      %v952 = vadd.f32 %v936, %v254
      %v953 = vadd.f32 %v937, %v259
      %v954 = vadd.f32 %v938, %v264
      %v955 = vadd.f32 %v939, %v269
      %v956 = vadd.f32 %v940, %v274
      %v957 = vadd.f32 %v941, %v279
      %v958 = vadd.f32 %v942, %v284
      %v959 = vadd.f32 %v943, %v289
      %v960 = vadd.f32 %v944, %v294
      %v961 = vadd.f32 %v945, %v299
      %v962 = vadd.f32 %v946, %v304
      %v963 = vpack.c.bf16 %v927, %v926
      %v964 = vpack.c.bf16 %v929, %v928
      %965 = vmatpush.bf16.msra.mxu0 0
      %966 = vmatpush.bf16.msra.mxu0 0
      %967 = vmatpush.bf16.msra.mxu0 0
      %968 = vmatpush.bf16.msra.mxu0 0
      %969 = vmatpush.bf16.msra.mxu0 0
      %970 = vmatpush.bf16.msra.mxu0 0
      %971 = vmatpush.bf16.msra.mxu0 %v964
      %972 = vmatpush.bf16.msra.mxu0 %v963
      %973 = vmatmul.bf16.gmra.mxu0 %v366
      %v974 = vpop.f32.mrf.mxu0
      %v975 = vadd.f32 %v947, %v974
      %v976 = vpop.f32.mrf.mxu0
      %v977 = vadd.f32 %v948, %v976
      %978 = vmatmul.bf16.gmra.mxu0 %v369
      %v979 = vpop.f32.mrf.mxu0
      %v980 = vadd.f32 %v949, %v979
      %v981 = vpop.f32.mrf.mxu0
      %v982 = vadd.f32 %v950, %v981
      %983 = vmatmul.bf16.gmra.mxu0 %v372
      %v984 = vpop.f32.mrf.mxu0
      %v985 = vadd.f32 %v951, %v984
      %v986 = vpop.f32.mrf.mxu0
      %v987 = vadd.f32 %v952, %v986
      %988 = vmatmul.bf16.gmra.mxu0 %v375
      %v989 = vpop.f32.mrf.mxu0
      %v990 = vadd.f32 %v953, %v989
      %v991 = vpop.f32.mrf.mxu0
      %v992 = vadd.f32 %v954, %v991
      %993 = vmatmul.bf16.gmra.mxu0 %v378
      %v994 = vpop.f32.mrf.mxu0
      %v995 = vadd.f32 %v955, %v994
      %v996 = vpop.f32.mrf.mxu0
      %v997 = vadd.f32 %v956, %v996
      %998 = vmatmul.bf16.gmra.mxu0 %v381
      %v999 = vpop.f32.mrf.mxu0
      %v1000 = vadd.f32 %v957, %v999
      %v1001 = vpop.f32.mrf.mxu0
      %v1002 = vadd.f32 %v958, %v1001
      %1003 = vmatmul.bf16.gmra.mxu0 %v384
      %v1004 = vpop.f32.mrf.mxu0
      %v1005 = vadd.f32 %v959, %v1004
      %v1006 = vpop.f32.mrf.mxu0
      %v1007 = vadd.f32 %v960, %v1006
      %1008 = vmatmul.bf16.gmra.mxu0 %v387
      %v1009 = vpop.f32.mrf.mxu0
      %v1010 = vadd.f32 %v961, %v1009
      %v1011 = vpop.f32.mrf.mxu0
      %v1012 = vadd.f32 %v962, %v1011
      %1013 = vdwg.mxu0
      %v1014 = vtanh.pop %v975
      %v1015 = vtanh.pop %v977
      %v1016 = vtanh.pop %v980
      %v1017 = vtanh.pop %v982
      %v1018 = vtanh.pop %v985
      %v1019 = vtanh.pop %v987
      %v1020 = vtanh.pop %v990
      %v1021 = vtanh.pop %v992
      %v1022 = vtanh.pop %v995
      %v1023 = vtanh.pop %v997
      %v1024 = vtanh.pop %v1000
      %v1025 = vtanh.pop %v1002
      %v1026 = vtanh.pop %v1005
      %v1027 = vtanh.pop %v1007
      %v1028 = vtanh.pop %v1010
      %v1029 = vtanh.pop %v1012
      %v1030 = vmul.f32 %v1014, 0.5
      %v1031 = vmul.f32 %v1015, 0.5
      %v1032 = vmul.f32 %v1016, 0.5
      %v1033 = vmul.f32 %v1017, 0.5
      %v1034 = vadd.f32 %v1030, 0.5
      %v1035 = vadd.f32 %v1031, 0.5
      %v1036 = vadd.f32 %v1032, 0.5
      %v1037 = vadd.f32 %v1033, 0.5
      %v1038 = vmul.f32 %v1018, 0.5
      %v1039 = vmul.f32 %v1019, 0.5
      %v1040 = vmul.f32 %v1020, 0.5
      %v1041 = vmul.f32 %v1021, 0.5
      %v1042 = vadd.f32 %v1038, 0.5
      %v1043 = vadd.f32 %v1039, 0.5
      %v1044 = vadd.f32 %v1040, 0.5
      %v1045 = vadd.f32 %v1041, 0.5
      %v1046 = vmul.f32 %v1026, 0.5
      %v1047 = vmul.f32 %v1027, 0.5
      %v1048 = vmul.f32 %v1028, 0.5
      %v1049 = vmul.f32 %v1029, 0.5
      %v1050 = vadd.f32 %v1046, 0.5
      %v1051 = vadd.f32 %v1047, 0.5
      %v1052 = vadd.f32 %v1048, 0.5
      %v1053 = vadd.f32 %v1049, 0.5
      %v1054 = vmul.f32 %v1042, %v918
      %v1055 = vmul.f32 %v1043, %v919
      %v1056 = vmul.f32 %v1044, %v920
      %v1057 = vmul.f32 %v1045, %v921
      %v1058 = vmul.f32 %v1034, %v1022
      %v1059 = vmul.f32 %v1035, %v1023
      %v1060 = vmul.f32 %v1036, %v1024
      %v1061 = vmul.f32 %v1037, %v1025
      %v1062 = vadd.f32 %v1054, %v1058
      %v1063 = vadd.f32 %v1055, %v1059
      %v1064 = vadd.f32 %v1056, %v1060
      %v1065 = vadd.f32 %v1057, %v1061
      %v1066 = vtanh.pop %v1062
      %v1067 = vtanh.pop %v1063
      %v1068 = vtanh.pop %v1064
      %v1069 = vtanh.pop %v1065
      %v1070 = vmul.f32 %v1050, %v1066
      %v1071 = vmul.f32 %v1051, %v1067
      %v1072 = vmul.f32 %v1052, %v1068
      %v1073 = vmul.f32 %v1053, %v1069
      %v1074 = vperm.slane %v128, 5
      %v1075 = vmul.f32 %v132, %v1074
      %v1076 = vmul.f32 %v137, %v1074
      %v1077 = vmul.f32 %v142, %v1074
      %v1078 = vmul.f32 %v147, %v1074
      %v1079 = vmul.f32 %v152, %v1074
      %v1080 = vmul.f32 %v157, %v1074
      %v1081 = vmul.f32 %v162, %v1074
      %v1082 = vmul.f32 %v167, %v1074
      %v1083 = vmul.f32 %v172, %v1074
      %v1084 = vmul.f32 %v177, %v1074
      %v1085 = vmul.f32 %v182, %v1074
      %v1086 = vmul.f32 %v187, %v1074
      %v1087 = vmul.f32 %v192, %v1074
      %v1088 = vmul.f32 %v197, %v1074
      %v1089 = vmul.f32 %v202, %v1074
      %v1090 = vmul.f32 %v207, %v1074
      %v1091 = vadd.f32 %v1075, %v229
      %v1092 = vadd.f32 %v1076, %v234
      %v1093 = vadd.f32 %v1077, %v239
      %v1094 = vadd.f32 %v1078, %v244
      %v1095 = vadd.f32 %v1079, %v249
      %v1096 = vadd.f32 %v1080, %v254
      %v1097 = vadd.f32 %v1081, %v259
      %v1098 = vadd.f32 %v1082, %v264
      %v1099 = vadd.f32 %v1083, %v269
      %v1100 = vadd.f32 %v1084, %v274
      %v1101 = vadd.f32 %v1085, %v279
      %v1102 = vadd.f32 %v1086, %v284
      %v1103 = vadd.f32 %v1087, %v289
      %v1104 = vadd.f32 %v1088, %v294
      %v1105 = vadd.f32 %v1089, %v299
      %v1106 = vadd.f32 %v1090, %v304
      %v1107 = vpack.c.bf16 %v1071, %v1070
      %v1108 = vpack.c.bf16 %v1073, %v1072
      %1109 = vmatpush.bf16.msra.mxu0 0
      %1110 = vmatpush.bf16.msra.mxu0 0
      %1111 = vmatpush.bf16.msra.mxu0 0
      %1112 = vmatpush.bf16.msra.mxu0 0
      %1113 = vmatpush.bf16.msra.mxu0 0
      %1114 = vmatpush.bf16.msra.mxu0 0
      %1115 = vmatpush.bf16.msra.mxu0 %v1108
      %1116 = vmatpush.bf16.msra.mxu0 %v1107
      %1117 = vmatmul.bf16.gmra.mxu0 %v366
      %v1118 = vpop.f32.mrf.mxu0
      %v1119 = vadd.f32 %v1091, %v1118
      %v1120 = vpop.f32.mrf.mxu0
      %v1121 = vadd.f32 %v1092, %v1120
      %1122 = vmatmul.bf16.gmra.mxu0 %v369
      %v1123 = vpop.f32.mrf.mxu0
      %v1124 = vadd.f32 %v1093, %v1123
      %v1125 = vpop.f32.mrf.mxu0
      %v1126 = vadd.f32 %v1094, %v1125
      %1127 = vmatmul.bf16.gmra.mxu0 %v372
      %v1128 = vpop.f32.mrf.mxu0
      %v1129 = vadd.f32 %v1095, %v1128
      %v1130 = vpop.f32.mrf.mxu0
      %v1131 = vadd.f32 %v1096, %v1130
      %1132 = vmatmul.bf16.gmra.mxu0 %v375
      %v1133 = vpop.f32.mrf.mxu0
      %v1134 = vadd.f32 %v1097, %v1133
      %v1135 = vpop.f32.mrf.mxu0
      %v1136 = vadd.f32 %v1098, %v1135
      %1137 = vmatmul.bf16.gmra.mxu0 %v378
      %v1138 = vpop.f32.mrf.mxu0
      %v1139 = vadd.f32 %v1099, %v1138
      %v1140 = vpop.f32.mrf.mxu0
      %v1141 = vadd.f32 %v1100, %v1140
      %1142 = vmatmul.bf16.gmra.mxu0 %v381
      %v1143 = vpop.f32.mrf.mxu0
      %v1144 = vadd.f32 %v1101, %v1143
      %v1145 = vpop.f32.mrf.mxu0
      %v1146 = vadd.f32 %v1102, %v1145
      %1147 = vmatmul.bf16.gmra.mxu0 %v384
      %v1148 = vpop.f32.mrf.mxu0
      %v1149 = vadd.f32 %v1103, %v1148
      %v1150 = vpop.f32.mrf.mxu0
      %v1151 = vadd.f32 %v1104, %v1150
      %1152 = vmatmul.bf16.gmra.mxu0 %v387
      %v1153 = vpop.f32.mrf.mxu0
      %v1154 = vadd.f32 %v1105, %v1153
      %v1155 = vpop.f32.mrf.mxu0
      %v1156 = vadd.f32 %v1106, %v1155
      %1157 = vdwg.mxu0
      %v1158 = vtanh.pop %v1119
      %v1159 = vtanh.pop %v1121
      %v1160 = vtanh.pop %v1124
      %v1161 = vtanh.pop %v1126
      %v1162 = vtanh.pop %v1129
      %v1163 = vtanh.pop %v1131
      %v1164 = vtanh.pop %v1134
      %v1165 = vtanh.pop %v1136
      %v1166 = vtanh.pop %v1139
      %v1167 = vtanh.pop %v1141
      %v1168 = vtanh.pop %v1144
      %v1169 = vtanh.pop %v1146
      %v1170 = vtanh.pop %v1149
      %v1171 = vtanh.pop %v1151
      %v1172 = vtanh.pop %v1154
      %v1173 = vtanh.pop %v1156
      %v1174 = vmul.f32 %v1158, 0.5
      %v1175 = vmul.f32 %v1159, 0.5
      %v1176 = vmul.f32 %v1160, 0.5
      %v1177 = vmul.f32 %v1161, 0.5
      %v1178 = vadd.f32 %v1174, 0.5
      %v1179 = vadd.f32 %v1175, 0.5
      %v1180 = vadd.f32 %v1176, 0.5
      %v1181 = vadd.f32 %v1177, 0.5
      %v1182 = vmul.f32 %v1162, 0.5
      %v1183 = vmul.f32 %v1163, 0.5
      %v1184 = vmul.f32 %v1164, 0.5
      %v1185 = vmul.f32 %v1165, 0.5
      %v1186 = vadd.f32 %v1182, 0.5
      %v1187 = vadd.f32 %v1183, 0.5
      %v1188 = vadd.f32 %v1184, 0.5
      %v1189 = vadd.f32 %v1185, 0.5
      %v1190 = vmul.f32 %v1170, 0.5
      %v1191 = vmul.f32 %v1171, 0.5
      %v1192 = vmul.f32 %v1172, 0.5
      %v1193 = vmul.f32 %v1173, 0.5
      %v1194 = vadd.f32 %v1190, 0.5
      %v1195 = vadd.f32 %v1191, 0.5
      %v1196 = vadd.f32 %v1192, 0.5
      %v1197 = vadd.f32 %v1193, 0.5
      %v1198 = vmul.f32 %v1186, %v1062
      %v1199 = vmul.f32 %v1187, %v1063
      %v1200 = vmul.f32 %v1188, %v1064
      %v1201 = vmul.f32 %v1189, %v1065
      %v1202 = vmul.f32 %v1178, %v1166
      %v1203 = vmul.f32 %v1179, %v1167
      %v1204 = vmul.f32 %v1180, %v1168
      %v1205 = vmul.f32 %v1181, %v1169
      %v1206 = vadd.f32 %v1198, %v1202
      %v1207 = vadd.f32 %v1199, %v1203
      %v1208 = vadd.f32 %v1200, %v1204
      %v1209 = vadd.f32 %v1201, %v1205
      %v1210 = vtanh.pop %v1206
      %v1211 = vtanh.pop %v1207
      %v1212 = vtanh.pop %v1208
      %v1213 = vtanh.pop %v1209
      %v1214 = vmul.f32 %v1194, %v1210
      %v1215 = vmul.f32 %v1195, %v1211
      %v1216 = vmul.f32 %v1196, %v1212
      %v1217 = vmul.f32 %v1197, %v1213
      %v1218 = vperm.slane %v128, 6
      %v1219 = vmul.f32 %v132, %v1218
      %v1220 = vmul.f32 %v137, %v1218
      %v1221 = vmul.f32 %v142, %v1218
      %v1222 = vmul.f32 %v147, %v1218
      %v1223 = vmul.f32 %v152, %v1218
      %v1224 = vmul.f32 %v157, %v1218
      %v1225 = vmul.f32 %v162, %v1218
      %v1226 = vmul.f32 %v167, %v1218
      %v1227 = vmul.f32 %v172, %v1218
      %v1228 = vmul.f32 %v177, %v1218
      %v1229 = vmul.f32 %v182, %v1218
      %v1230 = vmul.f32 %v187, %v1218
      %v1231 = vmul.f32 %v192, %v1218
      %v1232 = vmul.f32 %v197, %v1218
      %v1233 = vmul.f32 %v202, %v1218
      %v1234 = vmul.f32 %v207, %v1218
      %v1235 = vadd.f32 %v1219, %v229
      %v1236 = vadd.f32 %v1220, %v234
      %v1237 = vadd.f32 %v1221, %v239
      %v1238 = vadd.f32 %v1222, %v244
      %v1239 = vadd.f32 %v1223, %v249
      %v1240 = vadd.f32 %v1224, %v254
      %v1241 = vadd.f32 %v1225, %v259
      %v1242 = vadd.f32 %v1226, %v264
      %v1243 = vadd.f32 %v1227, %v269
      %v1244 = vadd.f32 %v1228, %v274
      %v1245 = vadd.f32 %v1229, %v279
      %v1246 = vadd.f32 %v1230, %v284
      %v1247 = vadd.f32 %v1231, %v289
      %v1248 = vadd.f32 %v1232, %v294
      %v1249 = vadd.f32 %v1233, %v299
      %v1250 = vadd.f32 %v1234, %v304
      %v1251 = vpack.c.bf16 %v1215, %v1214
      %v1252 = vpack.c.bf16 %v1217, %v1216
      %1253 = vmatpush.bf16.msra.mxu0 0
      %1254 = vmatpush.bf16.msra.mxu0 0
      %1255 = vmatpush.bf16.msra.mxu0 0
      %1256 = vmatpush.bf16.msra.mxu0 0
      %1257 = vmatpush.bf16.msra.mxu0 0
      %1258 = vmatpush.bf16.msra.mxu0 0
      %1259 = vmatpush.bf16.msra.mxu0 %v1252
      %1260 = vmatpush.bf16.msra.mxu0 %v1251
      %1261 = vmatmul.bf16.gmra.mxu0 %v366
      %v1262 = vpop.f32.mrf.mxu0
      %v1263 = vadd.f32 %v1235, %v1262
      %v1264 = vpop.f32.mrf.mxu0
      %v1265 = vadd.f32 %v1236, %v1264
      %1266 = vmatmul.bf16.gmra.mxu0 %v369
      %v1267 = vpop.f32.mrf.mxu0
      %v1268 = vadd.f32 %v1237, %v1267
      %v1269 = vpop.f32.mrf.mxu0
      %v1270 = vadd.f32 %v1238, %v1269
      %1271 = vmatmul.bf16.gmra.mxu0 %v372
      %v1272 = vpop.f32.mrf.mxu0
      %v1273 = vadd.f32 %v1239, %v1272
      %v1274 = vpop.f32.mrf.mxu0
      %v1275 = vadd.f32 %v1240, %v1274
      %1276 = vmatmul.bf16.gmra.mxu0 %v375
      %v1277 = vpop.f32.mrf.mxu0
      %v1278 = vadd.f32 %v1241, %v1277
      %v1279 = vpop.f32.mrf.mxu0
      %v1280 = vadd.f32 %v1242, %v1279
      %1281 = vmatmul.bf16.gmra.mxu0 %v378
      %v1282 = vpop.f32.mrf.mxu0
      %v1283 = vadd.f32 %v1243, %v1282
      %v1284 = vpop.f32.mrf.mxu0
      %v1285 = vadd.f32 %v1244, %v1284
      %1286 = vmatmul.bf16.gmra.mxu0 %v381
      %v1287 = vpop.f32.mrf.mxu0
      %v1288 = vadd.f32 %v1245, %v1287
      %v1289 = vpop.f32.mrf.mxu0
      %v1290 = vadd.f32 %v1246, %v1289
      %1291 = vmatmul.bf16.gmra.mxu0 %v384
      %v1292 = vpop.f32.mrf.mxu0
      %v1293 = vadd.f32 %v1247, %v1292
      %v1294 = vpop.f32.mrf.mxu0
      %v1295 = vadd.f32 %v1248, %v1294
      %1296 = vmatmul.bf16.gmra.mxu0 %v387
      %v1297 = vpop.f32.mrf.mxu0
      %v1298 = vadd.f32 %v1249, %v1297
      %v1299 = vpop.f32.mrf.mxu0
      %v1300 = vadd.f32 %v1250, %v1299
      %1301 = vdwg.mxu0
      %v1302 = vtanh.pop %v1263
      %v1303 = vtanh.pop %v1265
      %v1304 = vtanh.pop %v1268
      %v1305 = vtanh.pop %v1270
      %v1306 = vtanh.pop %v1273
      %v1307 = vtanh.pop %v1275
      %v1308 = vtanh.pop %v1278
      %v1309 = vtanh.pop %v1280
      %v1310 = vtanh.pop %v1283
      %v1311 = vtanh.pop %v1285
      %v1312 = vtanh.pop %v1288
      %v1313 = vtanh.pop %v1290
      %v1314 = vtanh.pop %v1293
      %v1315 = vtanh.pop %v1295
      %v1316 = vtanh.pop %v1298
      %v1317 = vtanh.pop %v1300
      %v1318 = vmul.f32 %v1302, 0.5
      %v1319 = vmul.f32 %v1303, 0.5
      %v1320 = vmul.f32 %v1304, 0.5
      %v1321 = vmul.f32 %v1305, 0.5
      %v1322 = vadd.f32 %v1318, 0.5
      %v1323 = vadd.f32 %v1319, 0.5
      %v1324 = vadd.f32 %v1320, 0.5
      %v1325 = vadd.f32 %v1321, 0.5
      %v1326 = vmul.f32 %v1306, 0.5
      %v1327 = vmul.f32 %v1307, 0.5
      %v1328 = vmul.f32 %v1308, 0.5
      %v1329 = vmul.f32 %v1309, 0.5
      %v1330 = vadd.f32 %v1326, 0.5
      %v1331 = vadd.f32 %v1327, 0.5
      %v1332 = vadd.f32 %v1328, 0.5
      %v1333 = vadd.f32 %v1329, 0.5
      %v1334 = vmul.f32 %v1314, 0.5
      %v1335 = vmul.f32 %v1315, 0.5
      %v1336 = vmul.f32 %v1316, 0.5
      %v1337 = vmul.f32 %v1317, 0.5
      %v1338 = vadd.f32 %v1334, 0.5
      %v1339 = vadd.f32 %v1335, 0.5
      %v1340 = vadd.f32 %v1336, 0.5
      %v1341 = vadd.f32 %v1337, 0.5
      %v1342 = vmul.f32 %v1330, %v1206
      %v1343 = vmul.f32 %v1331, %v1207
      %v1344 = vmul.f32 %v1332, %v1208
      %v1345 = vmul.f32 %v1333, %v1209
      %v1346 = vmul.f32 %v1322, %v1310
      %v1347 = vmul.f32 %v1323, %v1311
      %v1348 = vmul.f32 %v1324, %v1312
      %v1349 = vmul.f32 %v1325, %v1313
      %v1350 = vadd.f32 %v1342, %v1346
      %v1351 = vadd.f32 %v1343, %v1347
      %v1352 = vadd.f32 %v1344, %v1348
      %v1353 = vadd.f32 %v1345, %v1349
      %v1354 = vtanh.pop %v1350
      %v1355 = vtanh.pop %v1351
      %v1356 = vtanh.pop %v1352
      %v1357 = vtanh.pop %v1353
      %v1358 = vmul.f32 %v1338, %v1354
      %v1359 = vmul.f32 %v1339, %v1355
      %v1360 = vmul.f32 %v1340, %v1356
      %v1361 = vmul.f32 %v1341, %v1357
      %v1362 = vperm.slane %v128, 7
      %v1363 = vmul.f32 %v132, %v1362
      %v1364 = vmul.f32 %v137, %v1362
      %v1365 = vmul.f32 %v142, %v1362
      %v1366 = vmul.f32 %v147, %v1362
      %v1367 = vmul.f32 %v152, %v1362
      %v1368 = vmul.f32 %v157, %v1362
      %v1369 = vmul.f32 %v162, %v1362
      %v1370 = vmul.f32 %v167, %v1362
      %v1371 = vmul.f32 %v172, %v1362
      %v1372 = vmul.f32 %v177, %v1362
      %v1373 = vmul.f32 %v182, %v1362
      %v1374 = vmul.f32 %v187, %v1362
      %v1375 = vmul.f32 %v192, %v1362
      %v1376 = vmul.f32 %v197, %v1362
      %v1377 = vmul.f32 %v202, %v1362
      %v1378 = vmul.f32 %v207, %v1362
      %v1379 = vadd.f32 %v1363, %v229
      %v1380 = vadd.f32 %v1364, %v234
      %v1381 = vadd.f32 %v1365, %v239
      %v1382 = vadd.f32 %v1366, %v244
      %v1383 = vadd.f32 %v1367, %v249
      %v1384 = vadd.f32 %v1368, %v254
      %v1385 = vadd.f32 %v1369, %v259
      %v1386 = vadd.f32 %v1370, %v264
      %v1387 = vadd.f32 %v1371, %v269
      %v1388 = vadd.f32 %v1372, %v274
      %v1389 = vadd.f32 %v1373, %v279
      %v1390 = vadd.f32 %v1374, %v284
      %v1391 = vadd.f32 %v1375, %v289
      %v1392 = vadd.f32 %v1376, %v294
      %v1393 = vadd.f32 %v1377, %v299
      %v1394 = vadd.f32 %v1378, %v304
      %v1395 = vpack.c.bf16 %v1359, %v1358
      %v1396 = vpack.c.bf16 %v1361, %v1360
      %1397 = vmatpush.bf16.msra.mxu0 0
      %1398 = vmatpush.bf16.msra.mxu0 0
      %1399 = vmatpush.bf16.msra.mxu0 0
      %1400 = vmatpush.bf16.msra.mxu0 0
      %1401 = vmatpush.bf16.msra.mxu0 0
      %1402 = vmatpush.bf16.msra.mxu0 0
      %1403 = vmatpush.bf16.msra.mxu0 %v1396
      %1404 = vmatpush.bf16.msra.mxu0 %v1395
      %1405 = vmatmul.bf16.gmra.mxu0 %v366
      %v1406 = vpop.f32.mrf.mxu0
      %v1407 = vadd.f32 %v1379, %v1406
      %v1408 = vpop.f32.mrf.mxu0
      %v1409 = vadd.f32 %v1380, %v1408
      %1410 = vmatmul.bf16.gmra.mxu0 %v369
      %v1411 = vpop.f32.mrf.mxu0
      %v1412 = vadd.f32 %v1381, %v1411
      %v1413 = vpop.f32.mrf.mxu0
      %v1414 = vadd.f32 %v1382, %v1413
      %1415 = vmatmul.bf16.gmra.mxu0 %v372
      %v1416 = vpop.f32.mrf.mxu0
      %v1417 = vadd.f32 %v1383, %v1416
      %v1418 = vpop.f32.mrf.mxu0
      %v1419 = vadd.f32 %v1384, %v1418
      %1420 = vmatmul.bf16.gmra.mxu0 %v375
      %v1421 = vpop.f32.mrf.mxu0
      %v1422 = vadd.f32 %v1385, %v1421
      %v1423 = vpop.f32.mrf.mxu0
      %v1424 = vadd.f32 %v1386, %v1423
      %1425 = vmatmul.bf16.gmra.mxu0 %v378
      %v1426 = vpop.f32.mrf.mxu0
      %v1427 = vadd.f32 %v1387, %v1426
      %v1428 = vpop.f32.mrf.mxu0
      %v1429 = vadd.f32 %v1388, %v1428
      %1430 = vmatmul.bf16.gmra.mxu0 %v381
      %v1431 = vpop.f32.mrf.mxu0
      %v1432 = vadd.f32 %v1389, %v1431
      %v1433 = vpop.f32.mrf.mxu0
      %v1434 = vadd.f32 %v1390, %v1433
      %1435 = vmatmul.bf16.gmra.mxu0 %v384
      %v1436 = vpop.f32.mrf.mxu0
      %v1437 = vadd.f32 %v1391, %v1436
      %v1438 = vpop.f32.mrf.mxu0
      %v1439 = vadd.f32 %v1392, %v1438
      %1440 = vmatmul.bf16.gmra.mxu0 %v387
      %v1441 = vpop.f32.mrf.mxu0
      %v1442 = vadd.f32 %v1393, %v1441
      %v1443 = vpop.f32.mrf.mxu0
      %v1444 = vadd.f32 %v1394, %v1443
      %1445 = vdwg.mxu0
      %v1446 = vtanh.pop %v1407
      %v1447 = vtanh.pop %v1409
      %v1448 = vtanh.pop %v1412
      %v1449 = vtanh.pop %v1414
      %v1450 = vtanh.pop %v1417
      %v1451 = vtanh.pop %v1419
      %v1452 = vtanh.pop %v1422
      %v1453 = vtanh.pop %v1424
      %v1454 = vtanh.pop %v1427
      %v1455 = vtanh.pop %v1429
      %v1456 = vtanh.pop %v1432
      %v1457 = vtanh.pop %v1434
      %v1458 = vtanh.pop %v1437
      %v1459 = vtanh.pop %v1439
      %v1460 = vtanh.pop %v1442
      %v1461 = vtanh.pop %v1444
      %v1462 = vmul.f32 %v1446, 0.5
      %v1463 = vmul.f32 %v1447, 0.5
      %v1464 = vmul.f32 %v1448, 0.5
      %v1465 = vmul.f32 %v1449, 0.5
      %v1466 = vadd.f32 %v1462, 0.5
      %v1467 = vadd.f32 %v1463, 0.5
      %v1468 = vadd.f32 %v1464, 0.5
      %v1469 = vadd.f32 %v1465, 0.5
      %v1470 = vmul.f32 %v1450, 0.5
      %v1471 = vmul.f32 %v1451, 0.5
      %v1472 = vmul.f32 %v1452, 0.5
      %v1473 = vmul.f32 %v1453, 0.5
      %v1474 = vadd.f32 %v1470, 0.5
      %v1475 = vadd.f32 %v1471, 0.5
      %v1476 = vadd.f32 %v1472, 0.5
      %v1477 = vadd.f32 %v1473, 0.5
      %v1478 = vmul.f32 %v1458, 0.5
      %v1479 = vmul.f32 %v1459, 0.5
      %v1480 = vmul.f32 %v1460, 0.5
      %v1481 = vmul.f32 %v1461, 0.5
      %v1482 = vadd.f32 %v1478, 0.5
      %v1483 = vadd.f32 %v1479, 0.5
      %v1484 = vadd.f32 %v1480, 0.5
      %v1485 = vadd.f32 %v1481, 0.5
      %v1486 = vmul.f32 %v1474, %v1350
      %v1487 = vmul.f32 %v1475, %v1351
      %v1488 = vmul.f32 %v1476, %v1352
      %v1489 = vmul.f32 %v1477, %v1353
      %v1490 = vmul.f32 %v1466, %v1454
      %v1491 = vmul.f32 %v1467, %v1455
      %v1492 = vmul.f32 %v1468, %v1456
      %v1493 = vmul.f32 %v1469, %v1457
      %v1494 = vadd.f32 %v1486, %v1490
      %v1495 = vadd.f32 %v1487, %v1491
      %v1496 = vadd.f32 %v1488, %v1492
      %v1497 = vadd.f32 %v1489, %v1493
      %v1498 = vtanh.pop %v1494
      %v1499 = vtanh.pop %v1495
      %v1500 = vtanh.pop %v1496
      %v1501 = vtanh.pop %v1497
      %v1502 = vmul.f32 %v1482, %v1498
      %v1503 = vmul.f32 %v1483, %v1499
      %v1504 = vmul.f32 %v1484, %v1500
      %v1505 = vmul.f32 %v1485, %v1501
    $region78: #{tpu_custom_call.1} parent=1 // loop_footer
      %s117 = sadd.s32 1, %s113
    $region79: #{tpu_custom_call.1} parent=1 // loop_footer_branch
      %112 = sbr.rel target = $region75
    $region80: #{tpu_custom_call.1} parent=1 // loop_exit
      _
    %v1506 = vld [vmem:[%s5] sm:$0xf]
    %v1507 = vld [vmem:[%s5 + $0x4] sm:$0xf]
    %v1508 = vld [vmem:[%s5 + $0x8] sm:$0xf]
    %v1509 = vld [vmem:[%s5 + $0xc] sm:$0xf]
    %v1510 = vpack.c.bf16 %v119, %v118
    %v1511 = vpack.c.bf16 %v121, %v120
    %v1512 = vld [vmem:[%s6] sm:$0xff]
    %v1513 = vld [vmem:[%s6 + $0x8] sm:$0xff]
    %v1514 = vld [vmem:[%s6 + $0x10] sm:$0xff]
    %v1515 = vld [vmem:[%s6 + $0x18] sm:$0xff]
    %1517 = vset.pattern.permute.xlu0 0
    %1518 = vperm.xlu0 %1517, %v1512
    %v1519 = vpop.permute.xlu0 %1518
    %1522 = vset.pattern.permute.xlu0 0
    %1523 = vperm.xlu0 %1522, %v1513
    %v1524 = vpop.permute.xlu0 %1523
    %1527 = vset.pattern.permute.xlu0 0
    %1528 = vperm.xlu0 %1527, %v1514
    %v1529 = vpop.permute.xlu0 %1528
    %1532 = vset.pattern.permute.xlu0 0
    %1533 = vperm.xlu0 %1532, %v1515
    %v1534 = vpop.permute.xlu0 %1533
    %v1540 = vunpack.c.l.b16 %v1506
    %v1541 = vunpack.c.l.b16 %v1507
    %v1542 = vunpack.c.l.b16 %v1508
    %v1543 = vunpack.c.l.b16 %v1509
    %v1544 = vpack.c.b16 %v1541, %v1540
    %v1545 = vpack.c.b16 %v1543, %v1542
    %vm1546 = vcmask 261120
    %v1548 = vsel %vm1546, %v1544, 0
    %v1551 = vsel %vm1546, %v1545, 0
    %1553 = vmatpush.bf16.msra.mxu0 0
    %1554 = vmatpush.bf16.msra.mxu0 0
    %1555 = vmatpush.bf16.msra.mxu0 0
    %1556 = vmatpush.bf16.msra.mxu0 0
    %1557 = vmatpush.bf16.msra.mxu0 0
    %1558 = vmatpush.bf16.msra.mxu0 0
    %1559 = vmatpush.bf16.msra.mxu0 %v1511
    %1560 = vmatpush.bf16.msra.mxu0 %v1510
    %1561 = vmatmul.bf16.gmra.mxu0 %v1548
    %v1562 = vpop.f32.mrf.mxu0
    %v1563 = vadd.f32 %v1519, %v1562
    %v1564 = vpop.f32.mrf.mxu0
    %v1565 = vadd.f32 %v1524, %v1564
    %1566 = vmatmul.bf16.gmra.mxu0 %v1551
    %v1567 = vpop.f32.mrf.mxu0
    %v1568 = vadd.f32 %v1529, %v1567
    %v1569 = vpop.f32.mrf.mxu0
    %v1570 = vadd.f32 %v1534, %v1569
    %1571 = vdwg.mxu0
    %vm1572 = vcmp.gt.f32.partialorder %v1563, 0.0
    %vm1573 = vcmp.gt.f32.partialorder %v1565, 0.0
    %vm1574 = vcmp.gt.f32.partialorder %v1568, 0.0
    %vm1575 = vcmp.gt.f32.partialorder %v1570, 0.0
    %v1576 = vmul.f32 %v1563, 0.2
    %v1577 = vmul.f32 %v1565, 0.2
    %v1578 = vmul.f32 %v1568, 0.2
    %v1579 = vmul.f32 %v1570, 0.2
    %v1580 = vsel %vm1572, %v1563, %v1576
    %v1581 = vsel %vm1573, %v1565, %v1577
    %v1582 = vsel %vm1574, %v1568, %v1578
    %v1583 = vsel %vm1575, %v1570, %v1579
    %v1584 = vld [vmem:[%s7] sm:$0xf]
    %v1585 = vld [vmem:[%s7 + $0x4] sm:$0xf]
    %v1586 = vld [vmem:[%s7 + $0x8] sm:$0xf]
    %v1587 = vld [vmem:[%s7 + $0xc] sm:$0xf]
    %v1588 = vpack.c.bf16 %v1581, %v1580
    %v1589 = vpack.c.bf16 %v1583, %v1582
    %v1590 = vld [vmem:[%s8] sm:$0xff]
    %v1591 = vld [vmem:[%s8 + $0x8] sm:$0xff]
    %v1592 = vld [vmem:[%s8 + $0x10] sm:$0xff]
    %v1593 = vld [vmem:[%s8 + $0x18] sm:$0xff]
    %1595 = vset.pattern.permute.xlu0 0
    %1596 = vperm.xlu0 %1595, %v1590
    %v1597 = vpop.permute.xlu0 %1596
    %1600 = vset.pattern.permute.xlu0 0
    %1601 = vperm.xlu0 %1600, %v1591
    %v1602 = vpop.permute.xlu0 %1601
    %1605 = vset.pattern.permute.xlu0 0
    %1606 = vperm.xlu0 %1605, %v1592
    %v1607 = vpop.permute.xlu0 %1606
    %1610 = vset.pattern.permute.xlu0 0
    %1611 = vperm.xlu0 %1610, %v1593
    %v1612 = vpop.permute.xlu0 %1611
    %v1618 = vunpack.c.l.b16 %v1584
    %v1619 = vunpack.c.l.b16 %v1585
    %v1620 = vunpack.c.l.b16 %v1586
    %v1621 = vunpack.c.l.b16 %v1587
    %v1622 = vpack.c.b16 %v1619, %v1618
    %v1623 = vpack.c.b16 %v1621, %v1620
    %v1625 = vsel %vm1546, %v1622, 0
    %v1628 = vsel %vm1546, %v1623, 0
    %1630 = vmatpush.bf16.msra.mxu0 0
    %1631 = vmatpush.bf16.msra.mxu0 0
    %1632 = vmatpush.bf16.msra.mxu0 0
    %1633 = vmatpush.bf16.msra.mxu0 0
    %1634 = vmatpush.bf16.msra.mxu0 0
    %1635 = vmatpush.bf16.msra.mxu0 0
    %1636 = vmatpush.bf16.msra.mxu0 %v1589
    %1637 = vmatpush.bf16.msra.mxu0 %v1588
    %1638 = vmatmul.bf16.gmra.mxu0 %v1625
    %v1639 = vpop.f32.mrf.mxu0
    %v1640 = vadd.f32 %v1597, %v1639
    %v1641 = vpop.f32.mrf.mxu0
    %v1642 = vadd.f32 %v1602, %v1641
    %1643 = vmatmul.bf16.gmra.mxu0 %v1628
    %v1644 = vpop.f32.mrf.mxu0
    %v1645 = vadd.f32 %v1607, %v1644
    %v1646 = vpop.f32.mrf.mxu0
    %v1647 = vadd.f32 %v1612, %v1646
    %1648 = vdwg.mxu0
    %vm1649 = vcmp.gt.f32.partialorder %v1640, 0.0
    %vm1650 = vcmp.gt.f32.partialorder %v1642, 0.0
    %vm1651 = vcmp.gt.f32.partialorder %v1645, 0.0
    %vm1652 = vcmp.gt.f32.partialorder %v1647, 0.0
    %v1653 = vmul.f32 %v1640, 0.2
    %v1654 = vmul.f32 %v1642, 0.2
    %v1655 = vmul.f32 %v1645, 0.2
    %v1656 = vmul.f32 %v1647, 0.2
    %v1657 = vsel %vm1649, %v1640, %v1653
    %v1658 = vsel %vm1650, %v1642, %v1654
    %v1659 = vsel %vm1651, %v1645, %v1655
    %v1660 = vsel %vm1652, %v1647, %v1656
    %v1661 = vld [vmem:[%s9] sm:$0x1]
    %v1662 = vpack.c.bf16 %v1658, %v1657
    %v1663 = vpack.c.bf16 %v1660, %v1659
    %v1664 = vld [vmem:[%s10] sm:$0x3]
    %1666 = vset.pattern.permute.xlu0 0
    %1667 = vperm.xlu0 %1666, %v1664
    %v1668 = vpop.permute.xlu0 %1667
    %v1671 = vsel %vm1546, %v1661, 0
    %1673 = vmatpush.bf16.msra.mxu0 0
    %1674 = vmatpush.bf16.msra.mxu0 0
    %1675 = vmatpush.bf16.msra.mxu0 0
    %1676 = vmatpush.bf16.msra.mxu0 0
    %1677 = vmatpush.bf16.msra.mxu0 0
    %1678 = vmatpush.bf16.msra.mxu0 0
    %1679 = vmatpush.bf16.msra.mxu0 %v1663
    %1680 = vmatpush.bf16.msra.mxu0 %v1662
    %1681 = vmatmul.bf16.gmra.mxu0 %v1671
    %v1682 = vpop.f32.mrf.mxu0
    %v1683 = vadd.f32 %v1668, %v1682
    %v1684 = vpop.f32.mrf.mxu0
    %1685 = vdwg.mxu0
    %1686 = vst [vmem:[#allocation5] sm:$0x3] %v1683
    %v1687 = vld [vmem:[%s1] sm:$0x1]
    %v1689 = vperm.slane %v1687, 0
    %v1691 = vmul.f32 %v1683, %v1689
    %v1693 = vrot.slane %v1691, 1
    %v1695 = vadd.f32 %v1683, %v1693
    %v1696 = vld [vmem:[%s11] sm:$0xff]
    %v1697 = vld [vmem:[%s11 + $0x8] sm:$0xff]
    %v1698 = vld [vmem:[%s11 + $0x10] sm:$0xff]
    %v1699 = vld [vmem:[%s11 + $0x18] sm:$0xff]
    %1701 = vset.pattern.permute.xlu0 0
    %1702 = vperm.xlu0 %1701, %v1696
    %v1703 = vpop.permute.xlu0 %1702
    %1706 = vset.pattern.permute.xlu0 0
    %1707 = vperm.xlu0 %1706, %v1697
    %v1708 = vpop.permute.xlu0 %1707
    %1711 = vset.pattern.permute.xlu0 0
    %1712 = vperm.xlu0 %1711, %v1698
    %v1713 = vpop.permute.xlu0 %1712
    %1716 = vset.pattern.permute.xlu0 0
    %1717 = vperm.xlu0 %1716, %v1699
    %v1718 = vpop.permute.xlu0 %1717
    %v1720 = vperm.slane %v1695, 0
    %v1721 = vmul.f32 %v1703, %v1720
    %v1722 = vmul.f32 %v1708, %v1720
    %v1723 = vmul.f32 %v1713, %v1720
    %v1724 = vmul.f32 %v1718, %v1720
    %v1725 = vld [vmem:[%s12] sm:$0xff]
    %v1726 = vld [vmem:[%s12 + $0x8] sm:$0xff]
    %v1727 = vld [vmem:[%s12 + $0x10] sm:$0xff]
    %v1728 = vld [vmem:[%s12 + $0x18] sm:$0xff]
    %1730 = vset.pattern.permute.xlu0 0
    %1731 = vperm.xlu0 %1730, %v1725
    %v1732 = vpop.permute.xlu0 %1731
    %1735 = vset.pattern.permute.xlu0 0
    %1736 = vperm.xlu0 %1735, %v1726
    %v1737 = vpop.permute.xlu0 %1736
    %1740 = vset.pattern.permute.xlu0 0
    %1741 = vperm.xlu0 %1740, %v1727
    %v1742 = vpop.permute.xlu0 %1741
    %1745 = vset.pattern.permute.xlu0 0
    %1746 = vperm.xlu0 %1745, %v1728
    %v1747 = vpop.permute.xlu0 %1746
    %v1749 = vadd.f32 %v1721, %v1732
    %v1750 = vadd.f32 %v1722, %v1737
    %v1751 = vadd.f32 %v1723, %v1742
    %v1752 = vadd.f32 %v1724, %v1747
    %vm1753 = vcmp.gt.f32.partialorder %v1749, 0.0
    %vm1754 = vcmp.gt.f32.partialorder %v1750, 0.0
    %vm1755 = vcmp.gt.f32.partialorder %v1751, 0.0
    %vm1756 = vcmp.gt.f32.partialorder %v1752, 0.0
    %v1757 = vmul.f32 %v1749, 0.2
    %v1758 = vmul.f32 %v1750, 0.2
    %v1759 = vmul.f32 %v1751, 0.2
    %v1760 = vmul.f32 %v1752, 0.2
    %v1761 = vsel %vm1753, %v1749, %v1757
    %v1762 = vsel %vm1754, %v1750, %v1758
    %v1763 = vsel %vm1755, %v1751, %v1759
    %v1764 = vsel %vm1756, %v1752, %v1760
    %v1765 = vld [vmem:[%s13] sm:$0xf]
    %v1766 = vld [vmem:[%s13 + $0x4] sm:$0xf]
    %v1767 = vld [vmem:[%s13 + $0x8] sm:$0xf]
    %v1768 = vld [vmem:[%s13 + $0xc] sm:$0xf]
    %v1769 = vpack.c.bf16 %v1762, %v1761
    %v1770 = vpack.c.bf16 %v1764, %v1763
    %v1771 = vld [vmem:[%s14] sm:$0xff]
    %v1772 = vld [vmem:[%s14 + $0x8] sm:$0xff]
    %v1773 = vld [vmem:[%s14 + $0x10] sm:$0xff]
    %v1774 = vld [vmem:[%s14 + $0x18] sm:$0xff]
    %1776 = vset.pattern.permute.xlu0 0
    %1777 = vperm.xlu0 %1776, %v1771
    %v1778 = vpop.permute.xlu0 %1777
    %1781 = vset.pattern.permute.xlu0 0
    %1782 = vperm.xlu0 %1781, %v1772
    %v1783 = vpop.permute.xlu0 %1782
    %1786 = vset.pattern.permute.xlu0 0
    %1787 = vperm.xlu0 %1786, %v1773
    %v1788 = vpop.permute.xlu0 %1787
    %1791 = vset.pattern.permute.xlu0 0
    %1792 = vperm.xlu0 %1791, %v1774
    %v1793 = vpop.permute.xlu0 %1792
    %v1799 = vunpack.c.l.b16 %v1765
    %v1800 = vunpack.c.l.b16 %v1766
    %v1801 = vunpack.c.l.b16 %v1767
    %v1802 = vunpack.c.l.b16 %v1768
    %v1803 = vpack.c.b16 %v1800, %v1799
    %v1804 = vpack.c.b16 %v1802, %v1801
    %v1806 = vsel %vm1546, %v1803, 0
    %v1809 = vsel %vm1546, %v1804, 0
    %1811 = vmatpush.bf16.msra.mxu0 0
    %1812 = vmatpush.bf16.msra.mxu0 0
    %1813 = vmatpush.bf16.msra.mxu0 0
    %1814 = vmatpush.bf16.msra.mxu0 0
    %1815 = vmatpush.bf16.msra.mxu0 0
    %1816 = vmatpush.bf16.msra.mxu0 0
    %1817 = vmatpush.bf16.msra.mxu0 %v1770
    %1818 = vmatpush.bf16.msra.mxu0 %v1769
    %1819 = vmatmul.bf16.gmra.mxu0 %v1806
    %v1820 = vpop.f32.mrf.mxu0
    %v1821 = vadd.f32 %v1778, %v1820
    %v1822 = vpop.f32.mrf.mxu0
    %v1823 = vadd.f32 %v1783, %v1822
    %1824 = vmatmul.bf16.gmra.mxu0 %v1809
    %v1825 = vpop.f32.mrf.mxu0
    %v1826 = vadd.f32 %v1788, %v1825
    %v1827 = vpop.f32.mrf.mxu0
    %v1828 = vadd.f32 %v1793, %v1827
    %1829 = vdwg.mxu0
    %vm1830 = vcmp.gt.f32.partialorder %v1821, 0.0
    %vm1831 = vcmp.gt.f32.partialorder %v1823, 0.0
    %vm1832 = vcmp.gt.f32.partialorder %v1826, 0.0
    %vm1833 = vcmp.gt.f32.partialorder %v1828, 0.0
    %v1834 = vmul.f32 %v1821, 0.2
    %v1835 = vmul.f32 %v1823, 0.2
    %v1836 = vmul.f32 %v1826, 0.2
    %v1837 = vmul.f32 %v1828, 0.2
    %v1838 = vsel %vm1830, %v1821, %v1834
    %v1839 = vsel %vm1831, %v1823, %v1835
    %v1840 = vsel %vm1832, %v1826, %v1836
    %v1841 = vsel %vm1833, %v1828, %v1837
    %v1842 = vld [vmem:[%s15] sm:$0x3]
    %v1843 = vpack.c.bf16 %v1839, %v1838
    %v1844 = vpack.c.bf16 %v1841, %v1840
    %v1845 = vld [vmem:[%s17] sm:$0xf]
    %1847 = vset.pattern.permute.xlu0 0
    %1848 = vperm.xlu0 %1847, %v1845
    %v1849 = vpop.permute.xlu0 %1848
    %v1852 = vsel %vm1546, %v1842, 0
    %1854 = vmatpush.bf16.msra.mxu0 0
    %1855 = vmatpush.bf16.msra.mxu0 0
    %1856 = vmatpush.bf16.msra.mxu0 0
    %1857 = vmatpush.bf16.msra.mxu0 0
    %1858 = vmatpush.bf16.msra.mxu0 0
    %1859 = vmatpush.bf16.msra.mxu0 0
    %1860 = vmatpush.bf16.msra.mxu0 %v1844
    %1861 = vmatpush.bf16.msra.mxu0 %v1843
    %1862 = vmatmul.bf16.gmra.mxu0 %v1852
    %v1863 = vpop.f32.mrf.mxu0
    %v1864 = vadd.f32 %v1849, %v1863
    %v1865 = vpop.f32.mrf.mxu0
    %1866 = vdwg.mxu0
    %v1867 = vld [vmem:[%s16] sm:$0xf]
    loop: start=0, step=1, limit=6
    $region81: #{tpu_custom_call.1} parent=1 // loop_pre_header
      _
    $region82: #{tpu_custom_call.1} parent=1 // loop_header
      %s1869 = sphi 0, %s1873
      %p1870 = scmp.ge.s32.totalorder %s1869, 6
      %v1874 = vphi 0.0, %v2047
      %v1875 = vphi 0.0, %v2042
    $region83: #{tpu_custom_call.1} parent=1 // loop_header_branch
      %1872 = sbr.rel (%p1870) target = $region87
    $region84: #{tpu_custom_call.1} parent=1 // loop_body
      %1877 = vset.pattern.permute.xlu0 0
      %1878 = vperm.xlu0 %1877, %v1867
      %v1879 = vpop.permute.xlu0 %1878
      %v1881 = vperm.slane %v1874, 3
      %v1882 = vmul.f32 %v1879, %v1881
      %v1883 = vadd.f32 %v1864, %v1882
      %v1884 = vtanh.pop %v1883
      %v1885 = vmul.f32 %v1884, 0.5
      %v1886 = vadd.f32 %v1885, 0.5
      %v1887 = vmul.f32 %v1886, %v1875
      %v1889 = vrot.slane %v1884, 2
      %v1891 = vmul.f32 %v1886, %v1889
      %v1893 = vrot.slane %v1891, 7
      %v1895 = vadd.f32 %v1887, %v1893
      %v1896 = vtanh.pop %v1895
      %v1898 = vrot.slane %v1896, 6
      %v1900 = vmul.f32 %v1886, %v1898
      %1901 = vst [vmem:[#allocation2 - $0x3] sm:$0x8] %v1900
      %v1902 = vperm.slane %v1900, 3
      %v1903 = vmul.f32 %v1879, %v1902
      %v1904 = vadd.f32 %v1864, %v1903
      %v1905 = vtanh.pop %v1904
      %v1906 = vmul.f32 %v1905, 0.5
      %v1907 = vadd.f32 %v1906, 0.5
      %v1908 = vmul.f32 %v1907, %v1895
      %v1910 = vrot.slane %v1905, 2
      %v1912 = vmul.f32 %v1907, %v1910
      %v1914 = vrot.slane %v1912, 7
      %v1916 = vadd.f32 %v1908, %v1914
      %v1917 = vtanh.pop %v1916
      %v1919 = vrot.slane %v1917, 6
      %v1921 = vmul.f32 %v1907, %v1919
      %1922 = vst [vmem:[#allocation2 - $0x2] sm:$0x8] %v1921
      %v1923 = vperm.slane %v1921, 3
      %v1924 = vmul.f32 %v1879, %v1923
      %v1925 = vadd.f32 %v1864, %v1924
      %v1926 = vtanh.pop %v1925
      %v1927 = vmul.f32 %v1926, 0.5
      %v1928 = vadd.f32 %v1927, 0.5
      %v1929 = vmul.f32 %v1928, %v1916
      %v1931 = vrot.slane %v1926, 2
      %v1933 = vmul.f32 %v1928, %v1931
      %v1935 = vrot.slane %v1933, 7
      %v1937 = vadd.f32 %v1929, %v1935
      %v1938 = vtanh.pop %v1937
      %v1940 = vrot.slane %v1938, 6
      %v1942 = vmul.f32 %v1928, %v1940
      %1943 = vst [vmem:[#allocation2 - $0x1] sm:$0x8] %v1942
      %v1944 = vperm.slane %v1942, 3
      %v1945 = vmul.f32 %v1879, %v1944
      %v1946 = vadd.f32 %v1864, %v1945
      %v1947 = vtanh.pop %v1946
      %v1948 = vmul.f32 %v1947, 0.5
      %v1949 = vadd.f32 %v1948, 0.5
      %v1950 = vmul.f32 %v1949, %v1937
      %v1952 = vrot.slane %v1947, 2
      %v1954 = vmul.f32 %v1949, %v1952
      %v1956 = vrot.slane %v1954, 7
      %v1958 = vadd.f32 %v1950, %v1956
      %v1959 = vtanh.pop %v1958
      %v1961 = vrot.slane %v1959, 6
      %v1963 = vmul.f32 %v1949, %v1961
      %1964 = vst [vmem:[#allocation2] sm:$0x8] %v1963
      %v1965 = vperm.slane %v1963, 3
      %v1966 = vmul.f32 %v1879, %v1965
      %v1967 = vadd.f32 %v1864, %v1966
      %v1968 = vtanh.pop %v1967
      %v1969 = vmul.f32 %v1968, 0.5
      %v1970 = vadd.f32 %v1969, 0.5
      %v1971 = vmul.f32 %v1970, %v1958
      %v1973 = vrot.slane %v1968, 2
      %v1975 = vmul.f32 %v1970, %v1973
      %v1977 = vrot.slane %v1975, 7
      %v1979 = vadd.f32 %v1971, %v1977
      %v1980 = vtanh.pop %v1979
      %v1982 = vrot.slane %v1980, 6
      %v1984 = vmul.f32 %v1970, %v1982
      %1985 = vst [vmem:[#allocation2 + $0x1] sm:$0x8] %v1984
      %v1986 = vperm.slane %v1984, 3
      %v1987 = vmul.f32 %v1879, %v1986
      %v1988 = vadd.f32 %v1864, %v1987
      %v1989 = vtanh.pop %v1988
      %v1990 = vmul.f32 %v1989, 0.5
      %v1991 = vadd.f32 %v1990, 0.5
      %v1992 = vmul.f32 %v1991, %v1979
      %v1994 = vrot.slane %v1989, 2
      %v1996 = vmul.f32 %v1991, %v1994
      %v1998 = vrot.slane %v1996, 7
      %v2000 = vadd.f32 %v1992, %v1998
      %v2001 = vtanh.pop %v2000
      %v2003 = vrot.slane %v2001, 6
      %v2005 = vmul.f32 %v1991, %v2003
      %2006 = vst [vmem:[#allocation2 + $0x2] sm:$0x8] %v2005
      %v2007 = vperm.slane %v2005, 3
      %v2008 = vmul.f32 %v1879, %v2007
      %v2009 = vadd.f32 %v1864, %v2008
      %v2010 = vtanh.pop %v2009
      %v2011 = vmul.f32 %v2010, 0.5
      %v2012 = vadd.f32 %v2011, 0.5
      %v2013 = vmul.f32 %v2012, %v2000
      %v2015 = vrot.slane %v2010, 2
      %v2017 = vmul.f32 %v2012, %v2015
      %v2019 = vrot.slane %v2017, 7
      %v2021 = vadd.f32 %v2013, %v2019
      %v2022 = vtanh.pop %v2021
      %v2024 = vrot.slane %v2022, 6
      %v2026 = vmul.f32 %v2012, %v2024
      %2027 = vst [vmem:[#allocation2 + $0x3] sm:$0x8] %v2026
      %v2028 = vperm.slane %v2026, 3
      %v2029 = vmul.f32 %v1879, %v2028
      %v2030 = vadd.f32 %v1864, %v2029
      %v2031 = vtanh.pop %v2030
      %v2032 = vmul.f32 %v2031, 0.5
      %v2033 = vadd.f32 %v2032, 0.5
      %v2034 = vmul.f32 %v2033, %v2021
      %v2036 = vrot.slane %v2031, 2
      %v2038 = vmul.f32 %v2033, %v2036
      %v2040 = vrot.slane %v2038, 7
      %v2042 = vadd.f32 %v2034, %v2040
      %v2043 = vtanh.pop %v2042
      %v2045 = vrot.slane %v2043, 6
      %v2047 = vmul.f32 %v2033, %v2045
      %2048 = vst [vmem:[#allocation2 + $0x4] sm:$0x8] %v2047
      %s2049 = smul.u32 %s1869, 8
      %v2050 = vld [vmem:[#allocation2] sm:$0xff]
      %s2051 = scalar_lea.vmem [#allocation3], %s2049
      %2052 = vst [vmem:[%s2051] sm:$0xff] %v2050
    $region85: #{tpu_custom_call.1} parent=1 // loop_footer
      %s1873 = sadd.s32 1, %s1869
    $region86: #{tpu_custom_call.1} parent=1 // loop_footer_branch
      %1868 = sbr.rel target = $region82
    $region87: #{tpu_custom_call.1} parent=1 // loop_exit
      _
    // Predicated region
    $region88: #{tpu_custom_call.1} parent=1 // pred_check
      _
    $region89: #{tpu_custom_call.1} parent=1 // pred_check_branch
      %2054 = sbr.rel (0) target = $region91
    $region90: #{tpu_custom_call.1} parent=1 // pred_region
      %2056 = vsyncadd [#allocation4], 0
      %s2057 = sshll.u32 [#allocation3], 4
      %s2058 = int_to_ptr.vmem [resolvable:$true] %s2057
      %s2059 = sshll.u32 %s18, 4
      %s2060 = int_to_ptr.hbm [resolvable:$true] %s2059
      %2065 = dma.vmem_to_hbm [thread:$0]  %s2058, 768, %s2060, [#allocation4], 128, 128, 8
    $region91: #{tpu_custom_call.1} parent=1 // pred_fallthru
      _
    // Predicated region
    $region92: #{tpu_custom_call.1} parent=1 // pred_check
      _
    $region93: #{tpu_custom_call.1} parent=1 // pred_check_branch
      %2067 = sbr.rel (0) target = $region95
    $region94: #{tpu_custom_call.1} parent=1 // pred_region
      %2069 = vsyncadd [#allocation6], 0
      %s2071 = sshll.u32 [#allocation5], 4
      %s2072 = int_to_ptr.vmem [resolvable:$true] %s2071
      %s2073 = sshll.u32 %s19, 4
      %s2074 = int_to_ptr.hbm [resolvable:$true] %s2073
      %2076 = dma.vmem_to_hbm [thread:$0]  %s2072, 32, %s2074, [#allocation6]
    $region95: #{tpu_custom_call.1} parent=1 // pred_fallthru
      _
    // Predicated region
    $region96: #{tpu_custom_call.1} parent=1 // pred_check
      _
    $region97: #{tpu_custom_call.1} parent=1 // pred_check_branch
      %2078 = sbr.rel (0) target = $region99
    $region98: #{tpu_custom_call.1} parent=1 // pred_region
      %2080 = dma.done [#allocation4], 768
    $region99: #{tpu_custom_call.1} parent=1 // pred_fallthru
      _
    // Predicated region
    $region100: #{tpu_custom_call.1} parent=1 // pred_check
      _
    $region101: #{tpu_custom_call.1} parent=1 // pred_check_branch
      %2082 = sbr.rel (0) target = $region103
    $region102: #{tpu_custom_call.1} parent=1 // pred_region
      %2084 = dma.done [#allocation6], 32
    $region103: #{tpu_custom_call.1} parent=1 // pred_fallthru
      _
    %2085 = vsyncpa [#allocation4], 1
    %2086 = vsyncpa [#allocation6], 1

</llo_original>
